<compile_context>
chip_gen: v6e
topology: v6e:2x2x1
jax: 0.10.0
libtpu: 0.0.40
codegen_flags: <defaults>
</compile_context>

<pallas_src>
import jax
import jax.numpy as jnp
from jax.experimental import pallas as pl
from jax.experimental.pallas import tpu as pltpu

HIDDEN = 128
BN_EPS = 1e-5


def _round_up(x, m):
    return (x + m - 1) // m * m


def _autoencoder_kernel(
    x0_ref, x1_ref, x2_ref,        # (TB, dp_i)     f32 activations for one batch tile
    we0_ref, we1_ref, we2_ref,     # (dp_i, 128)    bf16 BN-folded encoder weights (resident)
    wb_ref,                        # (3, 128, NOP)  bf16 bottleneck weight split per modality
    wd_ref,                        # (NOP, T_DOP)   bf16 fused-decoder weight, one column tile
    bias_ref,                      # (4, NOP)       f32 packed biases: enc0, enc1, enc2, bottleneck
    bd_ref,                        # (1, T_DOP)     f32 fused-decoder bias, one column tile
    o_ref,                         # (TB, T_DOP)    f32 sigmoid output tile
    bott_ref,                      # (TB, NOP)      f32 VMEM scratch: bottleneck activation
):
    # Encoder + bottleneck run once per batch tile (first decoder-column step) and the result is
    # kept in VMEM scratch for the remaining column tiles of the same batch tile.
    @pl.when(pl.program_id(1) == 0)
    def _():
        def encode(x_ref, w_ref, row):
            h = jnp.dot(x_ref[...].astype(jnp.bfloat16), w_ref[...],
                        preferred_element_type=jnp.float32)
            # folded Linear+BatchNorm bias, then ReLU (Dropout = identity in eval mode)
            return jnp.maximum(h + bias_ref[row:row + 1, :HIDDEN], 0.0).astype(jnp.bfloat16)

        h0 = encode(x0_ref, we0_ref, 0)
        h1 = encode(x1_ref, we1_ref, 1)
        h2 = encode(x2_ref, we2_ref, 2)

        # bottleneck without materializing concat([h0, h1, h2]): three accumulating MXU pushes
        bott = jnp.dot(h0, wb_ref[0], preferred_element_type=jnp.float32)
        bott += jnp.dot(h1, wb_ref[1], preferred_element_type=jnp.float32)
        bott += jnp.dot(h2, wb_ref[2], preferred_element_type=jnp.float32)
        bott_ref[...] = bott + bias_ref[3:4, :]

    # Fused decoder: one lane-dense matmul + sigmoid per (batch tile, column tile).
    y = jnp.dot(bott_ref[...].astype(jnp.bfloat16), wd_ref[...],
                preferred_element_type=jnp.float32)
    o_ref[...] = jax.nn.sigmoid(y + bd_ref[...])


def init_params(key, input_dims, n_out):
    """Parameter init mirroring the PyTorch module's shapes. Weights stored as (in, out)."""
    n_mod = len(input_dims)
    keys = iter(jax.random.split(key, 3 * n_mod + 1))

    def lin(k, fan_in, fan_out):
        bound = 1.0 / jnp.sqrt(fan_in)
        kw, kb = jax.random.split(k)
        w = jax.random.uniform(kw, (fan_in, fan_out), jnp.float32, -bound, bound)
        b = jax.random.uniform(kb, (1, fan_out), jnp.float32, -bound, bound)
        return w, b

    params = {}
    enc = []
    for d in input_dims:
        w, b = lin(next(keys), d, HIDDEN)
        k1, k2, k3, k4 = jax.random.split(next(keys), 4)
        # non-default BN running stats so the folding is actually exercised in the test
        gamma = 1.0 + 0.1 * jax.random.normal(k1, (1, HIDDEN), jnp.float32)
        beta = 0.1 * jax.random.normal(k2, (1, HIDDEN), jnp.float32)
        rmean = 0.1 * jax.random.normal(k3, (1, HIDDEN), jnp.float32)
        rvar = 1.0 + 0.1 * jnp.abs(jax.random.normal(k4, (1, HIDDEN), jnp.float32))
        enc.append((w, b, gamma, beta, rmean, rvar))
    params["enc"] = enc

    params["wb"], params["bb"] = lin(next(keys), HIDDEN * n_mod, n_out)

    dec = []
    for d in input_dims:
        w, b = lin(next(keys), n_out, d)
        dec.append((w, b))
    params["dec"] = dec
    return params


def pack_params(params, input_dims):
    """Fold BN, 128-pad, split the bottleneck weight, fuse the decoders, cast weights to bf16."""
    n_mod = len(input_dims)
    n_out = params["wb"].shape[1]
    nop = _round_up(n_out, 128)            # bottleneck width, 128-lane padded
    d_tot = sum(input_dims)
    dop = _round_up(d_tot, 128)            # fused lane-dense decoder output width

    we, be, dpads = [], [], []
    for (w, b, g, bt, m, v), d in zip(params["enc"], input_dims):
        # fold eval-mode BatchNorm1d into the Linear: y = (x@w + b - mean)*scale + beta
        scale = g * jax.lax.rsqrt(v + BN_EPS)              # (1, HIDDEN)
        w_f = w * scale                                    # per-output-column scale
        b_f = (b - m) * scale + bt
        dp = _round_up(d, 128)                             # lane-dense contraction dim
        if dp != d:
            w_f = jnp.pad(w_f, ((0, dp - d), (0, 0)))
        we.append(w_f.astype(jnp.bfloat16))
        be.append(b_f)
        dpads.append(dp)

    # bottleneck weight split per modality (eliminates in-kernel concat), n_out padded to nop
    wb = params["wb"]
    wb_stack = jnp.stack(
        [jnp.pad(wb[i * HIDDEN:(i + 1) * HIDDEN, :], ((0, 0), (0, nop - n_out)))
         for i in range(n_mod)]).astype(jnp.bfloat16)      # (n_mod, 128, nop)
    bb_pad = jnp.pad(params["bb"], ((0, 0), (0, nop - n_out)))

    # fuse the three decoders into one lane-dense weight / bias
    wd_cat = jnp.concatenate([w for (w, _) in params["dec"]], axis=1)        # (n_out, d_tot)
    wd_pad = jnp.pad(wd_cat, ((0, nop - n_out), (0, dop - d_tot))).astype(jnp.bfloat16)
    bd_cat = jnp.concatenate([b for (_, b) in params["dec"]], axis=1)
    bd_pad = jnp.pad(bd_cat, ((0, 0), (0, dop - d_tot)))                     # (1, dop) f32

    # pack the (1,128) encoder biases + (1,nop) bottleneck bias into one (4, nop) f32 array
    rows = [jnp.pad(b_f, ((0, 0), (0, nop - HIDDEN))) for b_f in be] + [bb_pad]
    bias_pack = jnp.concatenate(rows, axis=0)

    return dict(we=we, wb=wb_stack, wd=wd_pad, bias=bias_pack, bd=bd_pad,
                dpads=tuple(dpads), input_dims=tuple(input_dims),
                n_out=n_out, nop=nop, dop=dop)


def _pick_batch_tile(B, max_tb):
    """>= 2 grid steps whenever possible (v7x megacore) while minimizing padded rows."""
    if B <= 8:
        return 8
    n_tiles = max(2, pl.cdiv(B, max_tb))
    return min(max_tb, _round_up(pl.cdiv(B, n_tiles), 8))


def _pick_dop_tile(dop):
    """Largest multiple of 128 that divides dop and is <= 512 (dop is a multiple of 128)."""
    t = min(dop, 512)
    while dop % t:
        t -= 128
    return t


def autoencoder_forward(inputs, packed, *, single_buffer_weights=True):
    """inputs: list of 3 arrays (B, input_dims[i]) float32. Returns list of 3 decoded arrays."""
    B = inputs[0].shape[0]
    input_dims = packed["input_dims"]
    dpads = packed["dpads"]
    nop, dop = packed["nop"], packed["dop"]
    n_mod = len(input_dims)

    try:
        vmem_cap = pltpu.get_tpu_info().vmem_capacity_bytes
    except Exception:
        vmem_cap = 64 << 20                                # assume the smallest (v7x) VMEM
    max_tb = 512 if vmem_cap >= (128 << 20) else 256       # v5e/v6e: 512-row tiles; v7x: 256

    tb = _pick_batch_tile(B, max_tb)
    b_pad = _round_up(B, tb)
    t_dop = _pick_dop_tile(dop)

    xs = []
    for x, d, dp in zip(inputs, input_dims, dpads):
        x = x.astype(jnp.float32)
        if (b_pad - B) or (dp - d):
            x = jnp.pad(x, ((0, b_pad - B), (0, dp - d)))
        xs.append(x)

    # resident (constant-block-index) operands: single-buffered to halve their VMEM footprint
    if single_buffer_weights:
        resident = lambda shape, imap: pl.BlockSpec(shape, imap, pipeline_mode=pl.Buffered(1))
    else:
        resident = pl.BlockSpec

    in_specs = (
        [pl.BlockSpec((tb, dp), lambda i, j: (i, 0)) for dp in dpads]      # batch-tiled activations
        + [resident((dp, HIDDEN), lambda i, j: (0, 0)) for dp in dpads]    # encoder weights
        + [resident((n_mod, HIDDEN, nop), lambda i, j: (0, 0, 0)),         # split bottleneck weight
           pl.BlockSpec((nop, t_dop), lambda i, j: (0, j)),                # decoder weight col tile
           resident((n_mod + 1, nop), lambda i, j: (0, 0)),                # packed enc/bottleneck biases
           pl.BlockSpec((1, t_dop), lambda i, j: (0, j))]                  # decoder bias col tile
    )
    out_specs = pl.BlockSpec((tb, t_dop), lambda i, j: (i, j))

    # explicit scoped-VMEM budget (double buffers where pipelined, single where resident)
    need = sum(2 * tb * dp * 4 for dp in dpads)            # x tiles (f32, double-buffered)
    need += sum(dp * HIDDEN * 2 for dp in dpads)           # encoder weights (bf16, resident)
    need += n_mod * HIDDEN * nop * 2                       # bottleneck weight (bf16, resident)
    need += 2 * nop * t_dop * 2                            # decoder weight tile (bf16)
    need += (n_mod + 1) * nop * 4 + 2 * t_dop * 4          # biases
    need += 2 * tb * t_dop * 4                             # output tile (f32, double-buffered)
    need += tb * nop * 4                                   # bottleneck scratch
    vmem_limit = int(min(max(32 << 20, need * 3 // 2), vmem_cap * 9 // 10))

    fn = pl.pallas_call(
        _autoencoder_kernel,
        grid=(b_pad // tb, dop // t_dop),
        in_specs=in_specs,
        out_specs=out_specs,
        out_shape=jax.ShapeDtypeStruct((b_pad, dop), jnp.float32),
        scratch_shapes=[pltpu.VMEM((tb, nop), jnp.float32)],
        compiler_params=pltpu.CompilerParams(
            # batch axis splits across v7x's two TensorCores; the decoder-column axis reuses the
            # per-batch-tile bottleneck scratch, so it must stay sequential ("arbitrary")
            dimension_semantics=("parallel", "arbitrary"),
            vmem_limit_bytes=vmem_limit),
    )
    y = fn(*xs, *packed["we"], packed["wb"], packed["wd"], packed["bias"], packed["bd"])

    # slice the fused lane-dense slab back into the three modality outputs
    outs, off = [], 0
    for d in input_dims:
        outs.append(y[:B, off:off + d])
        off += d
    return outs


def reference_forward(inputs, params):
    """Pure-JAX f32 reference (unfolded BN, explicit concat, per-decoder sigmoid)."""
    hs = []
    for x, (w, b, g, bt, m, v) in zip(inputs, params["enc"]):
        h = x @ w + b
        h = (h - m) * (g / jnp.sqrt(v + BN_EPS)) + bt
        hs.append(jnp.maximum(h, 0.0))
    merged = jnp.concatenate(hs, axis=1)
    bott = merged @ params["wb"] + params["bb"]
    return [jax.nn.sigmoid(bott @ w + b) for (w, b) in params["dec"]]


if __name__ == "__main__":
    key = jax.random.PRNGKey(0)
    k_in, k_par = jax.random.split(key)

    batch = 16
    input_dims = (200, 180, 150)   # three omics modalities (d_tot=530 -> 5 decoder column tiles)
    n_out = 8

    kx = jax.random.split(k_in, 3)
    inputs = [jax.random.normal(kx[i], (batch, input_dims[i]), jnp.float32)
              for i in range(3)]

    params = init_params(k_par, input_dims, n_out)
    packed = pack_params(params, input_dims)

    try:
        outs = jax.block_until_ready(autoencoder_forward(inputs, packed))
    except Exception:
        # fall back to default double-buffered resident weights if Buffered(1) is unsupported
        outs = jax.block_until_ready(
            autoencoder_forward(inputs, packed, single_buffer_weights=False))

    refs = reference_forward(inputs, params)
    for o, r in zip(outs, refs):
        assert o.shape == r.shape
        # bf16 weights: allow ~1e-2-level deltas vs the pure-f32 reference (sigmoid outputs)
        assert jnp.max(jnp.abs(o - r)) < 5e-2, "mismatch vs reference"

    print("KERNEL_OK")
</pallas_src>

<mosaic_0001>
module attributes {stable_mosaic.version = 11 : i64} {
  func.func @_autoencoder_kernel(%arg0: i32, %arg1: i32, %arg2: memref<8x256xf32, #tpu.memory_space<vmem>>, %arg3: memref<8x256xf32, #tpu.memory_space<vmem>>, %arg4: memref<8x256xf32, #tpu.memory_space<vmem>>, %arg5: memref<256x128xbf16, #tpu.memory_space<vmem>>, %arg6: memref<256x128xbf16, #tpu.memory_space<vmem>>, %arg7: memref<256x128xbf16, #tpu.memory_space<vmem>>, %arg8: memref<3x128x128xbf16, #tpu.memory_space<vmem>>, %arg9: memref<128x128xbf16, #tpu.memory_space<vmem>>, %arg10: memref<4x128xf32, #tpu.memory_space<vmem>>, %arg11: memref<1x128xf32, #tpu.memory_space<vmem>>, %arg12: memref<8x128xf32, #tpu.memory_space<vmem>>, %arg13: memref<8x128xf32, #tpu.memory_space<vmem>>) attributes {dimension_semantics = [#tpu.dimension_semantics<parallel>, #tpu.dimension_semantics<arbitrary>], iteration_bounds = array<i64: 2, 5>, scalar_prefetch = 0 : i64, scratch_operands = 1 : i64, tpu.core_type = #tpu.core_type<tc>, window_params = [{transform_indices = @transform_0, window_bounds = array<i64: 8, 256>}, {transform_indices = @transform_1, window_bounds = array<i64: 8, 256>}, {transform_indices = @transform_2, window_bounds = array<i64: 8, 256>}, {pipeline_mode = #tpu.pipeline_mode<synchronous>, transform_indices = @transform_3, window_bounds = array<i64: 256, 128>}, {pipeline_mode = #tpu.pipeline_mode<synchronous>, transform_indices = @transform_4, window_bounds = array<i64: 256, 128>}, {pipeline_mode = #tpu.pipeline_mode<synchronous>, transform_indices = @transform_5, window_bounds = array<i64: 256, 128>}, {pipeline_mode = #tpu.pipeline_mode<synchronous>, transform_indices = @transform_6, window_bounds = array<i64: 3, 128, 128>}, {transform_indices = @transform_7, window_bounds = array<i64: 128, 128>}, {pipeline_mode = #tpu.pipeline_mode<synchronous>, transform_indices = @transform_8, window_bounds = array<i64: 4, 128>}, {transform_indices = @transform_9, window_bounds = array<i64: 1, 128>}, {transform_indices = @transform_10, window_bounds = array<i64: 8, 128>}]} {
    %c0_i32 = arith.constant 0 : i32
    %0 = arith.cmpi eq, %arg1, %c0_i32 : i32
    %1 = arith.extui %0 : i1 to i32
    %c0_i32_0 = arith.constant 0 : i32
    %2 = arith.cmpi ne, %1, %c0_i32_0 : i32
    scf.if %2 {
      %c0_9 = arith.constant 0 : index
      %c0_10 = arith.constant 0 : index
      %16 = vector.load %arg2[%c0_9, %c0_10] : memref<8x256xf32, #tpu.memory_space<vmem>>, vector<8x256xf32>
      %17 = arith.truncf %16 : vector<8x256xf32> to vector<8x256xbf16>
      %c0_11 = arith.constant 0 : index
      %c0_12 = arith.constant 0 : index
      %18 = vector.load %arg5[%c0_11, %c0_12] : memref<256x128xbf16, #tpu.memory_space<vmem>>, vector<256x128xbf16>
      %cst_13 = arith.constant dense<0.000000e+00> : vector<8x128xf32>
      %19 = tpu.matmul %17, %18, %cst_13 {dimension_numbers = #tpu.dot_dimension_numbers<[1], [0], [0], [1], [0, 0, 1, 1], [], []>} : vector<8x256xbf16>, vector<256x128xbf16>, vector<8x128xf32> -> vector<8x128xf32>
      %c0_14 = arith.constant 0 : index
      %c0_15 = arith.constant 0 : index
      %20 = vector.load %arg10[%c0_14, %c0_15] : memref<4x128xf32, #tpu.memory_space<vmem>>, vector<1x128xf32>
      %21 = vector.broadcast %20 : vector<1x128xf32> to vector<8x128xf32>
      %22 = arith.addf %19, %21 : vector<8x128xf32>
      %cst_16 = arith.constant 0.000000e+00 : f32
      %23 = vector.broadcast %cst_16 : f32 to vector<8x128xf32>
      %24 = arith.maximumf %22, %23 : vector<8x128xf32>
      %25 = arith.truncf %24 : vector<8x128xf32> to vector<8x128xbf16>
      %c0_17 = arith.constant 0 : index
      %c0_18 = arith.constant 0 : index
      %26 = vector.load %arg3[%c0_17, %c0_18] : memref<8x256xf32, #tpu.memory_space<vmem>>, vector<8x256xf32>
      %27 = arith.truncf %26 : vector<8x256xf32> to vector<8x256xbf16>
      %c0_19 = arith.constant 0 : index
      %c0_20 = arith.constant 0 : index
      %28 = vector.load %arg6[%c0_19, %c0_20] : memref<256x128xbf16, #tpu.memory_space<vmem>>, vector<256x128xbf16>
      %cst_21 = arith.constant dense<0.000000e+00> : vector<8x128xf32>
      %29 = tpu.matmul %27, %28, %cst_21 {dimension_numbers = #tpu.dot_dimension_numbers<[1], [0], [0], [1], [0, 0, 1, 1], [], []>} : vector<8x256xbf16>, vector<256x128xbf16>, vector<8x128xf32> -> vector<8x128xf32>
      %c1 = arith.constant 1 : index
      %c0_22 = arith.constant 0 : index
      %30 = vector.load %arg10[%c1, %c0_22] : memref<4x128xf32, #tpu.memory_space<vmem>>, vector<1x128xf32>
      %31 = vector.broadcast %30 : vector<1x128xf32> to vector<8x128xf32>
      %32 = arith.addf %29, %31 : vector<8x128xf32>
      %cst_23 = arith.constant 0.000000e+00 : f32
      %33 = vector.broadcast %cst_23 : f32 to vector<8x128xf32>
      %34 = arith.maximumf %32, %33 : vector<8x128xf32>
      %35 = arith.truncf %34 : vector<8x128xf32> to vector<8x128xbf16>
      %c0_24 = arith.constant 0 : index
      %c0_25 = arith.constant 0 : index
      %36 = vector.load %arg4[%c0_24, %c0_25] : memref<8x256xf32, #tpu.memory_space<vmem>>, vector<8x256xf32>
      %37 = arith.truncf %36 : vector<8x256xf32> to vector<8x256xbf16>
      %c0_26 = arith.constant 0 : index
      %c0_27 = arith.constant 0 : index
      %38 = vector.load %arg7[%c0_26, %c0_27] : memref<256x128xbf16, #tpu.memory_space<vmem>>, vector<256x128xbf16>
      %cst_28 = arith.constant dense<0.000000e+00> : vector<8x128xf32>
      %39 = tpu.matmul %37, %38, %cst_28 {dimension_numbers = #tpu.dot_dimension_numbers<[1], [0], [0], [1], [0, 0, 1, 1], [], []>} : vector<8x256xbf16>, vector<256x128xbf16>, vector<8x128xf32> -> vector<8x128xf32>
      %c2 = arith.constant 2 : index
      %c0_29 = arith.constant 0 : index
      %40 = vector.load %arg10[%c2, %c0_29] : memref<4x128xf32, #tpu.memory_space<vmem>>, vector<1x128xf32>
      %41 = vector.broadcast %40 : vector<1x128xf32> to vector<8x128xf32>
      %42 = arith.addf %39, %41 : vector<8x128xf32>
      %cst_30 = arith.constant 0.000000e+00 : f32
      %43 = vector.broadcast %cst_30 : f32 to vector<8x128xf32>
      %44 = arith.maximumf %42, %43 : vector<8x128xf32>
      %45 = arith.truncf %44 : vector<8x128xf32> to vector<8x128xbf16>
      %c0_31 = arith.constant 0 : index
      %c0_32 = arith.constant 0 : index
      %c0_33 = arith.constant 0 : index
      %46 = vector.load %arg8[%c0_31, %c0_32, %c0_33] : memref<3x128x128xbf16, #tpu.memory_space<vmem>>, vector<1x128x128xbf16>
      %47 = vector.shape_cast %46 : vector<1x128x128xbf16> to vector<128x128xbf16>
      %cst_34 = arith.constant dense<0.000000e+00> : vector<8x128xf32>
      %48 = tpu.matmul %25, %47, %cst_34 {dimension_numbers = #tpu.dot_dimension_numbers<[1], [0], [0], [1], [0, 0, 1, 1], [], []>} : vector<8x128xbf16>, vector<128x128xbf16>, vector<8x128xf32> -> vector<8x128xf32>
      %c1_35 = arith.constant 1 : index
      %c0_36 = arith.constant 0 : index
      %c0_37 = arith.constant 0 : index
      %49 = vector.load %arg8[%c1_35, %c0_36, %c0_37] : memref<3x128x128xbf16, #tpu.memory_space<vmem>>, vector<1x128x128xbf16>
      %50 = vector.shape_cast %49 : vector<1x128x128xbf16> to vector<128x128xbf16>
      %cst_38 = arith.constant dense<0.000000e+00> : vector<8x128xf32>
      %51 = tpu.matmul %35, %50, %cst_38 {dimension_numbers = #tpu.dot_dimension_numbers<[1], [0], [0], [1], [0, 0, 1, 1], [], []>} : vector<8x128xbf16>, vector<128x128xbf16>, vector<8x128xf32> -> vector<8x128xf32>
      %52 = arith.addf %48, %51 : vector<8x128xf32>
      %c2_39 = arith.constant 2 : index
      %c0_40 = arith.constant 0 : index
      %c0_41 = arith.constant 0 : index
      %53 = vector.load %arg8[%c2_39, %c0_40, %c0_41] : memref<3x128x128xbf16, #tpu.memory_space<vmem>>, vector<1x128x128xbf16>
      %54 = vector.shape_cast %53 : vector<1x128x128xbf16> to vector<128x128xbf16>
      %cst_42 = arith.constant dense<0.000000e+00> : vector<8x128xf32>
      %55 = tpu.matmul %45, %54, %cst_42 {dimension_numbers = #tpu.dot_dimension_numbers<[1], [0], [0], [1], [0, 0, 1, 1], [], []>} : vector<8x128xbf16>, vector<128x128xbf16>, vector<8x128xf32> -> vector<8x128xf32>
      %56 = arith.addf %52, %55 : vector<8x128xf32>
      %c3 = arith.constant 3 : index
      %c0_43 = arith.constant 0 : index
      %57 = vector.load %arg10[%c3, %c0_43] : memref<4x128xf32, #tpu.memory_space<vmem>>, vector<1x128xf32>
      %58 = vector.broadcast %57 : vector<1x128xf32> to vector<8x128xf32>
      %59 = arith.addf %56, %58 : vector<8x128xf32>
      %c0_44 = arith.constant 0 : index
      %c0_45 = arith.constant 0 : index
      %60 = vector.load %arg13[%c0_44, %c0_45] : memref<8x128xf32, #tpu.memory_space<vmem>>, vector<8x128xf32>
      tpu.vector_store %arg13[%c0_44, %c0_45], %59 {strides = array<i32>} : memref<8x128xf32, #tpu.memory_space<vmem>>, vector<8x128xf32>,
    } else {
    }
    %c0 = arith.constant 0 : index
    %c0_1 = arith.constant 0 : index
    %3 = vector.load %arg13[%c0, %c0_1] : memref<8x128xf32, #tpu.memory_space<vmem>>, vector<8x128xf32>
    %4 = arith.truncf %3 : vector<8x128xf32> to vector<8x128xbf16>
    %c0_2 = arith.constant 0 : index
    %c0_3 = arith.constant 0 : index
    %5 = vector.load %arg9[%c0_2, %c0_3] : memref<128x128xbf16, #tpu.memory_space<vmem>>, vector<128x128xbf16>
    %cst = arith.constant dense<0.000000e+00> : vector<8x128xf32>
    %6 = tpu.matmul %4, %5, %cst {dimension_numbers = #tpu.dot_dimension_numbers<[1], [0], [0], [1], [0, 0, 1, 1], [], []>} : vector<8x128xbf16>, vector<128x128xbf16>, vector<8x128xf32> -> vector<8x128xf32>
    %c0_4 = arith.constant 0 : index
    %c0_5 = arith.constant 0 : index
    %7 = vector.load %arg11[%c0_4, %c0_5] : memref<1x128xf32, #tpu.memory_space<vmem>>, vector<1x128xf32>
    %8 = vector.broadcast %7 : vector<1x128xf32> to vector<8x128xf32>
    %9 = arith.addf %6, %8 : vector<8x128xf32>
    %10 = arith.negf %9 : vector<8x128xf32>
    %11 = math.exp %10 : vector<8x128xf32>
    %cst_6 = arith.constant 1.000000e+00 : f32
    %12 = vector.broadcast %cst_6 : f32 to vector<8x128xf32>
    %13 = arith.addf %12, %11 : vector<8x128xf32>
    %14 = arith.divf %12, %13 : vector<8x128xf32>
    %c0_7 = arith.constant 0 : index
    %c0_8 = arith.constant 0 : index
    %15 = vector.load %arg12[%c0_7, %c0_8] : memref<8x128xf32, #tpu.memory_space<vmem>>, vector<8x128xf32>
    tpu.vector_store %arg12[%c0_7, %c0_8], %14 {strides = array<i32>} : memref<8x128xf32, #tpu.memory_space<vmem>>, vector<8x128xf32>,
    return
  }
  func.func @transform_0(%arg0: i32, %arg1: i32) -> (i32, i32) {
    %c0_i32 = arith.constant 0 : i32
    %c0_i32_0 = arith.constant 0 : i32
    return %arg0, %c0_i32 : i32, i32
  }
  func.func @transform_1(%arg0: i32, %arg1: i32) -> (i32, i32) {
    %c0_i32 = arith.constant 0 : i32
    %c0_i32_0 = arith.constant 0 : i32
    return %arg0, %c0_i32 : i32, i32
  }
  func.func @transform_2(%arg0: i32, %arg1: i32) -> (i32, i32) {
    %c0_i32 = arith.constant 0 : i32
    %c0_i32_0 = arith.constant 0 : i32
    return %arg0, %c0_i32 : i32, i32
  }
  func.func @transform_3(%arg0: i32, %arg1: i32) -> (i32, i32) {
    %c0_i32 = arith.constant 0 : i32
    %c0_i32_0 = arith.constant 0 : i32
    %c0_i32_1 = arith.constant 0 : i32
    return %c0_i32, %c0_i32_0 : i32, i32
  }
  func.func @transform_4(%arg0: i32, %arg1: i32) -> (i32, i32) {
    %c0_i32 = arith.constant 0 : i32
    %c0_i32_0 = arith.constant 0 : i32
    %c0_i32_1 = arith.constant 0 : i32
    return %c0_i32, %c0_i32_0 : i32, i32
  }
  func.func @transform_5(%arg0: i32, %arg1: i32) -> (i32, i32) {
    %c0_i32 = arith.constant 0 : i32
    %c0_i32_0 = arith.constant 0 : i32
    %c0_i32_1 = arith.constant 0 : i32
    return %c0_i32, %c0_i32_0 : i32, i32
  }
  func.func @transform_6(%arg0: i32, %arg1: i32) -> (i32, i32, i32) {
    %c0_i32 = arith.constant 0 : i32
    %c0_i32_0 = arith.constant 0 : i32
    %c0_i32_1 = arith.constant 0 : i32
    %c0_i32_2 = arith.constant 0 : i32
    return %c0_i32, %c0_i32_0, %c0_i32_1 : i32, i32, i32
  }
  func.func @transform_7(%arg0: i32, %arg1: i32) -> (i32, i32) {
    %c0_i32 = arith.constant 0 : i32
    %c0_i32_0 = arith.constant 0 : i32
    return %c0_i32, %arg1 : i32, i32
  }
  func.func @transform_8(%arg0: i32, %arg1: i32) -> (i32, i32) {
    %c0_i32 = arith.constant 0 : i32
    %c0_i32_0 = arith.constant 0 : i32
    %c0_i32_1 = arith.constant 0 : i32
    return %c0_i32, %c0_i32_0 : i32, i32
  }
  func.func @transform_9(%arg0: i32, %arg1: i32) -> (i32, i32) {
    %c0_i32 = arith.constant 0 : i32
    %c0_i32_0 = arith.constant 0 : i32
    return %c0_i32, %arg1 : i32, i32
  }
  func.func @transform_10(%arg0: i32, %arg1: i32) -> (i32, i32) {
    %c0_i32 = arith.constant 0 : i32
    return %arg0, %arg1 : i32, i32
  }
}

module attributes {stable_mosaic.version = 11 : i64} {
  func.func @_autoencoder_kernel(%arg0: i32, %arg1: i32, %arg2: memref<8x256xf32, #tpu.memory_space<vmem>>, %arg3: memref<8x256xf32, #tpu.memory_space<vmem>>, %arg4: memref<8x256xf32, #tpu.memory_space<vmem>>, %arg5: memref<256x128xbf16, #tpu.memory_space<vmem>>, %arg6: memref<256x128xbf16, #tpu.memory_space<vmem>>, %arg7: memref<256x128xbf16, #tpu.memory_space<vmem>>, %arg8: memref<3x128x128xbf16, #tpu.memory_space<vmem>>, %arg9: memref<128x128xbf16, #tpu.memory_space<vmem>>, %arg10: memref<4x128xf32, #tpu.memory_space<vmem>>, %arg11: memref<1x128xf32, #tpu.memory_space<vmem>>, %arg12: memref<8x128xf32, #tpu.memory_space<vmem>>, %arg13: memref<8x128xf32, #tpu.memory_space<vmem>>) attributes {dimension_semantics = [#tpu.dimension_semantics<parallel>, #tpu.dimension_semantics<arbitrary>], iteration_bounds = array<i64: 2, 5>, scalar_prefetch = 0 : i64, scratch_operands = 1 : i64, tpu.core_type = #tpu.core_type<tc>, window_params = [{transform_indices = @transform_0, window_bounds = array<i64: 8, 256>}, {transform_indices = @transform_1, window_bounds = array<i64: 8, 256>}, {transform_indices = @transform_2, window_bounds = array<i64: 8, 256>}, {pipeline_mode = #tpu.pipeline_mode<synchronous>, transform_indices = @transform_3, window_bounds = array<i64: 256, 128>}, {pipeline_mode = #tpu.pipeline_mode<synchronous>, transform_indices = @transform_4, window_bounds = array<i64: 256, 128>}, {pipeline_mode = #tpu.pipeline_mode<synchronous>, transform_indices = @transform_5, window_bounds = array<i64: 256, 128>}, {pipeline_mode = #tpu.pipeline_mode<synchronous>, transform_indices = @transform_6, window_bounds = array<i64: 3, 128, 128>}, {transform_indices = @transform_7, window_bounds = array<i64: 128, 128>}, {pipeline_mode = #tpu.pipeline_mode<synchronous>, transform_indices = @transform_8, window_bounds = array<i64: 4, 128>}, {transform_indices = @transform_9, window_bounds = array<i64: 1, 128>}, {transform_indices = @transform_10, window_bounds = array<i64: 8, 128>}]} {
    %c0_i32 = arith.constant 0 : i32
    %0 = arith.cmpi eq, %arg1, %c0_i32 : i32
    %1 = arith.extui %0 : i1 to i32
    %c0_i32_0 = arith.constant 0 : i32
    %2 = arith.cmpi ne, %1, %c0_i32_0 : i32
    scf.if %2 {
      %c0_9 = arith.constant 0 : index
      %c0_10 = arith.constant 0 : index
      %16 = vector.load %arg2[%c0_9, %c0_10] : memref<8x256xf32, #tpu.memory_space<vmem>>, vector<8x256xf32>
      %17 = arith.truncf %16 : vector<8x256xf32> to vector<8x256xbf16>
      %c0_11 = arith.constant 0 : index
      %c0_12 = arith.constant 0 : index
      %18 = vector.load %arg5[%c0_11, %c0_12] : memref<256x128xbf16, #tpu.memory_space<vmem>>, vector<256x128xbf16>
      %cst_13 = arith.constant dense<0.000000e+00> : vector<8x128xf32>
      %19 = tpu.matmul %17, %18, %cst_13 {dimension_numbers = #tpu.dot_dimension_numbers<[1], [0], [0], [1], [0, 0, 1, 1], [], []>} : vector<8x256xbf16>, vector<256x128xbf16>, vector<8x128xf32> -> vector<8x128xf32>
      %c0_14 = arith.constant 0 : index
      %c0_15 = arith.constant 0 : index
      %20 = vector.load %arg10[%c0_14, %c0_15] : memref<4x128xf32, #tpu.memory_space<vmem>>, vector<1x128xf32>
      %21 = vector.broadcast %20 : vector<1x128xf32> to vector<8x128xf32>
      %22 = arith.addf %19, %21 : vector<8x128xf32>
      %cst_16 = arith.constant 0.000000e+00 : f32
      %23 = vector.broadcast %cst_16 : f32 to vector<8x128xf32>
      %24 = arith.maximumf %22, %23 : vector<8x128xf32>
      %25 = arith.truncf %24 : vector<8x128xf32> to vector<8x128xbf16>
      %c0_17 = arith.constant 0 : index
      %c0_18 = arith.constant 0 : index
      %26 = vector.load %arg3[%c0_17, %c0_18] : memref<8x256xf32, #tpu.memory_space<vmem>>, vector<8x256xf32>
      %27 = arith.truncf %26 : vector<8x256xf32> to vector<8x256xbf16>
      %c0_19 = arith.constant 0 : index
      %c0_20 = arith.constant 0 : index
      %28 = vector.load %arg6[%c0_19, %c0_20] : memref<256x128xbf16, #tpu.memory_space<vmem>>, vector<256x128xbf16>
      %cst_21 = arith.constant dense<0.000000e+00> : vector<8x128xf32>
      %29 = tpu.matmul %27, %28, %cst_21 {dimension_numbers = #tpu.dot_dimension_numbers<[1], [0], [0], [1], [0, 0, 1, 1], [], []>} : vector<8x256xbf16>, vector<256x128xbf16>, vector<8x128xf32> -> vector<8x128xf32>
      %c1 = arith.constant 1 : index
      %c0_22 = arith.constant 0 : index
      %30 = vector.load %arg10[%c1, %c0_22] : memref<4x128xf32, #tpu.memory_space<vmem>>, vector<1x128xf32>
      %31 = vector.broadcast %30 : vector<1x128xf32> to vector<8x128xf32>
      %32 = arith.addf %29, %31 : vector<8x128xf32>
      %cst_23 = arith.constant 0.000000e+00 : f32
      %33 = vector.broadcast %cst_23 : f32 to vector<8x128xf32>
      %34 = arith.maximumf %32, %33 : vector<8x128xf32>
      %35 = arith.truncf %34 : vector<8x128xf32> to vector<8x128xbf16>
      %c0_24 = arith.constant 0 : index
      %c0_25 = arith.constant 0 : index
      %36 = vector.load %arg4[%c0_24, %c0_25] : memref<8x256xf32, #tpu.memory_space<vmem>>, vector<8x256xf32>
      %37 = arith.truncf %36 : vector<8x256xf32> to vector<8x256xbf16>
      %c0_26 = arith.constant 0 : index
      %c0_27 = arith.constant 0 : index
      %38 = vector.load %arg7[%c0_26, %c0_27] : memref<256x128xbf16, #tpu.memory_space<vmem>>, vector<256x128xbf16>
      %cst_28 = arith.constant dense<0.000000e+00> : vector<8x128xf32>
      %39 = tpu.matmul %37, %38, %cst_28 {dimension_numbers = #tpu.dot_dimension_numbers<[1], [0], [0], [1], [0, 0, 1, 1], [], []>} : vector<8x256xbf16>, vector<256x128xbf16>, vector<8x128xf32> -> vector<8x128xf32>
      %c2 = arith.constant 2 : index
      %c0_29 = arith.constant 0 : index
      %40 = vector.load %arg10[%c2, %c0_29] : memref<4x128xf32, #tpu.memory_space<vmem>>, vector<1x128xf32>
      %41 = vector.broadcast %40 : vector<1x128xf32> to vector<8x128xf32>
      %42 = arith.addf %39, %41 : vector<8x128xf32>
      %cst_30 = arith.constant 0.000000e+00 : f32
      %43 = vector.broadcast %cst_30 : f32 to vector<8x128xf32>
      %44 = arith.maximumf %42, %43 : vector<8x128xf32>
      %45 = arith.truncf %44 : vector<8x128xf32> to vector<8x128xbf16>
      %c0_31 = arith.constant 0 : index
      %c0_32 = arith.constant 0 : index
      %c0_33 = arith.constant 0 : index
      %46 = vector.load %arg8[%c0_31, %c0_32, %c0_33] : memref<3x128x128xbf16, #tpu.memory_space<vmem>>, vector<1x128x128xbf16>
      %47 = vector.shape_cast %46 : vector<1x128x128xbf16> to vector<128x128xbf16>
      %cst_34 = arith.constant dense<0.000000e+00> : vector<8x128xf32>
      %48 = tpu.matmul %25, %47, %cst_34 {dimension_numbers = #tpu.dot_dimension_numbers<[1], [0], [0], [1], [0, 0, 1, 1], [], []>} : vector<8x128xbf16>, vector<128x128xbf16>, vector<8x128xf32> -> vector<8x128xf32>
      %c1_35 = arith.constant 1 : index
      %c0_36 = arith.constant 0 : index
      %c0_37 = arith.constant 0 : index
      %49 = vector.load %arg8[%c1_35, %c0_36, %c0_37] : memref<3x128x128xbf16, #tpu.memory_space<vmem>>, vector<1x128x128xbf16>
      %50 = vector.shape_cast %49 : vector<1x128x128xbf16> to vector<128x128xbf16>
      %cst_38 = arith.constant dense<0.000000e+00> : vector<8x128xf32>
      %51 = tpu.matmul %35, %50, %cst_38 {dimension_numbers = #tpu.dot_dimension_numbers<[1], [0], [0], [1], [0, 0, 1, 1], [], []>} : vector<8x128xbf16>, vector<128x128xbf16>, vector<8x128xf32> -> vector<8x128xf32>
      %52 = arith.addf %48, %51 : vector<8x128xf32>
      %c2_39 = arith.constant 2 : index
      %c0_40 = arith.constant 0 : index
      %c0_41 = arith.constant 0 : index
      %53 = vector.load %arg8[%c2_39, %c0_40, %c0_41] : memref<3x128x128xbf16, #tpu.memory_space<vmem>>, vector<1x128x128xbf16>
      %54 = vector.shape_cast %53 : vector<1x128x128xbf16> to vector<128x128xbf16>
      %cst_42 = arith.constant dense<0.000000e+00> : vector<8x128xf32>
      %55 = tpu.matmul %45, %54, %cst_42 {dimension_numbers = #tpu.dot_dimension_numbers<[1], [0], [0], [1], [0, 0, 1, 1], [], []>} : vector<8x128xbf16>, vector<128x128xbf16>, vector<8x128xf32> -> vector<8x128xf32>
      %56 = arith.addf %52, %55 : vector<8x128xf32>
      %c3 = arith.constant 3 : index
      %c0_43 = arith.constant 0 : index
      %57 = vector.load %arg10[%c3, %c0_43] : memref<4x128xf32, #tpu.memory_space<vmem>>, vector<1x128xf32>
      %58 = vector.broadcast %57 : vector<1x128xf32> to vector<8x128xf32>
      %59 = arith.addf %56, %58 : vector<8x128xf32>
      %c0_44 = arith.constant 0 : index
      %c0_45 = arith.constant 0 : index
      %60 = vector.load %arg13[%c0_44, %c0_45] : memref<8x128xf32, #tpu.memory_space<vmem>>, vector<8x128xf32>
      tpu.vector_store %arg13[%c0_44, %c0_45], %59 {strides = array<i32>} : memref<8x128xf32, #tpu.memory_space<vmem>>, vector<8x128xf32>,
    } else {
    }
    %c0 = arith.constant 0 : index
    %c0_1 = arith.constant 0 : index
    %3 = vector.load %arg13[%c0, %c0_1] : memref<8x128xf32, #tpu.memory_space<vmem>>, vector<8x128xf32>
    %4 = arith.truncf %3 : vector<8x128xf32> to vector<8x128xbf16>
    %c0_2 = arith.constant 0 : index
    %c0_3 = arith.constant 0 : index
    %5 = vector.load %arg9[%c0_2, %c0_3] : memref<128x128xbf16, #tpu.memory_space<vmem>>, vector<128x128xbf16>
    %cst = arith.constant dense<0.000000e+00> : vector<8x128xf32>
    %6 = tpu.matmul %4, %5, %cst {dimension_numbers = #tpu.dot_dimension_numbers<[1], [0], [0], [1], [0, 0, 1, 1], [], []>} : vector<8x128xbf16>, vector<128x128xbf16>, vector<8x128xf32> -> vector<8x128xf32>
    %c0_4 = arith.constant 0 : index
    %c0_5 = arith.constant 0 : index
    %7 = vector.load %arg11[%c0_4, %c0_5] : memref<1x128xf32, #tpu.memory_space<vmem>>, vector<1x128xf32>
    %8 = vector.broadcast %7 : vector<1x128xf32> to vector<8x128xf32>
    %9 = arith.addf %6, %8 : vector<8x128xf32>
    %10 = arith.negf %9 : vector<8x128xf32>
    %11 = math.exp %10 : vector<8x128xf32>
    %cst_6 = arith.constant 1.000000e+00 : f32
    %12 = vector.broadcast %cst_6 : f32 to vector<8x128xf32>
    %13 = arith.addf %12, %11 : vector<8x128xf32>
    %14 = arith.divf %12, %13 : vector<8x128xf32>
    %c0_7 = arith.constant 0 : index
    %c0_8 = arith.constant 0 : index
    %15 = vector.load %arg12[%c0_7, %c0_8] : memref<8x128xf32, #tpu.memory_space<vmem>>, vector<8x128xf32>
    tpu.vector_store %arg12[%c0_7, %c0_8], %14 {strides = array<i32>} : memref<8x128xf32, #tpu.memory_space<vmem>>, vector<8x128xf32>,
    return
  }
  func.func @transform_0(%arg0: i32, %arg1: i32) -> (i32, i32) {
    %c0_i32 = arith.constant 0 : i32
    %c0_i32_0 = arith.constant 0 : i32
    return %arg0, %c0_i32 : i32, i32
  }
  func.func @transform_1(%arg0: i32, %arg1: i32) -> (i32, i32) {
    %c0_i32 = arith.constant 0 : i32
    %c0_i32_0 = arith.constant 0 : i32
    return %arg0, %c0_i32 : i32, i32
  }
  func.func @transform_2(%arg0: i32, %arg1: i32) -> (i32, i32) {
    %c0_i32 = arith.constant 0 : i32
    %c0_i32_0 = arith.constant 0 : i32
    return %arg0, %c0_i32 : i32, i32
  }
  func.func @transform_3(%arg0: i32, %arg1: i32) -> (i32, i32) {
    %c0_i32 = arith.constant 0 : i32
    %c0_i32_0 = arith.constant 0 : i32
    %c0_i32_1 = arith.constant 0 : i32
    return %c0_i32, %c0_i32_0 : i32, i32
  }
  func.func @transform_4(%arg0: i32, %arg1: i32) -> (i32, i32) {
    %c0_i32 = arith.constant 0 : i32
    %c0_i32_0 = arith.constant 0 : i32
    %c0_i32_1 = arith.constant 0 : i32
    return %c0_i32, %c0_i32_0 : i32, i32
  }
  func.func @transform_5(%arg0: i32, %arg1: i32) -> (i32, i32) {
    %c0_i32 = arith.constant 0 : i32
    %c0_i32_0 = arith.constant 0 : i32
    %c0_i32_1 = arith.constant 0 : i32
    return %c0_i32, %c0_i32_0 : i32, i32
  }
  func.func @transform_6(%arg0: i32, %arg1: i32) -> (i32, i32, i32) {
    %c0_i32 = arith.constant 0 : i32
    %c0_i32_0 = arith.constant 0 : i32
    %c0_i32_1 = arith.constant 0 : i32
    %c0_i32_2 = arith.constant 0 : i32
    return %c0_i32, %c0_i32_0, %c0_i32_1 : i32, i32, i32
  }
  func.func @transform_7(%arg0: i32, %arg1: i32) -> (i32, i32) {
    %c0_i32 = arith.constant 0 : i32
    %c0_i32_0 = arith.constant 0 : i32
    return %c0_i32, %arg1 : i32, i32
  }
  func.func @transform_8(%arg0: i32, %arg1: i32) -> (i32, i32) {
    %c0_i32 = arith.constant 0 : i32
    %c0_i32_0 = arith.constant 0 : i32
    %c0_i32_1 = arith.constant 0 : i32
    return %c0_i32, %c0_i32_0 : i32, i32
  }
  func.func @transform_9(%arg0: i32, %arg1: i32) -> (i32, i32) {
    %c0_i32 = arith.constant 0 : i32
    %c0_i32_0 = arith.constant 0 : i32
    return %c0_i32, %arg1 : i32, i32
  }
  func.func @transform_10(%arg0: i32, %arg1: i32) -> (i32, i32) {
    %c0_i32 = arith.constant 0 : i32
    return %arg0, %arg1 : i32, i32
  }
}

</mosaic_0001>

<llo_original>
// kernel: tpu_custom_call.1
$region0: #{tpu_custom_call.1}
  #allocation0 [shape = 'u32[]', space=smem, size = 0x4, offset = 0x4, fixed_abs, tag = 'smem constant byte address 0x4 - core index']
  #allocation1 [shape = 'u32[144,128]{1,0:T(1,128)}', space=vmem, size = 0x12000, scoped, tag = 'internal scratch']
  #allocation2 [shape = 'f32[8,128]{1,0:T(8,128)}', space=vmem, size = 0x1000, scoped, tag = 'scratch operand']
  %s0 = inlined_call_operand.hbm [shape: f32[16,256], index: 0, kind: input, shape index: {}]
  %s1 = inlined_call_operand.hbm [shape: f32[16,256], index: 1, kind: input, shape index: {}]
  %s2 = inlined_call_operand.hbm [shape: f32[16,256], index: 2, kind: input, shape index: {}]
  %s3 = inlined_call_operand.hbm [shape: bf16[256,128], index: 3, kind: input, shape index: {}]
  %s4 = inlined_call_operand.hbm [shape: bf16[256,128], index: 4, kind: input, shape index: {}]
  %s5 = inlined_call_operand.hbm [shape: bf16[256,128], index: 5, kind: input, shape index: {}]
  %s6 = inlined_call_operand.hbm [shape: bf16[3,128,128], index: 6, kind: input, shape index: {}]
  %s7 = inlined_call_operand.hbm [shape: bf16[128,640], index: 7, kind: input, shape index: {}]
  %s8 = inlined_call_operand.vmem [shape: f32[4,128], index: 8, kind: input, shape index: {}]
  %s9 = inlined_call_operand.vmem [shape: f32[1,640], index: 9, kind: input, shape index: {}]
  %s10 = inlined_call_operand.hbm [shape: f32[16,640], index: 10, kind: output, shape index: {}]
  %s11 = sld [smem:[#allocation0]]
  $region109: #{tpu_custom_call.1} parent=0
    _
  %s13 = ssub.s32 1, %s11
  %s14 = scalar_select 0, %s13, %s11
  $region1: #{tpu_custom_call.1} parent=0
    #allocation3 [shape = 'u8[16384]{0}', space=vmem, size = 0x4000, scoped, tag = 'input window, operand 0']
    #allocation4 [shape = 's32[2]{0}', space=sflag, size = 0x8, scoped, tag = 'scoped memory for tpu_custom_call.1']
    #allocation5 [shape = 's32[2]{0}', space=sflag, size = 0x8, scoped, tag = 'scoped memory for tpu_custom_call.1']
    #allocation6 [shape = 'u8[16384]{0}', space=vmem, size = 0x4000, scoped, tag = 'input window, operand 1']
    #allocation7 [shape = 's32[2]{0}', space=sflag, size = 0x8, scoped, tag = 'scoped memory for tpu_custom_call.1']
    #allocation8 [shape = 'u8[16384]{0}', space=vmem, size = 0x4000, scoped, tag = 'input window, operand 2']
    #allocation9 [shape = 'u8[65536]{0}', space=vmem, size = 0x10000, scoped, tag = 'input window, operand 3, single buffered']
    #allocation10 [shape = 's32[1]{0}', space=sflag, size = 0x4, scoped, tag = 'scoped memory for tpu_custom_call.1']
    #allocation11 [shape = 'u8[65536]{0}', space=vmem, size = 0x10000, scoped, tag = 'input window, operand 4, single buffered']
    #allocation12 [shape = 'u8[65536]{0}', space=vmem, size = 0x10000, scoped, tag = 'input window, operand 5, single buffered']
    #allocation13 [shape = 's32[1]{0}', space=sflag, size = 0x4, scoped, tag = 'scoped memory for tpu_custom_call.1']
    #allocation14 [shape = 'u8[98304]{0}', space=vmem, size = 0x18000, scoped, tag = 'input window, operand 6, single buffered']
    #allocation15 [shape = 'u8[65536]{0}', space=vmem, size = 0x10000, scoped, tag = 'input window, operand 7']
    #allocation16 [shape = 's32[2]{0}', space=sflag, size = 0x8, scoped, tag = 'scoped memory for tpu_custom_call.1']
    #allocation17 [shape = 'u8[8192]{0}', space=vmem, size = 0x2000, scoped, tag = 'output window, operand 0']
    %15 = vsyncpa [#allocation4], 0
    %s16 = scalar_lea.sflag [#allocation4], 1
    %17 = vsyncpa %s16, 0
    %18 = vsyncpa [#allocation7], 0
    %s19 = scalar_lea.sflag [#allocation7], 1
    %20 = vsyncpa %s19, 0
    %21 = vsyncpa [#allocation10], 0
    %22 = vsyncpa [#allocation13], 0
    %23 = vsyncpa [#allocation16], 0
    %s24 = scalar_lea.sflag [#allocation16], 1
    %25 = vsyncpa %s24, 0
    %26 = vsyncpa [#allocation5], 0
    %s27 = scalar_lea.sflag [#allocation5], 1
    %28 = vsyncpa %s27, 0
    loop: start=0, step=1, limit=12
    $region2: #{tpu_custom_call.1} parent=1 // loop_pre_header
      _
    $region3: #{tpu_custom_call.1} parent=1 // loop_header
      %s30 = sphi 0, %s34
      %p31 = scmp.ge.s32.totalorder %s30, 12
      %s37 = sphi 0, %s49
      %s38 = sphi 0, %s45
      %s39 = sphi 0, %s37
      %s40 = sphi 0, %s38
      %s41 = sphi 0, %s39
      %s42 = sphi 0, %s40
      %s52 = sphi 0, %s54
      %s55 = sphi 0, %s52
      %s56 = sphi 0, %s55
      %s72 = sphi 0, %s56
      %s78 = sphi 0, %s80
      %s81 = sphi 0, %s78
      %s82 = sphi 0, %s81
      %s98 = sphi 0, %s82
      %s104 = sphi 0, %s106
      %s107 = sphi 0, %s104
      %s108 = sphi 0, %s107
      %s124 = sphi 0, %s108
      %s128 = sphi 0, %s128
      %s130 = sphi 0, %s128
      %s131 = sphi 0, %s130
      %s145 = sphi 0, %s131
      %s149 = sphi 0, %s149
      %s151 = sphi 0, %s149
      %s152 = sphi 0, %s151
      %s166 = sphi 0, %s152
      %s170 = sphi 0, %s170
      %s172 = sphi 0, %s170
      %s173 = sphi 0, %s172
      %s187 = sphi 0, %s173
      %s191 = sphi 0, %s191
      %s193 = sphi 0, %s191
      %s194 = sphi 0, %s193
      %s208 = sphi 0, %s194
      %s214 = sphi 0, %s216
      %s217 = sphi 0, %s214
      %s218 = sphi 0, %s217
      %s234 = sphi 0, %s218
      %s238 = sphi 0, %s238
      %s240 = sphi 0, %s238
      %s241 = sphi 0, %s240
      %s255 = sphi 0, %s241
      %s261 = sphi 0, %s263
      %s264 = sphi 0, %s261
      %s265 = sphi 0, %s264
      %s281 = sphi 0, %s265
      %s289 = sphi 0, %s291
      %s292 = sphi 0, %s289
      %s293 = sphi 0, %s292
      %s309 = sphi 0, %s293
    $region4: #{tpu_custom_call.1} parent=1 // loop_header_branch
      %33 = sbr.rel (%p31) target = $region8
    $region5: #{tpu_custom_call.1} parent=1 // loop_body
      %s35 = ssub.s32 %s30, 1
      %s36 = ssub.s32 %s30, 2
      %s43 = sadd.s32 1, %s38
      %p44 = scmp.ge.s32.totalorder %s43, 5
      %s45 = scalar_select %p44, 0, %s43
      %s46 = sadd.s32 1, %s37
      %s47 = scalar_select %p44, %s46, %s37
      %p48 = scmp.ge.s32.totalorder %s47, 2
      %s49 = scalar_select %p48, 0, %s47
      %s50 = ssub.s32 %s37, %s49
      %p51 = scmp.eq.s32.totalorder %s50, 0
      %s53 = sadd.s32 %s52, 1
      %s54 = scalar_select %p51, %s52, %s53
      %p57 = pneg %p51
      %p58 = scmp.eq.s32.totalorder %s30, 9
      %p59 = por %p57, %p58
      %p60 = scmp.ne.s32.totalorder %s52, %s55
      %p61 = scmp.eq.s32.totalorder %s30, 0
      %p62 = por %p60, %p61
      %p63 = scmp.ne.s32.totalorder %s52, %s55
      %p64 = scmp.eq.s32.totalorder %s35, 9
      %p65 = por %p63, %p64
      %p66 = scmp.ne.s32.totalorder %s55, %s56
      %p67 = scmp.eq.s32.totalorder %s35, 0
      %p68 = por %p66, %p67
      %p69 = scmp.ne.s32.totalorder %s55, %s56
      %p70 = scmp.eq.s32.totalorder %s36, 9
      %p71 = por %p69, %p70
      %p73 = scmp.ne.s32.totalorder %s56, %s72
      %p74 = scmp.eq.s32.totalorder %s36, 0
      %p75 = por %p73, %p74
      %s76 = ssub.s32 %s37, %s49
      %p77 = scmp.eq.s32.totalorder %s76, 0
      %s79 = sadd.s32 %s78, 1
      %s80 = scalar_select %p77, %s78, %s79
      %p83 = pneg %p77
      %p84 = scmp.eq.s32.totalorder %s30, 9
      %p85 = por %p83, %p84
      %p86 = scmp.ne.s32.totalorder %s78, %s81
      %p87 = scmp.eq.s32.totalorder %s30, 0
      %p88 = por %p86, %p87
      %p89 = scmp.ne.s32.totalorder %s78, %s81
      %p90 = scmp.eq.s32.totalorder %s35, 9
      %p91 = por %p89, %p90
      %p92 = scmp.ne.s32.totalorder %s81, %s82
      %p93 = scmp.eq.s32.totalorder %s35, 0
      %p94 = por %p92, %p93
      %p95 = scmp.ne.s32.totalorder %s81, %s82
      %p96 = scmp.eq.s32.totalorder %s36, 9
      %p97 = por %p95, %p96
      %p99 = scmp.ne.s32.totalorder %s82, %s98
      %p100 = scmp.eq.s32.totalorder %s36, 0
      %p101 = por %p99, %p100
      %s102 = ssub.s32 %s37, %s49
      %p103 = scmp.eq.s32.totalorder %s102, 0
      %s105 = sadd.s32 %s104, 1
      %s106 = scalar_select %p103, %s104, %s105
      %p109 = pneg %p103
      %p110 = scmp.eq.s32.totalorder %s30, 9
      %p111 = por %p109, %p110
      %p112 = scmp.ne.s32.totalorder %s104, %s107
      %p113 = scmp.eq.s32.totalorder %s30, 0
      %p114 = por %p112, %p113
      %p115 = scmp.ne.s32.totalorder %s104, %s107
      %p116 = scmp.eq.s32.totalorder %s35, 9
      %p117 = por %p115, %p116
      %p118 = scmp.ne.s32.totalorder %s107, %s108
      %p119 = scmp.eq.s32.totalorder %s35, 0
      %p120 = por %p118, %p119
      %p121 = scmp.ne.s32.totalorder %s107, %s108
      %p122 = scmp.eq.s32.totalorder %s36, 9
      %p123 = por %p121, %p122
      %p125 = scmp.ne.s32.totalorder %s108, %s124
      %p126 = scmp.eq.s32.totalorder %s36, 0
      %p127 = por %p125, %p126
      %s129 = sadd.s32 %s128, 1
      %p132 = scmp.eq.s32.totalorder %s30, 9
      %p133 = scmp.ne.s32.totalorder %s128, %s130
      %p134 = scmp.eq.s32.totalorder %s30, 0
      %p135 = por %p133, %p134
      %p136 = scmp.ne.s32.totalorder %s128, %s130
      %p137 = scmp.eq.s32.totalorder %s35, 9
      %p138 = por %p136, %p137
      %p139 = scmp.ne.s32.totalorder %s130, %s131
      %p140 = scmp.eq.s32.totalorder %s35, 0
      %p141 = por %p139, %p140
      %p142 = scmp.ne.s32.totalorder %s130, %s131
      %p143 = scmp.eq.s32.totalorder %s36, 9
      %p144 = por %p142, %p143
      %p146 = scmp.ne.s32.totalorder %s131, %s145
      %p147 = scmp.eq.s32.totalorder %s36, 0
      %p148 = por %p146, %p147
      %s150 = sadd.s32 %s149, 1
      %p153 = scmp.eq.s32.totalorder %s30, 9
      %p154 = scmp.ne.s32.totalorder %s149, %s151
      %p155 = scmp.eq.s32.totalorder %s30, 0
      %p156 = por %p154, %p155
      %p157 = scmp.ne.s32.totalorder %s149, %s151
      %p158 = scmp.eq.s32.totalorder %s35, 9
      %p159 = por %p157, %p158
      %p160 = scmp.ne.s32.totalorder %s151, %s152
      %p161 = scmp.eq.s32.totalorder %s35, 0
      %p162 = por %p160, %p161
      %p163 = scmp.ne.s32.totalorder %s151, %s152
      %p164 = scmp.eq.s32.totalorder %s36, 9
      %p165 = por %p163, %p164
      %p167 = scmp.ne.s32.totalorder %s152, %s166
      %p168 = scmp.eq.s32.totalorder %s36, 0
      %p169 = por %p167, %p168
      %s171 = sadd.s32 %s170, 1
      %p174 = scmp.eq.s32.totalorder %s30, 9
      %p175 = scmp.ne.s32.totalorder %s170, %s172
      %p176 = scmp.eq.s32.totalorder %s30, 0
      %p177 = por %p175, %p176
      %p178 = scmp.ne.s32.totalorder %s170, %s172
      %p179 = scmp.eq.s32.totalorder %s35, 9
      %p180 = por %p178, %p179
      %p181 = scmp.ne.s32.totalorder %s172, %s173
      %p182 = scmp.eq.s32.totalorder %s35, 0
      %p183 = por %p181, %p182
      %p184 = scmp.ne.s32.totalorder %s172, %s173
      %p185 = scmp.eq.s32.totalorder %s36, 9
      %p186 = por %p184, %p185
      %p188 = scmp.ne.s32.totalorder %s173, %s187
      %p189 = scmp.eq.s32.totalorder %s36, 0
      %p190 = por %p188, %p189
      %s192 = sadd.s32 %s191, 1
      %p195 = scmp.eq.s32.totalorder %s30, 9
      %p196 = scmp.ne.s32.totalorder %s191, %s193
      %p197 = scmp.eq.s32.totalorder %s30, 0
      %p198 = por %p196, %p197
      %p199 = scmp.ne.s32.totalorder %s191, %s193
      %p200 = scmp.eq.s32.totalorder %s35, 9
      %p201 = por %p199, %p200
      %p202 = scmp.ne.s32.totalorder %s193, %s194
      %p203 = scmp.eq.s32.totalorder %s35, 0
      %p204 = por %p202, %p203
      %p205 = scmp.ne.s32.totalorder %s193, %s194
      %p206 = scmp.eq.s32.totalorder %s36, 9
      %p207 = por %p205, %p206
      %p209 = scmp.ne.s32.totalorder %s194, %s208
      %p210 = scmp.eq.s32.totalorder %s36, 0
      %p211 = por %p209, %p210
      %s212 = ssub.s32 %s38, %s45
      %p213 = scmp.eq.s32.totalorder %s212, 0
      %s215 = sadd.s32 %s214, 1
      %s216 = scalar_select %p213, %s214, %s215
      %p219 = pneg %p213
      %p220 = scmp.eq.s32.totalorder %s30, 9
      %p221 = por %p219, %p220
      %p222 = scmp.ne.s32.totalorder %s214, %s217
      %p223 = scmp.eq.s32.totalorder %s30, 0
      %p224 = por %p222, %p223
      %p225 = scmp.ne.s32.totalorder %s214, %s217
      %p226 = scmp.eq.s32.totalorder %s35, 9
      %p227 = por %p225, %p226
      %p228 = scmp.ne.s32.totalorder %s217, %s218
      %p229 = scmp.eq.s32.totalorder %s35, 0
      %p230 = por %p228, %p229
      %p231 = scmp.ne.s32.totalorder %s217, %s218
      %p232 = scmp.eq.s32.totalorder %s36, 9
      %p233 = por %p231, %p232
      %p235 = scmp.ne.s32.totalorder %s218, %s234
      %p236 = scmp.eq.s32.totalorder %s36, 0
      %p237 = por %p235, %p236
      %s239 = sadd.s32 %s238, 1
      %p242 = scmp.eq.s32.totalorder %s30, 9
      %p243 = scmp.ne.s32.totalorder %s238, %s240
      %p244 = scmp.eq.s32.totalorder %s30, 0
      %p245 = por %p243, %p244
      %p246 = scmp.ne.s32.totalorder %s238, %s240
      %p247 = scmp.eq.s32.totalorder %s35, 9
      %p248 = por %p246, %p247
      %p249 = scmp.ne.s32.totalorder %s240, %s241
      %p250 = scmp.eq.s32.totalorder %s35, 0
      %p251 = por %p249, %p250
      %p252 = scmp.ne.s32.totalorder %s240, %s241
      %p253 = scmp.eq.s32.totalorder %s36, 9
      %p254 = por %p252, %p253
      %p256 = scmp.ne.s32.totalorder %s241, %s255
      %p257 = scmp.eq.s32.totalorder %s36, 0
      %p258 = por %p256, %p257
      %s259 = ssub.s32 %s38, %s45
      %p260 = scmp.eq.s32.totalorder %s259, 0
      %s262 = sadd.s32 %s261, 1
      %s263 = scalar_select %p260, %s261, %s262
      %p266 = pneg %p260
      %p267 = scmp.eq.s32.totalorder %s30, 9
      %p268 = por %p266, %p267
      %p269 = scmp.ne.s32.totalorder %s261, %s264
      %p270 = scmp.eq.s32.totalorder %s30, 0
      %p271 = por %p269, %p270
      %p272 = scmp.ne.s32.totalorder %s261, %s264
      %p273 = scmp.eq.s32.totalorder %s35, 9
      %p274 = por %p272, %p273
      %p275 = scmp.ne.s32.totalorder %s264, %s265
      %p276 = scmp.eq.s32.totalorder %s35, 0
      %p277 = por %p275, %p276
      %p278 = scmp.ne.s32.totalorder %s264, %s265
      %p279 = scmp.eq.s32.totalorder %s36, 9
      %p280 = por %p278, %p279
      %p282 = scmp.ne.s32.totalorder %s265, %s281
      %p283 = scmp.eq.s32.totalorder %s36, 0
      %p284 = por %p282, %p283
      %s285 = ssub.s32 %s37, %s49
      %s286 = ssub.s32 %s38, %s45
      %s287 = sor.u32 %s285, %s286
      %p288 = scmp.eq.s32.totalorder %s287, 0
      %s290 = sadd.s32 %s289, 1
      %s291 = scalar_select %p288, %s289, %s290
      %p294 = pneg %p288
      %p295 = scmp.eq.s32.totalorder %s30, 9
      %p296 = por %p294, %p295
      %p297 = scmp.ne.s32.totalorder %s289, %s292
      %p298 = scmp.eq.s32.totalorder %s30, 0
      %p299 = por %p297, %p298
      %p300 = scmp.ne.s32.totalorder %s289, %s292
      %p301 = scmp.eq.s32.totalorder %s35, 9
      %p302 = por %p300, %p301
      %p303 = scmp.ne.s32.totalorder %s292, %s293
      %p304 = scmp.eq.s32.totalorder %s35, 0
      %p305 = por %p303, %p304
      %p306 = scmp.ne.s32.totalorder %s292, %s293
      %p307 = scmp.eq.s32.totalorder %s36, 9
      %p308 = por %p306, %p307
      %p310 = scmp.ne.s32.totalorder %s293, %s309
      %p311 = scmp.eq.s32.totalorder %s36, 0
      %p312 = por %p310, %p311
      %p313 = scmp.le.s32.totalorder 1, %s30
      %p314 = scmp.lt.s32.totalorder %s30, 11
      %p315 = pnand %p313, %p314
      %p316 = pneg %p315
      // Predicated region
      $region9: #{tpu_custom_call.1} parent=5 // pred_check
        _
      $region10: #{tpu_custom_call.1} parent=5 // pred_check_branch
        %318 = sbr.rel (%p315) target = $region12
      $region11: #{tpu_custom_call.1} parent=5 // pred_region
        %s319 = ssub.s32 %s30, 1
        // Predicated region
        $region13: #{tpu_custom_call.1} parent=11 // pred_check
          %p320 = pneg %p141
        $region14: #{tpu_custom_call.1} parent=11 // pred_check_branch
          %322 = sbr.rel (%p320) target = $region16
        $region15: #{tpu_custom_call.1} parent=11 // pred_region
          %s324 = ssub.s32 2048, 2048
          %325 = vsyncadd [#allocation10], %s324
          %s326 = sshll.u32 [#allocation9], 4
          %s327 = int_to_ptr.vmem [resolvable:$true] %s326
          %332 = dma.hbm_to_vmem [thread:$0]  %s3, 2048, %s327, [#allocation10], 64, 64, 4
        $region16: #{tpu_custom_call.1} parent=11 // pred_fallthru
          _
        // Predicated region
        $region17: #{tpu_custom_call.1} parent=11 // pred_check
          %p333 = pneg %p162
        $region18: #{tpu_custom_call.1} parent=11 // pred_check_branch
          %335 = sbr.rel (%p333) target = $region20
        $region19: #{tpu_custom_call.1} parent=11 // pred_region
          %s337 = ssub.s32 2048, 2048
          %338 = vsyncadd [#allocation10], %s337
          %s339 = sshll.u32 [#allocation11], 4
          %s340 = int_to_ptr.vmem [resolvable:$true] %s339
          %345 = dma.hbm_to_vmem [thread:$0]  %s4, 2048, %s340, [#allocation10], 64, 64, 4
        $region20: #{tpu_custom_call.1} parent=11 // pred_fallthru
          _
        // Predicated region
        $region21: #{tpu_custom_call.1} parent=11 // pred_check
          %p346 = pneg %p183
        $region22: #{tpu_custom_call.1} parent=11 // pred_check_branch
          %348 = sbr.rel (%p346) target = $region24
        $region23: #{tpu_custom_call.1} parent=11 // pred_region
          %s350 = ssub.s32 2048, 2048
          %351 = vsyncadd [#allocation13], %s350
          %s352 = sshll.u32 [#allocation12], 4
          %s353 = int_to_ptr.vmem [resolvable:$true] %s352
          %358 = dma.hbm_to_vmem [thread:$0]  %s5, 2048, %s353, [#allocation13], 64, 64, 4
        $region24: #{tpu_custom_call.1} parent=11 // pred_fallthru
          _
        // Predicated region
        $region25: #{tpu_custom_call.1} parent=11 // pred_check
          %p359 = pneg %p204
        $region26: #{tpu_custom_call.1} parent=11 // pred_check_branch
          %361 = sbr.rel (%p359) target = $region28
        $region27: #{tpu_custom_call.1} parent=11 // pred_region
          %s363 = ssub.s32 3072, 3072
          %364 = vsyncadd [#allocation13], %s363
          %s365 = sshll.u32 [#allocation14], 4
          %s366 = int_to_ptr.vmem [resolvable:$true] %s365
          %371 = dma.hbm_to_vmem [thread:$0]  %s6, 3072, %s366, [#allocation13], 64, 64, 4
        $region28: #{tpu_custom_call.1} parent=11 // pred_fallthru
          _
        // Predicated region
        $region29: #{tpu_custom_call.1} parent=11 // pred_check
          %p372 = pneg %p251
        $region30: #{tpu_custom_call.1} parent=11 // pred_check_branch
          %374 = sbr.rel (%p372) target = $region32
        $region31: #{tpu_custom_call.1} parent=11 // pred_region
          _
        $region32: #{tpu_custom_call.1} parent=11 // pred_fallthru
          _
      $region12: #{tpu_custom_call.1} parent=5 // pred_fallthru
        _
      %p375 = scmp.lt.s32.totalorder %s30, 10
      // Predicated region
      $region33: #{tpu_custom_call.1} parent=5 // pred_check
        %p376 = pneg %p375
      $region34: #{tpu_custom_call.1} parent=5 // pred_check_branch
        %378 = sbr.rel (%p376) target = $region36
      $region35: #{tpu_custom_call.1} parent=5 // pred_region
        // Predicated region
        $region37: #{tpu_custom_call.1} parent=35 // pred_check
          %p379 = pneg %p62
        $region38: #{tpu_custom_call.1} parent=35 // pred_check_branch
          %381 = sbr.rel (%p379) target = $region40
        $region39: #{tpu_custom_call.1} parent=35 // pred_region
          %s382 = sand.u32 %s52, 1
          %s383 = scalar_lea.sflag [#allocation4], %s382
          %s384 = sand.u32 %s52, 1
          %s385 = smul.addr %s384, 16
          %s386 = scalar_lea.vmem [#allocation3], %s385
          %s388 = ssub.s32 256, 256
          %389 = vsyncadd %s383, %s388
          %s390 = smul.addr %s37, 2
          %s391 = smul.addr %s390, 128
          %s392 = scalar_lea.hbm %s0, %s391
          %s394 = sshll.u32 %s386, 4
          %s395 = int_to_ptr.vmem [resolvable:$true] %s394
          %397 = dma.hbm_to_vmem [thread:$0]  %s392, 256, %s395, %s383
        $region40: #{tpu_custom_call.1} parent=35 // pred_fallthru
          _
        // Predicated region
        $region41: #{tpu_custom_call.1} parent=35 // pred_check
          %p398 = pneg %p88
        $region42: #{tpu_custom_call.1} parent=35 // pred_check_branch
          %400 = sbr.rel (%p398) target = $region44
        $region43: #{tpu_custom_call.1} parent=35 // pred_region
          %s401 = sand.u32 %s30, 1
          %s402 = scalar_lea.sflag [#allocation7], %s401
          %s403 = sand.u32 %s78, 1
          %s404 = smul.addr %s403, 16
          %s405 = scalar_lea.vmem [#allocation6], %s404
          %s407 = ssub.s32 256, 256
          %408 = vsyncadd %s402, %s407
          %s409 = smul.addr %s37, 2
          %s410 = smul.addr %s409, 128
          %s411 = scalar_lea.hbm %s1, %s410
          %s413 = sshll.u32 %s405, 4
          %s414 = int_to_ptr.vmem [resolvable:$true] %s413
          %416 = dma.hbm_to_vmem [thread:$0]  %s411, 256, %s414, %s402
        $region44: #{tpu_custom_call.1} parent=35 // pred_fallthru
          _
        // Predicated region
        $region45: #{tpu_custom_call.1} parent=35 // pred_check
          %p417 = pneg %p114
        $region46: #{tpu_custom_call.1} parent=35 // pred_check_branch
          %419 = sbr.rel (%p417) target = $region48
        $region47: #{tpu_custom_call.1} parent=35 // pred_region
          %s420 = sand.u32 %s30, 1
          %s421 = scalar_lea.sflag [#allocation7], %s420
          %s422 = sand.u32 %s104, 1
          %s423 = smul.addr %s422, 16
          %s424 = scalar_lea.vmem [#allocation8], %s423
          %s426 = ssub.s32 256, 256
          %427 = vsyncadd %s421, %s426
          %s428 = smul.addr %s37, 2
          %s429 = smul.addr %s428, 128
          %s430 = scalar_lea.hbm %s2, %s429
          %s432 = sshll.u32 %s424, 4
          %s433 = int_to_ptr.vmem [resolvable:$true] %s432
          %435 = dma.hbm_to_vmem [thread:$0]  %s430, 256, %s433, %s421
        $region48: #{tpu_custom_call.1} parent=35 // pred_fallthru
          _
        // Predicated region
        $region49: #{tpu_custom_call.1} parent=35 // pred_check
          %p436 = pneg %p224
        $region50: #{tpu_custom_call.1} parent=35 // pred_check_branch
          %438 = sbr.rel (%p436) target = $region52
        $region51: #{tpu_custom_call.1} parent=35 // pred_region
          %s439 = sand.u32 %s214, 1
          %s440 = scalar_lea.sflag [#allocation16], %s439
          %s441 = sand.u32 %s214, 1
          %s442 = smul.addr %s441, 64
          %s443 = scalar_lea.vmem [#allocation15], %s442
          %s445 = ssub.s32 1024, 1024
          %446 = vsyncadd %s440, %s445
          %s447 = smul.addr %s38, 64
          %s448 = scalar_lea.hbm %s7, %s447
          %s449 = sshll.u32 %s443, 4
          %s450 = int_to_ptr.vmem [resolvable:$true] %s449
          %455 = dma.hbm_to_vmem [thread:$0]  %s448, 1024, %s450, %s440, 320, 64, 4
        $region52: #{tpu_custom_call.1} parent=35 // pred_fallthru
          _
        // Predicated region
        $region53: #{tpu_custom_call.1} parent=35 // pred_check
          %p456 = pneg %p271
        $region54: #{tpu_custom_call.1} parent=35 // pred_check_branch
          %458 = sbr.rel (%p456) target = $region56
        $region55: #{tpu_custom_call.1} parent=35 // pred_region
          %p459 = scmp.lt.s32.totalorder %s38, 4
          %s460 = scalar_select %p459, %s38, 4
          %s461 = scalar_lea.vmem %s9, %s460
        $region56: #{tpu_custom_call.1} parent=35 // pred_fallthru
          _
      $region36: #{tpu_custom_call.1} parent=5 // pred_fallthru
        _
      %p462 = scmp.le.s32.totalorder 1, %s30
      %p463 = scmp.lt.s32.totalorder %s30, 11
      %p464 = pnand %p462, %p463
      %p465 = pneg %p464
      // Predicated region
      $region57: #{tpu_custom_call.1} parent=5 // pred_check
        _
      $region58: #{tpu_custom_call.1} parent=5 // pred_check_branch
        %467 = sbr.rel (%p464) target = $region60
      $region59: #{tpu_custom_call.1} parent=5 // pred_region
        %s468 = ssub.s32 %s30, 1
        %s469 = sand.u32 %s55, 1
        %s470 = scalar_lea.sflag [#allocation4], %s469
        %s471 = sand.u32 %s55, 1
        %s472 = smul.addr %s471, 16
        %s473 = scalar_lea.vmem [#allocation3], %s472
        // Predicated region
        $region61: #{tpu_custom_call.1} parent=59 // pred_check
          %p474 = pneg %p68
        $region62: #{tpu_custom_call.1} parent=59 // pred_check_branch
          %476 = sbr.rel (%p474) target = $region64
        $region63: #{tpu_custom_call.1} parent=59 // pred_region
          %477 = dma.done %s470, 256
        $region64: #{tpu_custom_call.1} parent=59 // pred_fallthru
          _
        %s478 = sand.u32 %s35, 1
        %s479 = scalar_lea.sflag [#allocation7], %s478
        %s480 = sand.u32 %s81, 1
        %s481 = smul.addr %s480, 16
        %s482 = scalar_lea.vmem [#allocation6], %s481
        // Predicated region
        $region65: #{tpu_custom_call.1} parent=59 // pred_check
          %p483 = pneg %p94
        $region66: #{tpu_custom_call.1} parent=59 // pred_check_branch
          %485 = sbr.rel (%p483) target = $region68
        $region67: #{tpu_custom_call.1} parent=59 // pred_region
          %486 = dma.done %s479, 256
        $region68: #{tpu_custom_call.1} parent=59 // pred_fallthru
          _
        %s487 = sand.u32 %s35, 1
        %s488 = scalar_lea.sflag [#allocation7], %s487
        %s489 = sand.u32 %s107, 1
        %s490 = smul.addr %s489, 16
        %s491 = scalar_lea.vmem [#allocation8], %s490
        // Predicated region
        $region69: #{tpu_custom_call.1} parent=59 // pred_check
          %p492 = pneg %p120
        $region70: #{tpu_custom_call.1} parent=59 // pred_check_branch
          %494 = sbr.rel (%p492) target = $region72
        $region71: #{tpu_custom_call.1} parent=59 // pred_region
          %495 = dma.done %s488, 256
        $region72: #{tpu_custom_call.1} parent=59 // pred_fallthru
          _
        // Predicated region
        $region73: #{tpu_custom_call.1} parent=59 // pred_check
          %p496 = pneg %p141
        $region74: #{tpu_custom_call.1} parent=59 // pred_check_branch
          %498 = sbr.rel (%p496) target = $region76
        $region75: #{tpu_custom_call.1} parent=59 // pred_region
          %499 = dma.done [#allocation10], 2048
        $region76: #{tpu_custom_call.1} parent=59 // pred_fallthru
          _
        // Predicated region
        $region77: #{tpu_custom_call.1} parent=59 // pred_check
          %p500 = pneg %p162
        $region78: #{tpu_custom_call.1} parent=59 // pred_check_branch
          %502 = sbr.rel (%p500) target = $region80
        $region79: #{tpu_custom_call.1} parent=59 // pred_region
          %503 = dma.done [#allocation10], 2048
        $region80: #{tpu_custom_call.1} parent=59 // pred_fallthru
          _
        // Predicated region
        $region81: #{tpu_custom_call.1} parent=59 // pred_check
          %p504 = pneg %p183
        $region82: #{tpu_custom_call.1} parent=59 // pred_check_branch
          %506 = sbr.rel (%p504) target = $region84
        $region83: #{tpu_custom_call.1} parent=59 // pred_region
          %507 = dma.done [#allocation13], 2048
        $region84: #{tpu_custom_call.1} parent=59 // pred_fallthru
          _
        // Predicated region
        $region85: #{tpu_custom_call.1} parent=59 // pred_check
          %p508 = pneg %p204
        $region86: #{tpu_custom_call.1} parent=59 // pred_check_branch
          %510 = sbr.rel (%p508) target = $region88
        $region87: #{tpu_custom_call.1} parent=59 // pred_region
          %511 = dma.done [#allocation13], 3072
        $region88: #{tpu_custom_call.1} parent=59 // pred_fallthru
          _
        %s512 = sand.u32 %s217, 1
        %s513 = scalar_lea.sflag [#allocation16], %s512
        %s514 = sand.u32 %s217, 1
        %s515 = smul.addr %s514, 64
        %s516 = scalar_lea.vmem [#allocation15], %s515
        // Predicated region
        $region89: #{tpu_custom_call.1} parent=59 // pred_check
          %p517 = pneg %p230
        $region90: #{tpu_custom_call.1} parent=59 // pred_check_branch
          %519 = sbr.rel (%p517) target = $region92
        $region91: #{tpu_custom_call.1} parent=59 // pred_region
          %520 = dma.done %s513, 1024
        $region92: #{tpu_custom_call.1} parent=59 // pred_fallthru
          _
        %s521 = sand.u32 %s55, 1
        %s522 = scalar_lea.sflag [#allocation4], %s521
        %s523 = sand.u32 %s55, 1
        %s524 = smul.addr %s523, 16
        %s525 = scalar_lea.vmem [#allocation3], %s524
        %p526 = pneg %p68
        %p527 = pneg %p65
        %s528 = sand.u32 %s35, 1
        %s529 = scalar_lea.sflag [#allocation7], %s528
        %s530 = sand.u32 %s81, 1
        %s531 = smul.addr %s530, 16
        %s532 = scalar_lea.vmem [#allocation6], %s531
        %p533 = pneg %p94
        %p534 = pneg %p91
        %s535 = sand.u32 %s35, 1
        %s536 = scalar_lea.sflag [#allocation7], %s535
        %s537 = sand.u32 %s107, 1
        %s538 = smul.addr %s537, 16
        %s539 = scalar_lea.vmem [#allocation8], %s538
        %p540 = pneg %p120
        %p541 = pneg %p117
        %p542 = pneg %p141
        %p543 = pneg %p138
        %p544 = pneg %p162
        %p545 = pneg %p159
        %p546 = pneg %p183
        %p547 = pneg %p180
        %p548 = pneg %p204
        %p549 = pneg %p201
        %s550 = sand.u32 %s217, 1
        %s551 = scalar_lea.sflag [#allocation16], %s550
        %s552 = sand.u32 %s217, 1
        %s553 = smul.addr %s552, 64
        %s554 = scalar_lea.vmem [#allocation15], %s553
        %p555 = pneg %p230
        %p556 = pneg %p227
        %p557 = pneg %p251
        %p558 = pneg %p248
        %p559 = scmp.lt.s32.totalorder %s40, 4
        %s560 = scalar_select %p559, %s40, 4
        %s561 = scalar_lea.vmem %s9, %s560
        %p562 = pneg %p277
        %p563 = pneg %p274
        %p564 = pneg %p305
        %p565 = pneg %p302
        %s566 = sand.u32 %s292, 1
        %s567 = scalar_lea.sflag [#allocation5], %s566
        %s568 = sand.u32 %s292, 1
        %s569 = smul.addr %s568, 8
        %s570 = scalar_lea.vmem [#allocation17], %s569
        %p571 = scmp.lt.s32.totalorder %s40, 4
        %s572 = scalar_select %p571, %s40, 4
        %s573 = scalar_lea.vmem %s9, %s572
        %p575 = scmp.eq.s32.totalorder %s40, 0
        // Predicated region
        $region93: #{tpu_custom_call.1} parent=59 // pred_check
          %p576 = pneg %p575
        $region94: #{tpu_custom_call.1} parent=59 // pred_check_branch
          %578 = sbr.rel (%p576) target = $region96
        $region95: #{tpu_custom_call.1} parent=59 // pred_region
          %v579 = vld [vmem:[%s473] sm:$0xff]
          %v580 = vld [vmem:[%s473 + $0x8] sm:$0xff]
          %v581 = vpack.c.bf16 %v579, %v579
          %v582 = vpack.c.bf16 %v580, %v580
          %v583 = vld [vmem:[#allocation9] sm:$0xf]
          %v584 = vld [vmem:[#allocation9 + $0x4] sm:$0xf]
          %v585 = vld [vmem:[#allocation9 + $0x8] sm:$0xf]
          %v586 = vld [vmem:[#allocation9 + $0xc] sm:$0xf]
          %v587 = vld [vmem:[#allocation9 + $0x10] sm:$0xf]
          %v588 = vld [vmem:[#allocation9 + $0x14] sm:$0xf]
          %v589 = vld [vmem:[#allocation9 + $0x18] sm:$0xf]
          %v590 = vld [vmem:[#allocation9 + $0x1c] sm:$0xf]
          %v591 = vld [vmem:[#allocation9 + $0x20] sm:$0xf]
          %v592 = vld [vmem:[#allocation9 + $0x24] sm:$0xf]
          %v593 = vld [vmem:[#allocation9 + $0x28] sm:$0xf]
          %v594 = vld [vmem:[#allocation9 + $0x2c] sm:$0xf]
          %v595 = vld [vmem:[#allocation9 + $0x30] sm:$0xf]
          %v596 = vld [vmem:[#allocation9 + $0x34] sm:$0xf]
          %v597 = vld [vmem:[#allocation9 + $0x38] sm:$0xf]
          %v598 = vld [vmem:[#allocation9 + $0x3c] sm:$0xf]
          %v599 = vld [vmem:[#allocation9 + $0x40] sm:$0xf]
          %v600 = vld [vmem:[#allocation9 + $0x44] sm:$0xf]
          %v601 = vld [vmem:[#allocation9 + $0x48] sm:$0xf]
          %v602 = vld [vmem:[#allocation9 + $0x4c] sm:$0xf]
          %v603 = vld [vmem:[#allocation9 + $0x50] sm:$0xf]
          %v604 = vld [vmem:[#allocation9 + $0x54] sm:$0xf]
          %v605 = vld [vmem:[#allocation9 + $0x58] sm:$0xf]
          %v606 = vld [vmem:[#allocation9 + $0x5c] sm:$0xf]
          %v607 = vld [vmem:[#allocation9 + $0x60] sm:$0xf]
          %v608 = vld [vmem:[#allocation9 + $0x64] sm:$0xf]
          %v609 = vld [vmem:[#allocation9 + $0x68] sm:$0xf]
          %v610 = vld [vmem:[#allocation9 + $0x6c] sm:$0xf]
          %v611 = vld [vmem:[#allocation9 + $0x70] sm:$0xf]
          %v612 = vld [vmem:[#allocation9 + $0x74] sm:$0xf]
          %v613 = vld [vmem:[#allocation9 + $0x78] sm:$0xf]
          %v614 = vld [vmem:[#allocation9 + $0x7c] sm:$0xf]
          %v615 = vld [vmem:[%s8] sm:$0x1]
          %v616 = vlaneseq
          %v617 = vshrl.u32 %v616, 7
          %v618 = vsub.s32 0, %v617
          %v619 = vrot.slane %v615, %v618
          %v652 = vunpack.c.l.b16 %v583
          %v653 = vunpack.c.l.b16 %v584
          %v654 = vunpack.c.l.b16 %v585
          %v655 = vunpack.c.l.b16 %v586
          %v656 = vunpack.c.l.b16 %v587
          %v657 = vunpack.c.l.b16 %v588
          %v658 = vunpack.c.l.b16 %v589
          %v659 = vunpack.c.l.b16 %v590
          %v660 = vunpack.c.l.b16 %v591
          %v661 = vunpack.c.l.b16 %v592
          %v662 = vunpack.c.l.b16 %v593
          %v663 = vunpack.c.l.b16 %v594
          %v664 = vunpack.c.l.b16 %v595
          %v665 = vunpack.c.l.b16 %v596
          %v666 = vunpack.c.l.b16 %v597
          %v667 = vunpack.c.l.b16 %v598
          %v668 = vunpack.c.l.b16 %v599
          %v669 = vunpack.c.l.b16 %v600
          %v670 = vunpack.c.l.b16 %v601
          %v671 = vunpack.c.l.b16 %v602
          %v672 = vunpack.c.l.b16 %v603
          %v673 = vunpack.c.l.b16 %v604
          %v674 = vunpack.c.l.b16 %v605
          %v675 = vunpack.c.l.b16 %v606
          %v676 = vunpack.c.l.b16 %v607
          %v677 = vunpack.c.l.b16 %v608
          %v678 = vunpack.c.l.b16 %v609
          %v679 = vunpack.c.l.b16 %v610
          %v680 = vunpack.c.l.b16 %v611
          %v681 = vunpack.c.l.b16 %v612
          %v682 = vunpack.c.l.b16 %v613
          %v683 = vunpack.c.l.b16 %v614
          %v684 = vpack.c.b16 %v653, %v652
          %v685 = vpack.c.b16 %v655, %v654
          %v686 = vpack.c.b16 %v657, %v656
          %v687 = vpack.c.b16 %v659, %v658
          %v688 = vpack.c.b16 %v661, %v660
          %v689 = vpack.c.b16 %v663, %v662
          %v690 = vpack.c.b16 %v665, %v664
          %v691 = vpack.c.b16 %v667, %v666
          %v692 = vpack.c.b16 %v669, %v668
          %v693 = vpack.c.b16 %v671, %v670
          %v694 = vpack.c.b16 %v673, %v672
          %v695 = vpack.c.b16 %v675, %v674
          %v696 = vpack.c.b16 %v677, %v676
          %v697 = vpack.c.b16 %v679, %v678
          %v698 = vpack.c.b16 %v681, %v680
          %v699 = vpack.c.b16 %v683, %v682
          %716 = vmatprep.subr.bf16.mxu0 0
          %717 = vmatpush1.bf16.msra.mxu0 %v691
          %718 = vmatprep.subr.bf16.mxu0 0
          %719 = vmatpush1.bf16.msra.mxu0 %v690
          %720 = vmatprep.subr.bf16.mxu0 0
          %721 = vmatpush1.bf16.msra.mxu0 %v689
          %722 = vmatprep.subr.bf16.mxu0 0
          %723 = vmatpush1.bf16.msra.mxu0 %v688
          %724 = vmatprep.subr.bf16.mxu0 0
          %725 = vmatpush1.bf16.msra.mxu0 %v687
          %726 = vmatprep.subr.bf16.mxu0 0
          %727 = vmatpush1.bf16.msra.mxu0 %v686
          %728 = vmatprep.subr.bf16.mxu0 0
          %729 = vmatpush1.bf16.msra.mxu0 %v685
          %730 = vmatprep.subr.bf16.mxu0 0
          %731 = vmatpush1.bf16.msra.mxu0 %v684
          %732 = vmatprep.subr.bf16.mxu0 0
          %733 = vmatpush2.bf16.msra.mxu0 %v699
          %734 = vmatprep.subr.bf16.mxu0 0
          %735 = vmatpush2.bf16.msra.mxu0 %v698
          %736 = vmatprep.subr.bf16.mxu0 0
          %737 = vmatpush2.bf16.msra.mxu0 %v697
          %738 = vmatprep.subr.bf16.mxu0 0
          %739 = vmatpush2.bf16.msra.mxu0 %v696
          %740 = vmatprep.subr.bf16.mxu0 0
          %741 = vmatpush2.bf16.msra.mxu0 %v695
          %742 = vmatprep.subr.bf16.mxu0 0
          %743 = vmatpush2.bf16.msra.mxu0 %v694
          %744 = vmatprep.subr.bf16.mxu0 0
          %745 = vmatpush2.bf16.msra.mxu0 %v693
          %746 = vmatprep.subr.bf16.mxu0 0
          %747 = vmatpush2.bf16.msra.mxu0 %v692
          %748 = vmatprep.mubr.bf16.mxu0 %v582
          %749 = vmatmul.mubr.bf16.gmra.mxu0 %v581
          %v750 = vpop.f32.mrf.mxu0
          %v751 = vadd.f32 %v619, %v750
          %v752 = vpop.f32.mrf.mxu0
          %v753 = vpop.f32.mrf.mxu0
          %v754 = vpop.f32.mrf.mxu0
          %755 = vdwg.mxu0
          %v756 = vmax.f32 %v751, 0.0
          %v757 = vpack.c.bf16 %v756, %v756
          %v758 = vld [vmem:[%s482] sm:$0xff]
          %v759 = vld [vmem:[%s482 + $0x8] sm:$0xff]
          %v760 = vpack.c.bf16 %v758, %v758
          %v761 = vpack.c.bf16 %v759, %v759
          %v762 = vld [vmem:[#allocation11] sm:$0xf]
          %v763 = vld [vmem:[#allocation11 + $0x4] sm:$0xf]
          %v764 = vld [vmem:[#allocation11 + $0x8] sm:$0xf]
          %v765 = vld [vmem:[#allocation11 + $0xc] sm:$0xf]
          %v766 = vld [vmem:[#allocation11 + $0x10] sm:$0xf]
          %v767 = vld [vmem:[#allocation11 + $0x14] sm:$0xf]
          %v768 = vld [vmem:[#allocation11 + $0x18] sm:$0xf]
          %v769 = vld [vmem:[#allocation11 + $0x1c] sm:$0xf]
          %v770 = vld [vmem:[#allocation11 + $0x20] sm:$0xf]
          %v771 = vld [vmem:[#allocation11 + $0x24] sm:$0xf]
          %v772 = vld [vmem:[#allocation11 + $0x28] sm:$0xf]
          %v773 = vld [vmem:[#allocation11 + $0x2c] sm:$0xf]
          %v774 = vld [vmem:[#allocation11 + $0x30] sm:$0xf]
          %v775 = vld [vmem:[#allocation11 + $0x34] sm:$0xf]
          %v776 = vld [vmem:[#allocation11 + $0x38] sm:$0xf]
          %v777 = vld [vmem:[#allocation11 + $0x3c] sm:$0xf]
          %v778 = vld [vmem:[#allocation11 + $0x40] sm:$0xf]
          %v779 = vld [vmem:[#allocation11 + $0x44] sm:$0xf]
          %v780 = vld [vmem:[#allocation11 + $0x48] sm:$0xf]
          %v781 = vld [vmem:[#allocation11 + $0x4c] sm:$0xf]
          %v782 = vld [vmem:[#allocation11 + $0x50] sm:$0xf]
          %v783 = vld [vmem:[#allocation11 + $0x54] sm:$0xf]
          %v784 = vld [vmem:[#allocation11 + $0x58] sm:$0xf]
          %v785 = vld [vmem:[#allocation11 + $0x5c] sm:$0xf]
          %v786 = vld [vmem:[#allocation11 + $0x60] sm:$0xf]
          %v787 = vld [vmem:[#allocation11 + $0x64] sm:$0xf]
          %v788 = vld [vmem:[#allocation11 + $0x68] sm:$0xf]
          %v789 = vld [vmem:[#allocation11 + $0x6c] sm:$0xf]
          %v790 = vld [vmem:[#allocation11 + $0x70] sm:$0xf]
          %v791 = vld [vmem:[#allocation11 + $0x74] sm:$0xf]
          %v792 = vld [vmem:[#allocation11 + $0x78] sm:$0xf]
          %v793 = vld [vmem:[#allocation11 + $0x7c] sm:$0xf]
          %v794 = vld [vmem:[%s8 + $0x1] sm:$0x1]
          %v795 = vlaneseq
          %v796 = vshrl.u32 %v795, 7
          %v797 = vsub.s32 0, %v796
          %v798 = vrot.slane %v794, %v797
          %v831 = vunpack.c.l.b16 %v762
          %v832 = vunpack.c.l.b16 %v763
          %v833 = vunpack.c.l.b16 %v764
          %v834 = vunpack.c.l.b16 %v765
          %v835 = vunpack.c.l.b16 %v766
          %v836 = vunpack.c.l.b16 %v767
          %v837 = vunpack.c.l.b16 %v768
          %v838 = vunpack.c.l.b16 %v769
          %v839 = vunpack.c.l.b16 %v770
          %v840 = vunpack.c.l.b16 %v771
          %v841 = vunpack.c.l.b16 %v772
          %v842 = vunpack.c.l.b16 %v773
          %v843 = vunpack.c.l.b16 %v774
          %v844 = vunpack.c.l.b16 %v775
          %v845 = vunpack.c.l.b16 %v776
          %v846 = vunpack.c.l.b16 %v777
          %v847 = vunpack.c.l.b16 %v778
          %v848 = vunpack.c.l.b16 %v779
          %v849 = vunpack.c.l.b16 %v780
          %v850 = vunpack.c.l.b16 %v781
          %v851 = vunpack.c.l.b16 %v782
          %v852 = vunpack.c.l.b16 %v783
          %v853 = vunpack.c.l.b16 %v784
          %v854 = vunpack.c.l.b16 %v785
          %v855 = vunpack.c.l.b16 %v786
          %v856 = vunpack.c.l.b16 %v787
          %v857 = vunpack.c.l.b16 %v788
          %v858 = vunpack.c.l.b16 %v789
          %v859 = vunpack.c.l.b16 %v790
          %v860 = vunpack.c.l.b16 %v791
          %v861 = vunpack.c.l.b16 %v792
          %v862 = vunpack.c.l.b16 %v793
          %v863 = vpack.c.b16 %v832, %v831
          %v864 = vpack.c.b16 %v834, %v833
          %v865 = vpack.c.b16 %v836, %v835
          %v866 = vpack.c.b16 %v838, %v837
          %v867 = vpack.c.b16 %v840, %v839
          %v868 = vpack.c.b16 %v842, %v841
          %v869 = vpack.c.b16 %v844, %v843
          %v870 = vpack.c.b16 %v846, %v845
          %v871 = vpack.c.b16 %v848, %v847
          %v872 = vpack.c.b16 %v850, %v849
          %v873 = vpack.c.b16 %v852, %v851
          %v874 = vpack.c.b16 %v854, %v853
          %v875 = vpack.c.b16 %v856, %v855
          %v876 = vpack.c.b16 %v858, %v857
          %v877 = vpack.c.b16 %v860, %v859
          %v878 = vpack.c.b16 %v862, %v861
          %895 = vmatprep.subr.bf16.mxu0 0
          %896 = vmatpush1.bf16.msra.mxu0 %v870
          %897 = vmatprep.subr.bf16.mxu0 0
          %898 = vmatpush1.bf16.msra.mxu0 %v869
          %899 = vmatprep.subr.bf16.mxu0 0
          %900 = vmatpush1.bf16.msra.mxu0 %v868
          %901 = vmatprep.subr.bf16.mxu0 0
          %902 = vmatpush1.bf16.msra.mxu0 %v867
          %903 = vmatprep.subr.bf16.mxu0 0
          %904 = vmatpush1.bf16.msra.mxu0 %v866
          %905 = vmatprep.subr.bf16.mxu0 0
          %906 = vmatpush1.bf16.msra.mxu0 %v865
          %907 = vmatprep.subr.bf16.mxu0 0
          %908 = vmatpush1.bf16.msra.mxu0 %v864
          %909 = vmatprep.subr.bf16.mxu0 0
          %910 = vmatpush1.bf16.msra.mxu0 %v863
          %911 = vmatprep.subr.bf16.mxu0 0
          %912 = vmatpush2.bf16.msra.mxu0 %v878
          %913 = vmatprep.subr.bf16.mxu0 0
          %914 = vmatpush2.bf16.msra.mxu0 %v877
          %915 = vmatprep.subr.bf16.mxu0 0
          %916 = vmatpush2.bf16.msra.mxu0 %v876
          %917 = vmatprep.subr.bf16.mxu0 0
          %918 = vmatpush2.bf16.msra.mxu0 %v875
          %919 = vmatprep.subr.bf16.mxu0 0
          %920 = vmatpush2.bf16.msra.mxu0 %v874
          %921 = vmatprep.subr.bf16.mxu0 0
          %922 = vmatpush2.bf16.msra.mxu0 %v873
          %923 = vmatprep.subr.bf16.mxu0 0
          %924 = vmatpush2.bf16.msra.mxu0 %v872
          %925 = vmatprep.subr.bf16.mxu0 0
          %926 = vmatpush2.bf16.msra.mxu0 %v871
          %927 = vmatprep.mubr.bf16.mxu0 %v761
          %928 = vmatmul.mubr.bf16.gmra.mxu0 %v760
          %v929 = vpop.f32.mrf.mxu0
          %v930 = vadd.f32 %v798, %v929
          %v931 = vpop.f32.mrf.mxu0
          %v932 = vpop.f32.mrf.mxu0
          %v933 = vpop.f32.mrf.mxu0
          %934 = vdwg.mxu0
          %v935 = vmax.f32 %v930, 0.0
          %v936 = vpack.c.bf16 %v935, %v935
          %v937 = vld [vmem:[%s491] sm:$0xff]
          %v938 = vld [vmem:[%s491 + $0x8] sm:$0xff]
          %v939 = vpack.c.bf16 %v937, %v937
          %v940 = vpack.c.bf16 %v938, %v938
          %v941 = vld [vmem:[#allocation12] sm:$0xf]
          %v942 = vld [vmem:[#allocation12 + $0x4] sm:$0xf]
          %v943 = vld [vmem:[#allocation12 + $0x8] sm:$0xf]
          %v944 = vld [vmem:[#allocation12 + $0xc] sm:$0xf]
          %v945 = vld [vmem:[#allocation12 + $0x10] sm:$0xf]
          %v946 = vld [vmem:[#allocation12 + $0x14] sm:$0xf]
          %v947 = vld [vmem:[#allocation12 + $0x18] sm:$0xf]
          %v948 = vld [vmem:[#allocation12 + $0x1c] sm:$0xf]
          %v949 = vld [vmem:[#allocation12 + $0x20] sm:$0xf]
          %v950 = vld [vmem:[#allocation12 + $0x24] sm:$0xf]
          %v951 = vld [vmem:[#allocation12 + $0x28] sm:$0xf]
          %v952 = vld [vmem:[#allocation12 + $0x2c] sm:$0xf]
          %v953 = vld [vmem:[#allocation12 + $0x30] sm:$0xf]
          %v954 = vld [vmem:[#allocation12 + $0x34] sm:$0xf]
          %v955 = vld [vmem:[#allocation12 + $0x38] sm:$0xf]
          %v956 = vld [vmem:[#allocation12 + $0x3c] sm:$0xf]
          %v957 = vld [vmem:[#allocation12 + $0x40] sm:$0xf]
          %v958 = vld [vmem:[#allocation12 + $0x44] sm:$0xf]
          %v959 = vld [vmem:[#allocation12 + $0x48] sm:$0xf]
          %v960 = vld [vmem:[#allocation12 + $0x4c] sm:$0xf]
          %v961 = vld [vmem:[#allocation12 + $0x50] sm:$0xf]
          %v962 = vld [vmem:[#allocation12 + $0x54] sm:$0xf]
          %v963 = vld [vmem:[#allocation12 + $0x58] sm:$0xf]
          %v964 = vld [vmem:[#allocation12 + $0x5c] sm:$0xf]
          %v965 = vld [vmem:[#allocation12 + $0x60] sm:$0xf]
          %v966 = vld [vmem:[#allocation12 + $0x64] sm:$0xf]
          %v967 = vld [vmem:[#allocation12 + $0x68] sm:$0xf]
          %v968 = vld [vmem:[#allocation12 + $0x6c] sm:$0xf]
          %v969 = vld [vmem:[#allocation12 + $0x70] sm:$0xf]
          %v970 = vld [vmem:[#allocation12 + $0x74] sm:$0xf]
          %v971 = vld [vmem:[#allocation12 + $0x78] sm:$0xf]
          %v972 = vld [vmem:[#allocation12 + $0x7c] sm:$0xf]
          %v973 = vld [vmem:[%s8 + $0x2] sm:$0x1]
          %v974 = vlaneseq
          %v975 = vshrl.u32 %v974, 7
          %v976 = vsub.s32 0, %v975
          %v977 = vrot.slane %v973, %v976
          %v1010 = vunpack.c.l.b16 %v941
          %v1011 = vunpack.c.l.b16 %v942
          %v1012 = vunpack.c.l.b16 %v943
          %v1013 = vunpack.c.l.b16 %v944
          %v1014 = vunpack.c.l.b16 %v945
          %v1015 = vunpack.c.l.b16 %v946
          %v1016 = vunpack.c.l.b16 %v947
          %v1017 = vunpack.c.l.b16 %v948
          %v1018 = vunpack.c.l.b16 %v949
          %v1019 = vunpack.c.l.b16 %v950
          %v1020 = vunpack.c.l.b16 %v951
          %v1021 = vunpack.c.l.b16 %v952
          %v1022 = vunpack.c.l.b16 %v953
          %v1023 = vunpack.c.l.b16 %v954
          %v1024 = vunpack.c.l.b16 %v955
          %v1025 = vunpack.c.l.b16 %v956
          %v1026 = vunpack.c.l.b16 %v957
          %v1027 = vunpack.c.l.b16 %v958
          %v1028 = vunpack.c.l.b16 %v959
          %v1029 = vunpack.c.l.b16 %v960
          %v1030 = vunpack.c.l.b16 %v961
          %v1031 = vunpack.c.l.b16 %v962
          %v1032 = vunpack.c.l.b16 %v963
          %v1033 = vunpack.c.l.b16 %v964
          %v1034 = vunpack.c.l.b16 %v965
          %v1035 = vunpack.c.l.b16 %v966
          %v1036 = vunpack.c.l.b16 %v967
          %v1037 = vunpack.c.l.b16 %v968
          %v1038 = vunpack.c.l.b16 %v969
          %v1039 = vunpack.c.l.b16 %v970
          %v1040 = vunpack.c.l.b16 %v971
          %v1041 = vunpack.c.l.b16 %v972
          %v1042 = vpack.c.b16 %v1011, %v1010
          %v1043 = vpack.c.b16 %v1013, %v1012
          %v1044 = vpack.c.b16 %v1015, %v1014
          %v1045 = vpack.c.b16 %v1017, %v1016
          %v1046 = vpack.c.b16 %v1019, %v1018
          %v1047 = vpack.c.b16 %v1021, %v1020
          %v1048 = vpack.c.b16 %v1023, %v1022
          %v1049 = vpack.c.b16 %v1025, %v1024
          %v1050 = vpack.c.b16 %v1027, %v1026
          %v1051 = vpack.c.b16 %v1029, %v1028
          %v1052 = vpack.c.b16 %v1031, %v1030
          %v1053 = vpack.c.b16 %v1033, %v1032
          %v1054 = vpack.c.b16 %v1035, %v1034
          %v1055 = vpack.c.b16 %v1037, %v1036
          %v1056 = vpack.c.b16 %v1039, %v1038
          %v1057 = vpack.c.b16 %v1041, %v1040
          %1074 = vmatprep.subr.bf16.mxu0 0
          %1075 = vmatpush1.bf16.msra.mxu0 %v1049
          %1076 = vmatprep.subr.bf16.mxu0 0
          %1077 = vmatpush1.bf16.msra.mxu0 %v1048
          %1078 = vmatprep.subr.bf16.mxu0 0
          %1079 = vmatpush1.bf16.msra.mxu0 %v1047
          %1080 = vmatprep.subr.bf16.mxu0 0
          %1081 = vmatpush1.bf16.msra.mxu0 %v1046
          %1082 = vmatprep.subr.bf16.mxu0 0
          %1083 = vmatpush1.bf16.msra.mxu0 %v1045
          %1084 = vmatprep.subr.bf16.mxu0 0
          %1085 = vmatpush1.bf16.msra.mxu0 %v1044
          %1086 = vmatprep.subr.bf16.mxu0 0
          %1087 = vmatpush1.bf16.msra.mxu0 %v1043
          %1088 = vmatprep.subr.bf16.mxu0 0
          %1089 = vmatpush1.bf16.msra.mxu0 %v1042
          %1090 = vmatprep.subr.bf16.mxu0 0
          %1091 = vmatpush2.bf16.msra.mxu0 %v1057
          %1092 = vmatprep.subr.bf16.mxu0 0
          %1093 = vmatpush2.bf16.msra.mxu0 %v1056
          %1094 = vmatprep.subr.bf16.mxu0 0
          %1095 = vmatpush2.bf16.msra.mxu0 %v1055
          %1096 = vmatprep.subr.bf16.mxu0 0
          %1097 = vmatpush2.bf16.msra.mxu0 %v1054
          %1098 = vmatprep.subr.bf16.mxu0 0
          %1099 = vmatpush2.bf16.msra.mxu0 %v1053
          %1100 = vmatprep.subr.bf16.mxu0 0
          %1101 = vmatpush2.bf16.msra.mxu0 %v1052
          %1102 = vmatprep.subr.bf16.mxu0 0
          %1103 = vmatpush2.bf16.msra.mxu0 %v1051
          %1104 = vmatprep.subr.bf16.mxu0 0
          %1105 = vmatpush2.bf16.msra.mxu0 %v1050
          %1106 = vmatprep.mubr.bf16.mxu0 %v940
          %1107 = vmatmul.mubr.bf16.gmra.mxu0 %v939
          %v1108 = vpop.f32.mrf.mxu0
          %v1109 = vadd.f32 %v977, %v1108
          %v1110 = vpop.f32.mrf.mxu0
          %v1111 = vpop.f32.mrf.mxu0
          %v1112 = vpop.f32.mrf.mxu0
          %1113 = vdwg.mxu0
          %v1114 = vmax.f32 %v1109, 0.0
          %v1115 = vpack.c.bf16 %v1114, %v1114
          %v1116 = vld [vmem:[#allocation14] sm:$0xf]
          %v1117 = vld [vmem:[#allocation14 + $0x4] sm:$0xf]
          %v1118 = vld [vmem:[#allocation14 + $0x8] sm:$0xf]
          %v1119 = vld [vmem:[#allocation14 + $0xc] sm:$0xf]
          %v1120 = vld [vmem:[#allocation14 + $0x10] sm:$0xf]
          %v1121 = vld [vmem:[#allocation14 + $0x14] sm:$0xf]
          %v1122 = vld [vmem:[#allocation14 + $0x18] sm:$0xf]
          %v1123 = vld [vmem:[#allocation14 + $0x1c] sm:$0xf]
          %v1124 = vld [vmem:[#allocation14 + $0x20] sm:$0xf]
          %v1125 = vld [vmem:[#allocation14 + $0x24] sm:$0xf]
          %v1126 = vld [vmem:[#allocation14 + $0x28] sm:$0xf]
          %v1127 = vld [vmem:[#allocation14 + $0x2c] sm:$0xf]
          %v1128 = vld [vmem:[#allocation14 + $0x30] sm:$0xf]
          %v1129 = vld [vmem:[#allocation14 + $0x34] sm:$0xf]
          %v1130 = vld [vmem:[#allocation14 + $0x38] sm:$0xf]
          %v1131 = vld [vmem:[#allocation14 + $0x3c] sm:$0xf]
          %s1132 = scalar_lea.vmem [#allocation14], 64
          %v1133 = vld [vmem:[%s1132] sm:$0xf]
          %v1134 = vld [vmem:[%s1132 + $0x4] sm:$0xf]
          %v1135 = vld [vmem:[%s1132 + $0x8] sm:$0xf]
          %v1136 = vld [vmem:[%s1132 + $0xc] sm:$0xf]
          %v1137 = vld [vmem:[%s1132 + $0x10] sm:$0xf]
          %v1138 = vld [vmem:[%s1132 + $0x14] sm:$0xf]
          %v1139 = vld [vmem:[%s1132 + $0x18] sm:$0xf]
          %v1140 = vld [vmem:[%s1132 + $0x1c] sm:$0xf]
          %v1141 = vld [vmem:[%s1132 + $0x20] sm:$0xf]
          %v1142 = vld [vmem:[%s1132 + $0x24] sm:$0xf]
          %v1143 = vld [vmem:[%s1132 + $0x28] sm:$0xf]
          %v1144 = vld [vmem:[%s1132 + $0x2c] sm:$0xf]
          %v1145 = vld [vmem:[%s1132 + $0x30] sm:$0xf]
          %v1146 = vld [vmem:[%s1132 + $0x34] sm:$0xf]
          %v1147 = vld [vmem:[%s1132 + $0x38] sm:$0xf]
          %v1148 = vld [vmem:[%s1132 + $0x3c] sm:$0xf]
          %v1165 = vunpack.c.l.b16 %v1133
          %v1166 = vunpack.c.l.b16 %v1134
          %v1167 = vunpack.c.l.b16 %v1135
          %v1168 = vunpack.c.l.b16 %v1136
          %v1169 = vunpack.c.l.b16 %v1137
          %v1170 = vunpack.c.l.b16 %v1138
          %v1171 = vunpack.c.l.b16 %v1139
          %v1172 = vunpack.c.l.b16 %v1140
          %v1173 = vunpack.c.l.b16 %v1141
          %v1174 = vunpack.c.l.b16 %v1142
          %v1175 = vunpack.c.l.b16 %v1143
          %v1176 = vunpack.c.l.b16 %v1144
          %v1177 = vunpack.c.l.b16 %v1145
          %v1178 = vunpack.c.l.b16 %v1146
          %v1179 = vunpack.c.l.b16 %v1147
          %v1180 = vunpack.c.l.b16 %v1148
          %v1181 = vpack.c.b16 %v1166, %v1165
          %v1182 = vpack.c.b16 %v1168, %v1167
          %v1183 = vpack.c.b16 %v1170, %v1169
          %v1184 = vpack.c.b16 %v1172, %v1171
          %v1185 = vpack.c.b16 %v1174, %v1173
          %v1186 = vpack.c.b16 %v1176, %v1175
          %v1187 = vpack.c.b16 %v1178, %v1177
          %v1188 = vpack.c.b16 %v1180, %v1179
          %1197 = vmatprep.subr.bf16.mxu0 0
          %1198 = vmatpush1.bf16.msra.mxu0 %v1188
          %1199 = vmatprep.subr.bf16.mxu0 0
          %1200 = vmatpush1.bf16.msra.mxu0 %v1187
          %1201 = vmatprep.subr.bf16.mxu0 0
          %1202 = vmatpush1.bf16.msra.mxu0 %v1186
          %1203 = vmatprep.subr.bf16.mxu0 0
          %1204 = vmatpush1.bf16.msra.mxu0 %v1185
          %1205 = vmatprep.subr.bf16.mxu0 0
          %1206 = vmatpush1.bf16.msra.mxu0 %v1184
          %1207 = vmatprep.subr.bf16.mxu0 0
          %1208 = vmatpush1.bf16.msra.mxu0 %v1183
          %1209 = vmatprep.subr.bf16.mxu0 0
          %1210 = vmatpush1.bf16.msra.mxu0 %v1182
          %1211 = vmatprep.subr.bf16.mxu0 0
          %1212 = vmatpush1.bf16.msra.mxu0 %v1181
          %1213 = vmatprep.subr.bf16.mxu0 0
          %1214 = vmatpush2.bf16.msra.mxu0 0
          %1215 = vmatprep.subr.bf16.mxu0 0
          %1216 = vmatpush2.bf16.msra.mxu0 0
          %1217 = vmatprep.subr.bf16.mxu0 0
          %1218 = vmatpush2.bf16.msra.mxu0 0
          %1219 = vmatprep.subr.bf16.mxu0 0
          %1220 = vmatpush2.bf16.msra.mxu0 0
          %1221 = vmatprep.subr.bf16.mxu0 0
          %1222 = vmatpush2.bf16.msra.mxu0 0
          %1223 = vmatprep.subr.bf16.mxu0 0
          %1224 = vmatpush2.bf16.msra.mxu0 0
          %1225 = vmatprep.subr.bf16.mxu0 0
          %1226 = vmatpush2.bf16.msra.mxu0 0
          %1227 = vmatprep.subr.bf16.mxu0 0
          %1228 = vmatpush2.bf16.msra.mxu0 0
          %1229 = vmatprep.mubr.bf16.mxu0 0
          %1230 = vmatmul.mubr.bf16.gmra.mxu0 %v936
          %v1231 = vpop.f32.mrf.mxu0
          %v1232 = vadd.f32 0.0, %v1231
          %v1233 = vpop.f32.mrf.mxu0
          %v1234 = vpop.f32.mrf.mxu0
          %v1235 = vpop.f32.mrf.mxu0
          %1236 = vdwg.mxu0
          %v1253 = vunpack.c.l.b16 %v1116
          %v1254 = vunpack.c.l.b16 %v1117
          %v1255 = vunpack.c.l.b16 %v1118
          %v1256 = vunpack.c.l.b16 %v1119
          %v1257 = vunpack.c.l.b16 %v1120
          %v1258 = vunpack.c.l.b16 %v1121
          %v1259 = vunpack.c.l.b16 %v1122
          %v1260 = vunpack.c.l.b16 %v1123
          %v1261 = vunpack.c.l.b16 %v1124
          %v1262 = vunpack.c.l.b16 %v1125
          %v1263 = vunpack.c.l.b16 %v1126
          %v1264 = vunpack.c.l.b16 %v1127
          %v1265 = vunpack.c.l.b16 %v1128
          %v1266 = vunpack.c.l.b16 %v1129
          %v1267 = vunpack.c.l.b16 %v1130
          %v1268 = vunpack.c.l.b16 %v1131
          %v1269 = vpack.c.b16 %v1254, %v1253
          %v1270 = vpack.c.b16 %v1256, %v1255
          %v1271 = vpack.c.b16 %v1258, %v1257
          %v1272 = vpack.c.b16 %v1260, %v1259
          %v1273 = vpack.c.b16 %v1262, %v1261
          %v1274 = vpack.c.b16 %v1264, %v1263
          %v1275 = vpack.c.b16 %v1266, %v1265
          %v1276 = vpack.c.b16 %v1268, %v1267
          %1285 = vmatprep.subr.bf16.mxu0 0
          %1286 = vmatpush1.bf16.msra.mxu0 %v1276
          %1287 = vmatprep.subr.bf16.mxu0 0
          %1288 = vmatpush1.bf16.msra.mxu0 %v1275
          %1289 = vmatprep.subr.bf16.mxu0 0
          %1290 = vmatpush1.bf16.msra.mxu0 %v1274
          %1291 = vmatprep.subr.bf16.mxu0 0
          %1292 = vmatpush1.bf16.msra.mxu0 %v1273
          %1293 = vmatprep.subr.bf16.mxu0 0
          %1294 = vmatpush1.bf16.msra.mxu0 %v1272
          %1295 = vmatprep.subr.bf16.mxu0 0
          %1296 = vmatpush1.bf16.msra.mxu0 %v1271
          %1297 = vmatprep.subr.bf16.mxu0 0
          %1298 = vmatpush1.bf16.msra.mxu0 %v1270
          %1299 = vmatprep.subr.bf16.mxu0 0
          %1300 = vmatpush1.bf16.msra.mxu0 %v1269
          %1301 = vmatprep.subr.bf16.mxu0 0
          %1302 = vmatpush2.bf16.msra.mxu0 0
          %1303 = vmatprep.subr.bf16.mxu0 0
          %1304 = vmatpush2.bf16.msra.mxu0 0
          %1305 = vmatprep.subr.bf16.mxu0 0
          %1306 = vmatpush2.bf16.msra.mxu0 0
          %1307 = vmatprep.subr.bf16.mxu0 0
          %1308 = vmatpush2.bf16.msra.mxu0 0
          %1309 = vmatprep.subr.bf16.mxu0 0
          %1310 = vmatpush2.bf16.msra.mxu0 0
          %1311 = vmatprep.subr.bf16.mxu0 0
          %1312 = vmatpush2.bf16.msra.mxu0 0
          %1313 = vmatprep.subr.bf16.mxu0 0
          %1314 = vmatpush2.bf16.msra.mxu0 0
          %1315 = vmatprep.subr.bf16.mxu0 0
          %1316 = vmatpush2.bf16.msra.mxu0 0
          %1317 = vmatprep.mubr.bf16.mxu0 0
          %1318 = vmatmul.mubr.bf16.gmra.mxu0 %v757
          %v1319 = vpop.f32.mrf.mxu0
          %v1320 = vadd.f32 %v1232, %v1319
          %v1321 = vpop.f32.mrf.mxu0
          %v1322 = vpop.f32.mrf.mxu0
          %v1323 = vpop.f32.mrf.mxu0
          %1324 = vdwg.mxu0
          %s1325 = scalar_lea.vmem [#allocation14], 128
          %v1326 = vld [vmem:[%s1325] sm:$0xf]
          %v1327 = vld [vmem:[%s1325 + $0x4] sm:$0xf]
          %v1328 = vld [vmem:[%s1325 + $0x8] sm:$0xf]
          %v1329 = vld [vmem:[%s1325 + $0xc] sm:$0xf]
          %v1330 = vld [vmem:[%s1325 + $0x10] sm:$0xf]
          %v1331 = vld [vmem:[%s1325 + $0x14] sm:$0xf]
          %v1332 = vld [vmem:[%s1325 + $0x18] sm:$0xf]
          %v1333 = vld [vmem:[%s1325 + $0x1c] sm:$0xf]
          %v1334 = vld [vmem:[%s1325 + $0x20] sm:$0xf]
          %v1335 = vld [vmem:[%s1325 + $0x24] sm:$0xf]
          %v1336 = vld [vmem:[%s1325 + $0x28] sm:$0xf]
          %v1337 = vld [vmem:[%s1325 + $0x2c] sm:$0xf]
          %v1338 = vld [vmem:[%s1325 + $0x30] sm:$0xf]
          %v1339 = vld [vmem:[%s1325 + $0x34] sm:$0xf]
          %v1340 = vld [vmem:[%s1325 + $0x38] sm:$0xf]
          %v1341 = vld [vmem:[%s1325 + $0x3c] sm:$0xf]
          %v1358 = vunpack.c.l.b16 %v1326
          %v1359 = vunpack.c.l.b16 %v1327
          %v1360 = vunpack.c.l.b16 %v1328
          %v1361 = vunpack.c.l.b16 %v1329
          %v1362 = vunpack.c.l.b16 %v1330
          %v1363 = vunpack.c.l.b16 %v1331
          %v1364 = vunpack.c.l.b16 %v1332
          %v1365 = vunpack.c.l.b16 %v1333
          %v1366 = vunpack.c.l.b16 %v1334
          %v1367 = vunpack.c.l.b16 %v1335
          %v1368 = vunpack.c.l.b16 %v1336
          %v1369 = vunpack.c.l.b16 %v1337
          %v1370 = vunpack.c.l.b16 %v1338
          %v1371 = vunpack.c.l.b16 %v1339
          %v1372 = vunpack.c.l.b16 %v1340
          %v1373 = vunpack.c.l.b16 %v1341
          %v1374 = vpack.c.b16 %v1359, %v1358
          %v1375 = vpack.c.b16 %v1361, %v1360
          %v1376 = vpack.c.b16 %v1363, %v1362
          %v1377 = vpack.c.b16 %v1365, %v1364
          %v1378 = vpack.c.b16 %v1367, %v1366
          %v1379 = vpack.c.b16 %v1369, %v1368
          %v1380 = vpack.c.b16 %v1371, %v1370
          %v1381 = vpack.c.b16 %v1373, %v1372
          %1390 = vmatprep.subr.bf16.mxu0 0
          %1391 = vmatpush1.bf16.msra.mxu0 %v1381
          %1392 = vmatprep.subr.bf16.mxu0 0
          %1393 = vmatpush1.bf16.msra.mxu0 %v1380
          %1394 = vmatprep.subr.bf16.mxu0 0
          %1395 = vmatpush1.bf16.msra.mxu0 %v1379
          %1396 = vmatprep.subr.bf16.mxu0 0
          %1397 = vmatpush1.bf16.msra.mxu0 %v1378
          %1398 = vmatprep.subr.bf16.mxu0 0
          %1399 = vmatpush1.bf16.msra.mxu0 %v1377
          %1400 = vmatprep.subr.bf16.mxu0 0
          %1401 = vmatpush1.bf16.msra.mxu0 %v1376
          %1402 = vmatprep.subr.bf16.mxu0 0
          %1403 = vmatpush1.bf16.msra.mxu0 %v1375
          %1404 = vmatprep.subr.bf16.mxu0 0
          %1405 = vmatpush1.bf16.msra.mxu0 %v1374
          %1406 = vmatprep.subr.bf16.mxu0 0
          %1407 = vmatpush2.bf16.msra.mxu0 0
          %1408 = vmatprep.subr.bf16.mxu0 0
          %1409 = vmatpush2.bf16.msra.mxu0 0
          %1410 = vmatprep.subr.bf16.mxu0 0
          %1411 = vmatpush2.bf16.msra.mxu0 0
          %1412 = vmatprep.subr.bf16.mxu0 0
          %1413 = vmatpush2.bf16.msra.mxu0 0
          %1414 = vmatprep.subr.bf16.mxu0 0
          %1415 = vmatpush2.bf16.msra.mxu0 0
          %1416 = vmatprep.subr.bf16.mxu0 0
          %1417 = vmatpush2.bf16.msra.mxu0 0
          %1418 = vmatprep.subr.bf16.mxu0 0
          %1419 = vmatpush2.bf16.msra.mxu0 0
          %1420 = vmatprep.subr.bf16.mxu0 0
          %1421 = vmatpush2.bf16.msra.mxu0 0
          %1422 = vmatprep.mubr.bf16.mxu0 0
          %1423 = vmatmul.mubr.bf16.gmra.mxu0 %v1115
          %v1424 = vpop.f32.mrf.mxu0
          %v1425 = vadd.f32 0.0, %v1424
          %v1426 = vpop.f32.mrf.mxu0
          %v1427 = vpop.f32.mrf.mxu0
          %v1428 = vpop.f32.mrf.mxu0
          %1429 = vdwg.mxu0
          %v1430 = vadd.f32 %v1320, %v1425
          %v1431 = vld [vmem:[%s8 + $0x3] sm:$0x1]
          %v1432 = vlaneseq
          %v1433 = vshrl.u32 %v1432, 7
          %v1434 = vsub.s32 0, %v1433
          %v1435 = vrot.slane %v1431, %v1434
          %v1436 = vadd.f32 %v1430, %v1435
          %1437 = vst [vmem:[#allocation2] sm:$0xff] %v1436
        $region96: #{tpu_custom_call.1} parent=59 // pred_fallthru
          _
        %v1438 = vld [vmem:[#allocation2] sm:$0xff]
        %v1439 = vpack.c.bf16 %v1438, %v1438
        %v1440 = vld [vmem:[%s516] sm:$0xf]
        %v1441 = vld [vmem:[%s516 + $0x4] sm:$0xf]
        %v1442 = vld [vmem:[%s516 + $0x8] sm:$0xf]
        %v1443 = vld [vmem:[%s516 + $0xc] sm:$0xf]
        %v1444 = vld [vmem:[%s516 + $0x10] sm:$0xf]
        %v1445 = vld [vmem:[%s516 + $0x14] sm:$0xf]
        %v1446 = vld [vmem:[%s516 + $0x18] sm:$0xf]
        %v1447 = vld [vmem:[%s516 + $0x1c] sm:$0xf]
        %v1448 = vld [vmem:[%s516 + $0x20] sm:$0xf]
        %v1449 = vld [vmem:[%s516 + $0x24] sm:$0xf]
        %v1450 = vld [vmem:[%s516 + $0x28] sm:$0xf]
        %v1451 = vld [vmem:[%s516 + $0x2c] sm:$0xf]
        %v1452 = vld [vmem:[%s516 + $0x30] sm:$0xf]
        %v1453 = vld [vmem:[%s516 + $0x34] sm:$0xf]
        %v1454 = vld [vmem:[%s516 + $0x38] sm:$0xf]
        %v1455 = vld [vmem:[%s516 + $0x3c] sm:$0xf]
        %v1456 = vld [vmem:[%s573] sm:$0x1]
        %v1458 = vlaneseq
        %v1459 = vshrl.u32 %v1458, 7
        %v1460 = vsub.s32 0, %v1459
        %v1461 = vrot.slane %v1456, %v1460
        %v1479 = vunpack.c.l.b16 %v1440
        %v1480 = vunpack.c.l.b16 %v1441
        %v1481 = vunpack.c.l.b16 %v1442
        %v1482 = vunpack.c.l.b16 %v1443
        %v1483 = vunpack.c.l.b16 %v1444
        %v1484 = vunpack.c.l.b16 %v1445
        %v1485 = vunpack.c.l.b16 %v1446
        %v1486 = vunpack.c.l.b16 %v1447
        %v1487 = vunpack.c.l.b16 %v1448
        %v1488 = vunpack.c.l.b16 %v1449
        %v1489 = vunpack.c.l.b16 %v1450
        %v1490 = vunpack.c.l.b16 %v1451
        %v1491 = vunpack.c.l.b16 %v1452
        %v1492 = vunpack.c.l.b16 %v1453
        %v1493 = vunpack.c.l.b16 %v1454
        %v1494 = vunpack.c.l.b16 %v1455
        %v1495 = vpack.c.b16 %v1480, %v1479
        %v1496 = vpack.c.b16 %v1482, %v1481
        %v1497 = vpack.c.b16 %v1484, %v1483
        %v1498 = vpack.c.b16 %v1486, %v1485
        %v1499 = vpack.c.b16 %v1488, %v1487
        %v1500 = vpack.c.b16 %v1490, %v1489
        %v1501 = vpack.c.b16 %v1492, %v1491
        %v1502 = vpack.c.b16 %v1494, %v1493
        %1511 = vmatprep.subr.bf16.mxu0 0
        %1512 = vmatpush1.bf16.msra.mxu0 %v1502
        %1513 = vmatprep.subr.bf16.mxu0 0
        %1514 = vmatpush1.bf16.msra.mxu0 %v1501
        %1515 = vmatprep.subr.bf16.mxu0 0
        %1516 = vmatpush1.bf16.msra.mxu0 %v1500
        %1517 = vmatprep.subr.bf16.mxu0 0
        %1518 = vmatpush1.bf16.msra.mxu0 %v1499
        %1519 = vmatprep.subr.bf16.mxu0 0
        %1520 = vmatpush1.bf16.msra.mxu0 %v1498
        %1521 = vmatprep.subr.bf16.mxu0 0
        %1522 = vmatpush1.bf16.msra.mxu0 %v1497
        %1523 = vmatprep.subr.bf16.mxu0 0
        %1524 = vmatpush1.bf16.msra.mxu0 %v1496
        %1525 = vmatprep.subr.bf16.mxu0 0
        %1526 = vmatpush1.bf16.msra.mxu0 %v1495
        %1527 = vmatprep.subr.bf16.mxu0 0
        %1528 = vmatpush2.bf16.msra.mxu0 0
        %1529 = vmatprep.subr.bf16.mxu0 0
        %1530 = vmatpush2.bf16.msra.mxu0 0
        %1531 = vmatprep.subr.bf16.mxu0 0
        %1532 = vmatpush2.bf16.msra.mxu0 0
        %1533 = vmatprep.subr.bf16.mxu0 0
        %1534 = vmatpush2.bf16.msra.mxu0 0
        %1535 = vmatprep.subr.bf16.mxu0 0
        %1536 = vmatpush2.bf16.msra.mxu0 0
        %1537 = vmatprep.subr.bf16.mxu0 0
        %1538 = vmatpush2.bf16.msra.mxu0 0
        %1539 = vmatprep.subr.bf16.mxu0 0
        %1540 = vmatpush2.bf16.msra.mxu0 0
        %1541 = vmatprep.subr.bf16.mxu0 0
        %1542 = vmatpush2.bf16.msra.mxu0 0
        %1543 = vmatprep.mubr.bf16.mxu0 0
        %1544 = vmatmul.mubr.bf16.gmra.mxu0 %v1439
        %v1545 = vpop.f32.mrf.mxu0
        %v1546 = vadd.f32 %v1461, %v1545
        %v1547 = vpop.f32.mrf.mxu0
        %v1548 = vpop.f32.mrf.mxu0
        %v1549 = vpop.f32.mrf.mxu0
        %1550 = vdwg.mxu0
        %v1551 = vxor.u32 %v1546, 2147483648
        %v1552 = vmul.f32 %v1551, 1.442695
        %v1553 = vpow.pop %v1552
        %v1554 = vadd.f32 %v1553, 1.0
        %v1555 = vrcp.pop %v1554
        %v1556 = vmul.f32 1.0, %v1555
        %1557 = vst [vmem:[%s570] sm:$0xff] %v1556
        %s1558 = sand.u32 %s292, 1
        %s1559 = scalar_lea.sflag [#allocation5], %s1558
        %s1560 = sand.u32 %s292, 1
        %s1561 = smul.addr %s1560, 8
        %s1562 = scalar_lea.vmem [#allocation17], %s1561
        // Predicated region
        $region97: #{tpu_custom_call.1} parent=59 // pred_check
          %p1563 = pneg %p302
        $region98: #{tpu_custom_call.1} parent=59 // pred_check_branch
          %1565 = sbr.rel (%p1563) target = $region100
        $region99: #{tpu_custom_call.1} parent=59 // pred_region
          %s1567 = ssub.s32 128, 128
          %1568 = vsyncadd %s1559, %s1567
          %s1569 = smul.addr %s39, 5
          %s1570 = sadd.s32 %s40, %s1569
          %s1571 = smul.addr %s1570, 128
          %s1572 = scalar_lea.hbm %s10, %s1571
          %s1574 = sshll.u32 %s1562, 4
          %s1575 = int_to_ptr.vmem [resolvable:$true] %s1574
          %1577 = dma.vmem_to_hbm [thread:$0]  %s1575, 128, %s1572, %s1559
        $region100: #{tpu_custom_call.1} parent=59 // pred_fallthru
          _
      $region60: #{tpu_custom_call.1} parent=5 // pred_fallthru
        _
      %p1578 = scmp.le.s32.totalorder 2, %s30
      // Predicated region
      $region101: #{tpu_custom_call.1} parent=5 // pred_check
        %p1579 = pneg %p1578
      $region102: #{tpu_custom_call.1} parent=5 // pred_check_branch
        %1581 = sbr.rel (%p1579) target = $region104
      $region103: #{tpu_custom_call.1} parent=5 // pred_region
        %s1582 = ssub.s32 %s30, 2
        // Predicated region
        $region105: #{tpu_custom_call.1} parent=103 // pred_check
          %p1583 = pneg %p308
        $region106: #{tpu_custom_call.1} parent=103 // pred_check_branch
          %1585 = sbr.rel (%p1583) target = $region108
        $region107: #{tpu_custom_call.1} parent=103 // pred_region
          %s1586 = sand.u32 %s293, 1
          %s1587 = scalar_lea.sflag [#allocation5], %s1586
          %s1588 = sand.u32 %s293, 1
          %s1589 = smul.addr %s1588, 8
          %s1590 = scalar_lea.vmem [#allocation17], %s1589
          %1591 = dma.done %s1587, 128
        $region108: #{tpu_custom_call.1} parent=103 // pred_fallthru
          _
      $region104: #{tpu_custom_call.1} parent=5 // pred_fallthru
        _
    $region6: #{tpu_custom_call.1} parent=1 // loop_footer
      %s34 = sadd.s32 1, %s30
    $region7: #{tpu_custom_call.1} parent=1 // loop_footer_branch
      %29 = sbr.rel target = $region3
    $region8: #{tpu_custom_call.1} parent=1 // loop_exit
      _
    %1592 = vsyncpa [#allocation4], 1
    %s1593 = scalar_lea.sflag [#allocation4], 1
    %1594 = vsyncpa %s1593, 1
    %1595 = vsyncpa [#allocation7], 1
    %s1596 = scalar_lea.sflag [#allocation7], 1
    %1597 = vsyncpa %s1596, 1
    %1598 = vsyncpa [#allocation10], 1
    %1599 = vsyncpa [#allocation13], 1
    %1600 = vsyncpa [#allocation16], 1
    %s1601 = scalar_lea.sflag [#allocation16], 1
    %1602 = vsyncpa %s1601, 1
    %1603 = vsyncpa [#allocation5], 1
    %s1604 = scalar_lea.sflag [#allocation5], 1
    %1605 = vsyncpa %s1604, 1

// kernel: tpu_custom_call.1
$region0: #{tpu_custom_call.1}
  #allocation0 [shape = 'u32[]', space=smem, size = 0x4, offset = 0x4, fixed_abs, tag = 'smem constant byte address 0x4 - core index']
  #allocation1 [shape = 'u32[144,128]{1,0:T(1,128)}', space=vmem, size = 0x12000, scoped, tag = 'internal scratch']
  #allocation2 [shape = 'f32[8,128]{1,0:T(8,128)}', space=vmem, size = 0x1000, scoped, tag = 'scratch operand']
  %s0 = inlined_call_operand.hbm [shape: f32[16,256], index: 0, kind: input, shape index: {}]
  %s1 = inlined_call_operand.hbm [shape: f32[16,256], index: 1, kind: input, shape index: {}]
  %s2 = inlined_call_operand.hbm [shape: f32[16,256], index: 2, kind: input, shape index: {}]
  %s3 = inlined_call_operand.hbm [shape: bf16[256,128], index: 3, kind: input, shape index: {}]
  %s4 = inlined_call_operand.hbm [shape: bf16[256,128], index: 4, kind: input, shape index: {}]
  %s5 = inlined_call_operand.hbm [shape: bf16[256,128], index: 5, kind: input, shape index: {}]
  %s6 = inlined_call_operand.hbm [shape: bf16[3,128,128], index: 6, kind: input, shape index: {}]
  %s7 = inlined_call_operand.hbm [shape: bf16[128,640], index: 7, kind: input, shape index: {}]
  %s8 = inlined_call_operand.vmem [shape: f32[4,128], index: 8, kind: input, shape index: {}]
  %s9 = inlined_call_operand.vmem [shape: f32[1,640], index: 9, kind: input, shape index: {}]
  %s10 = inlined_call_operand.hbm [shape: f32[16,640], index: 10, kind: output, shape index: {}]
  %s11 = sld [smem:[#allocation0]]
  $region109: #{tpu_custom_call.1} parent=0
    _
  %s13 = ssub.s32 1, %s11
  %s14 = scalar_select 0, %s13, %s11
  $region1: #{tpu_custom_call.1} parent=0
    #allocation3 [shape = 'u8[16384]{0}', space=vmem, size = 0x4000, scoped, tag = 'input window, operand 0']
    #allocation4 [shape = 's32[2]{0}', space=sflag, size = 0x8, scoped, tag = 'scoped memory for tpu_custom_call.1']
    #allocation5 [shape = 's32[2]{0}', space=sflag, size = 0x8, scoped, tag = 'scoped memory for tpu_custom_call.1']
    #allocation6 [shape = 'u8[16384]{0}', space=vmem, size = 0x4000, scoped, tag = 'input window, operand 1']
    #allocation7 [shape = 's32[2]{0}', space=sflag, size = 0x8, scoped, tag = 'scoped memory for tpu_custom_call.1']
    #allocation8 [shape = 'u8[16384]{0}', space=vmem, size = 0x4000, scoped, tag = 'input window, operand 2']
    #allocation9 [shape = 'u8[65536]{0}', space=vmem, size = 0x10000, scoped, tag = 'input window, operand 3, single buffered']
    #allocation10 [shape = 's32[1]{0}', space=sflag, size = 0x4, scoped, tag = 'scoped memory for tpu_custom_call.1']
    #allocation11 [shape = 'u8[65536]{0}', space=vmem, size = 0x10000, scoped, tag = 'input window, operand 4, single buffered']
    #allocation12 [shape = 'u8[65536]{0}', space=vmem, size = 0x10000, scoped, tag = 'input window, operand 5, single buffered']
    #allocation13 [shape = 's32[1]{0}', space=sflag, size = 0x4, scoped, tag = 'scoped memory for tpu_custom_call.1']
    #allocation14 [shape = 'u8[98304]{0}', space=vmem, size = 0x18000, scoped, tag = 'input window, operand 6, single buffered']
    #allocation15 [shape = 'u8[65536]{0}', space=vmem, size = 0x10000, scoped, tag = 'input window, operand 7']
    #allocation16 [shape = 's32[2]{0}', space=sflag, size = 0x8, scoped, tag = 'scoped memory for tpu_custom_call.1']
    #allocation17 [shape = 'u8[8192]{0}', space=vmem, size = 0x2000, scoped, tag = 'output window, operand 0']
    %15 = vsyncpa [#allocation4], 0
    %s16 = scalar_lea.sflag [#allocation4], 1
    %17 = vsyncpa %s16, 0
    %18 = vsyncpa [#allocation7], 0
    %s19 = scalar_lea.sflag [#allocation7], 1
    %20 = vsyncpa %s19, 0
    %21 = vsyncpa [#allocation10], 0
    %22 = vsyncpa [#allocation13], 0
    %23 = vsyncpa [#allocation16], 0
    %s24 = scalar_lea.sflag [#allocation16], 1
    %25 = vsyncpa %s24, 0
    %26 = vsyncpa [#allocation5], 0
    %s27 = scalar_lea.sflag [#allocation5], 1
    %28 = vsyncpa %s27, 0
    loop: start=0, step=1, limit=12
    $region2: #{tpu_custom_call.1} parent=1 // loop_pre_header
      _
    $region3: #{tpu_custom_call.1} parent=1 // loop_header
      %s30 = sphi 0, %s34
      %p31 = scmp.ge.s32.totalorder %s30, 12
      %s37 = sphi 0, %s49
      %s38 = sphi 0, %s45
      %s39 = sphi 0, %s37
      %s40 = sphi 0, %s38
      %s41 = sphi 0, %s39
      %s42 = sphi 0, %s40
      %s52 = sphi 0, %s54
      %s55 = sphi 0, %s52
      %s56 = sphi 0, %s55
      %s72 = sphi 0, %s56
      %s78 = sphi 0, %s80
      %s81 = sphi 0, %s78
      %s82 = sphi 0, %s81
      %s98 = sphi 0, %s82
      %s104 = sphi 0, %s106
      %s107 = sphi 0, %s104
      %s108 = sphi 0, %s107
      %s124 = sphi 0, %s108
      %s128 = sphi 0, %s128
      %s130 = sphi 0, %s128
      %s131 = sphi 0, %s130
      %s145 = sphi 0, %s131
      %s149 = sphi 0, %s149
      %s151 = sphi 0, %s149
      %s152 = sphi 0, %s151
      %s166 = sphi 0, %s152
      %s170 = sphi 0, %s170
      %s172 = sphi 0, %s170
      %s173 = sphi 0, %s172
      %s187 = sphi 0, %s173
      %s191 = sphi 0, %s191
      %s193 = sphi 0, %s191
      %s194 = sphi 0, %s193
      %s208 = sphi 0, %s194
      %s214 = sphi 0, %s216
      %s217 = sphi 0, %s214
      %s218 = sphi 0, %s217
      %s234 = sphi 0, %s218
      %s238 = sphi 0, %s238
      %s240 = sphi 0, %s238
      %s241 = sphi 0, %s240
      %s255 = sphi 0, %s241
      %s261 = sphi 0, %s263
      %s264 = sphi 0, %s261
      %s265 = sphi 0, %s264
      %s281 = sphi 0, %s265
      %s289 = sphi 0, %s291
      %s292 = sphi 0, %s289
      %s293 = sphi 0, %s292
      %s309 = sphi 0, %s293
    $region4: #{tpu_custom_call.1} parent=1 // loop_header_branch
      %33 = sbr.rel (%p31) target = $region8
    $region5: #{tpu_custom_call.1} parent=1 // loop_body
      %s35 = ssub.s32 %s30, 1
      %s36 = ssub.s32 %s30, 2
      %s43 = sadd.s32 1, %s38
      %p44 = scmp.ge.s32.totalorder %s43, 5
      %s45 = scalar_select %p44, 0, %s43
      %s46 = sadd.s32 1, %s37
      %s47 = scalar_select %p44, %s46, %s37
      %p48 = scmp.ge.s32.totalorder %s47, 2
      %s49 = scalar_select %p48, 0, %s47
      %s50 = ssub.s32 %s37, %s49
      %p51 = scmp.eq.s32.totalorder %s50, 0
      %s53 = sadd.s32 %s52, 1
      %s54 = scalar_select %p51, %s52, %s53
      %p57 = pneg %p51
      %p58 = scmp.eq.s32.totalorder %s30, 9
      %p59 = por %p57, %p58
      %p60 = scmp.ne.s32.totalorder %s52, %s55
      %p61 = scmp.eq.s32.totalorder %s30, 0
      %p62 = por %p60, %p61
      %p63 = scmp.ne.s32.totalorder %s52, %s55
      %p64 = scmp.eq.s32.totalorder %s35, 9
      %p65 = por %p63, %p64
      %p66 = scmp.ne.s32.totalorder %s55, %s56
      %p67 = scmp.eq.s32.totalorder %s35, 0
      %p68 = por %p66, %p67
      %p69 = scmp.ne.s32.totalorder %s55, %s56
      %p70 = scmp.eq.s32.totalorder %s36, 9
      %p71 = por %p69, %p70
      %p73 = scmp.ne.s32.totalorder %s56, %s72
      %p74 = scmp.eq.s32.totalorder %s36, 0
      %p75 = por %p73, %p74
      %s76 = ssub.s32 %s37, %s49
      %p77 = scmp.eq.s32.totalorder %s76, 0
      %s79 = sadd.s32 %s78, 1
      %s80 = scalar_select %p77, %s78, %s79
      %p83 = pneg %p77
      %p84 = scmp.eq.s32.totalorder %s30, 9
      %p85 = por %p83, %p84
      %p86 = scmp.ne.s32.totalorder %s78, %s81
      %p87 = scmp.eq.s32.totalorder %s30, 0
      %p88 = por %p86, %p87
      %p89 = scmp.ne.s32.totalorder %s78, %s81
      %p90 = scmp.eq.s32.totalorder %s35, 9
      %p91 = por %p89, %p90
      %p92 = scmp.ne.s32.totalorder %s81, %s82
      %p93 = scmp.eq.s32.totalorder %s35, 0
      %p94 = por %p92, %p93
      %p95 = scmp.ne.s32.totalorder %s81, %s82
      %p96 = scmp.eq.s32.totalorder %s36, 9
      %p97 = por %p95, %p96
      %p99 = scmp.ne.s32.totalorder %s82, %s98
      %p100 = scmp.eq.s32.totalorder %s36, 0
      %p101 = por %p99, %p100
      %s102 = ssub.s32 %s37, %s49
      %p103 = scmp.eq.s32.totalorder %s102, 0
      %s105 = sadd.s32 %s104, 1
      %s106 = scalar_select %p103, %s104, %s105
      %p109 = pneg %p103
      %p110 = scmp.eq.s32.totalorder %s30, 9
      %p111 = por %p109, %p110
      %p112 = scmp.ne.s32.totalorder %s104, %s107
      %p113 = scmp.eq.s32.totalorder %s30, 0
      %p114 = por %p112, %p113
      %p115 = scmp.ne.s32.totalorder %s104, %s107
      %p116 = scmp.eq.s32.totalorder %s35, 9
      %p117 = por %p115, %p116
      %p118 = scmp.ne.s32.totalorder %s107, %s108
      %p119 = scmp.eq.s32.totalorder %s35, 0
      %p120 = por %p118, %p119
      %p121 = scmp.ne.s32.totalorder %s107, %s108
      %p122 = scmp.eq.s32.totalorder %s36, 9
      %p123 = por %p121, %p122
      %p125 = scmp.ne.s32.totalorder %s108, %s124
      %p126 = scmp.eq.s32.totalorder %s36, 0
      %p127 = por %p125, %p126
      %s129 = sadd.s32 %s128, 1
      %p132 = scmp.eq.s32.totalorder %s30, 9
      %p133 = scmp.ne.s32.totalorder %s128, %s130
      %p134 = scmp.eq.s32.totalorder %s30, 0
      %p135 = por %p133, %p134
      %p136 = scmp.ne.s32.totalorder %s128, %s130
      %p137 = scmp.eq.s32.totalorder %s35, 9
      %p138 = por %p136, %p137
      %p139 = scmp.ne.s32.totalorder %s130, %s131
      %p140 = scmp.eq.s32.totalorder %s35, 0
      %p141 = por %p139, %p140
      %p142 = scmp.ne.s32.totalorder %s130, %s131
      %p143 = scmp.eq.s32.totalorder %s36, 9
      %p144 = por %p142, %p143
      %p146 = scmp.ne.s32.totalorder %s131, %s145
      %p147 = scmp.eq.s32.totalorder %s36, 0
      %p148 = por %p146, %p147
      %s150 = sadd.s32 %s149, 1
      %p153 = scmp.eq.s32.totalorder %s30, 9
      %p154 = scmp.ne.s32.totalorder %s149, %s151
      %p155 = scmp.eq.s32.totalorder %s30, 0
      %p156 = por %p154, %p155
      %p157 = scmp.ne.s32.totalorder %s149, %s151
      %p158 = scmp.eq.s32.totalorder %s35, 9
      %p159 = por %p157, %p158
      %p160 = scmp.ne.s32.totalorder %s151, %s152
      %p161 = scmp.eq.s32.totalorder %s35, 0
      %p162 = por %p160, %p161
      %p163 = scmp.ne.s32.totalorder %s151, %s152
      %p164 = scmp.eq.s32.totalorder %s36, 9
      %p165 = por %p163, %p164
      %p167 = scmp.ne.s32.totalorder %s152, %s166
      %p168 = scmp.eq.s32.totalorder %s36, 0
      %p169 = por %p167, %p168
      %s171 = sadd.s32 %s170, 1
      %p174 = scmp.eq.s32.totalorder %s30, 9
      %p175 = scmp.ne.s32.totalorder %s170, %s172
      %p176 = scmp.eq.s32.totalorder %s30, 0
      %p177 = por %p175, %p176
      %p178 = scmp.ne.s32.totalorder %s170, %s172
      %p179 = scmp.eq.s32.totalorder %s35, 9
      %p180 = por %p178, %p179
      %p181 = scmp.ne.s32.totalorder %s172, %s173
      %p182 = scmp.eq.s32.totalorder %s35, 0
      %p183 = por %p181, %p182
      %p184 = scmp.ne.s32.totalorder %s172, %s173
      %p185 = scmp.eq.s32.totalorder %s36, 9
      %p186 = por %p184, %p185
      %p188 = scmp.ne.s32.totalorder %s173, %s187
      %p189 = scmp.eq.s32.totalorder %s36, 0
      %p190 = por %p188, %p189
      %s192 = sadd.s32 %s191, 1
      %p195 = scmp.eq.s32.totalorder %s30, 9
      %p196 = scmp.ne.s32.totalorder %s191, %s193
      %p197 = scmp.eq.s32.totalorder %s30, 0
      %p198 = por %p196, %p197
      %p199 = scmp.ne.s32.totalorder %s191, %s193
      %p200 = scmp.eq.s32.totalorder %s35, 9
      %p201 = por %p199, %p200
      %p202 = scmp.ne.s32.totalorder %s193, %s194
      %p203 = scmp.eq.s32.totalorder %s35, 0
      %p204 = por %p202, %p203
      %p205 = scmp.ne.s32.totalorder %s193, %s194
      %p206 = scmp.eq.s32.totalorder %s36, 9
      %p207 = por %p205, %p206
      %p209 = scmp.ne.s32.totalorder %s194, %s208
      %p210 = scmp.eq.s32.totalorder %s36, 0
      %p211 = por %p209, %p210
      %s212 = ssub.s32 %s38, %s45
      %p213 = scmp.eq.s32.totalorder %s212, 0
      %s215 = sadd.s32 %s214, 1
      %s216 = scalar_select %p213, %s214, %s215
      %p219 = pneg %p213
      %p220 = scmp.eq.s32.totalorder %s30, 9
      %p221 = por %p219, %p220
      %p222 = scmp.ne.s32.totalorder %s214, %s217
      %p223 = scmp.eq.s32.totalorder %s30, 0
      %p224 = por %p222, %p223
      %p225 = scmp.ne.s32.totalorder %s214, %s217
      %p226 = scmp.eq.s32.totalorder %s35, 9
      %p227 = por %p225, %p226
      %p228 = scmp.ne.s32.totalorder %s217, %s218
      %p229 = scmp.eq.s32.totalorder %s35, 0
      %p230 = por %p228, %p229
      %p231 = scmp.ne.s32.totalorder %s217, %s218
      %p232 = scmp.eq.s32.totalorder %s36, 9
      %p233 = por %p231, %p232
      %p235 = scmp.ne.s32.totalorder %s218, %s234
      %p236 = scmp.eq.s32.totalorder %s36, 0
      %p237 = por %p235, %p236
      %s239 = sadd.s32 %s238, 1
      %p242 = scmp.eq.s32.totalorder %s30, 9
      %p243 = scmp.ne.s32.totalorder %s238, %s240
      %p244 = scmp.eq.s32.totalorder %s30, 0
      %p245 = por %p243, %p244
      %p246 = scmp.ne.s32.totalorder %s238, %s240
      %p247 = scmp.eq.s32.totalorder %s35, 9
      %p248 = por %p246, %p247
      %p249 = scmp.ne.s32.totalorder %s240, %s241
      %p250 = scmp.eq.s32.totalorder %s35, 0
      %p251 = por %p249, %p250
      %p252 = scmp.ne.s32.totalorder %s240, %s241
      %p253 = scmp.eq.s32.totalorder %s36, 9
      %p254 = por %p252, %p253
      %p256 = scmp.ne.s32.totalorder %s241, %s255
      %p257 = scmp.eq.s32.totalorder %s36, 0
      %p258 = por %p256, %p257
      %s259 = ssub.s32 %s38, %s45
      %p260 = scmp.eq.s32.totalorder %s259, 0
      %s262 = sadd.s32 %s261, 1
      %s263 = scalar_select %p260, %s261, %s262
      %p266 = pneg %p260
      %p267 = scmp.eq.s32.totalorder %s30, 9
      %p268 = por %p266, %p267
      %p269 = scmp.ne.s32.totalorder %s261, %s264
      %p270 = scmp.eq.s32.totalorder %s30, 0
      %p271 = por %p269, %p270
      %p272 = scmp.ne.s32.totalorder %s261, %s264
      %p273 = scmp.eq.s32.totalorder %s35, 9
      %p274 = por %p272, %p273
      %p275 = scmp.ne.s32.totalorder %s264, %s265
      %p276 = scmp.eq.s32.totalorder %s35, 0
      %p277 = por %p275, %p276
      %p278 = scmp.ne.s32.totalorder %s264, %s265
      %p279 = scmp.eq.s32.totalorder %s36, 9
      %p280 = por %p278, %p279
      %p282 = scmp.ne.s32.totalorder %s265, %s281
      %p283 = scmp.eq.s32.totalorder %s36, 0
      %p284 = por %p282, %p283
      %s285 = ssub.s32 %s37, %s49
      %s286 = ssub.s32 %s38, %s45
      %s287 = sor.u32 %s285, %s286
      %p288 = scmp.eq.s32.totalorder %s287, 0
      %s290 = sadd.s32 %s289, 1
      %s291 = scalar_select %p288, %s289, %s290
      %p294 = pneg %p288
      %p295 = scmp.eq.s32.totalorder %s30, 9
      %p296 = por %p294, %p295
      %p297 = scmp.ne.s32.totalorder %s289, %s292
      %p298 = scmp.eq.s32.totalorder %s30, 0
      %p299 = por %p297, %p298
      %p300 = scmp.ne.s32.totalorder %s289, %s292
      %p301 = scmp.eq.s32.totalorder %s35, 9
      %p302 = por %p300, %p301
      %p303 = scmp.ne.s32.totalorder %s292, %s293
      %p304 = scmp.eq.s32.totalorder %s35, 0
      %p305 = por %p303, %p304
      %p306 = scmp.ne.s32.totalorder %s292, %s293
      %p307 = scmp.eq.s32.totalorder %s36, 9
      %p308 = por %p306, %p307
      %p310 = scmp.ne.s32.totalorder %s293, %s309
      %p311 = scmp.eq.s32.totalorder %s36, 0
      %p312 = por %p310, %p311
      %p313 = scmp.le.s32.totalorder 1, %s30
      %p314 = scmp.lt.s32.totalorder %s30, 11
      %p315 = pnand %p313, %p314
      %p316 = pneg %p315
      // Predicated region
      $region9: #{tpu_custom_call.1} parent=5 // pred_check
        _
      $region10: #{tpu_custom_call.1} parent=5 // pred_check_branch
        %318 = sbr.rel (%p315) target = $region12
      $region11: #{tpu_custom_call.1} parent=5 // pred_region
        %s319 = ssub.s32 %s30, 1
        // Predicated region
        $region13: #{tpu_custom_call.1} parent=11 // pred_check
          %p320 = pneg %p141
        $region14: #{tpu_custom_call.1} parent=11 // pred_check_branch
          %322 = sbr.rel (%p320) target = $region16
        $region15: #{tpu_custom_call.1} parent=11 // pred_region
          %s324 = ssub.s32 2048, 2048
          %325 = vsyncadd [#allocation10], %s324
          %s326 = sshll.u32 [#allocation9], 4
          %s327 = int_to_ptr.vmem [resolvable:$true] %s326
          %332 = dma.hbm_to_vmem [thread:$0]  %s3, 2048, %s327, [#allocation10], 64, 64, 4
        $region16: #{tpu_custom_call.1} parent=11 // pred_fallthru
          _
        // Predicated region
        $region17: #{tpu_custom_call.1} parent=11 // pred_check
          %p333 = pneg %p162
        $region18: #{tpu_custom_call.1} parent=11 // pred_check_branch
          %335 = sbr.rel (%p333) target = $region20
        $region19: #{tpu_custom_call.1} parent=11 // pred_region
          %s337 = ssub.s32 2048, 2048
          %338 = vsyncadd [#allocation10], %s337
          %s339 = sshll.u32 [#allocation11], 4
          %s340 = int_to_ptr.vmem [resolvable:$true] %s339
          %345 = dma.hbm_to_vmem [thread:$0]  %s4, 2048, %s340, [#allocation10], 64, 64, 4
        $region20: #{tpu_custom_call.1} parent=11 // pred_fallthru
          _
        // Predicated region
        $region21: #{tpu_custom_call.1} parent=11 // pred_check
          %p346 = pneg %p183
        $region22: #{tpu_custom_call.1} parent=11 // pred_check_branch
          %348 = sbr.rel (%p346) target = $region24
        $region23: #{tpu_custom_call.1} parent=11 // pred_region
          %s350 = ssub.s32 2048, 2048
          %351 = vsyncadd [#allocation13], %s350
          %s352 = sshll.u32 [#allocation12], 4
          %s353 = int_to_ptr.vmem [resolvable:$true] %s352
          %358 = dma.hbm_to_vmem [thread:$0]  %s5, 2048, %s353, [#allocation13], 64, 64, 4
        $region24: #{tpu_custom_call.1} parent=11 // pred_fallthru
          _
        // Predicated region
        $region25: #{tpu_custom_call.1} parent=11 // pred_check
          %p359 = pneg %p204
        $region26: #{tpu_custom_call.1} parent=11 // pred_check_branch
          %361 = sbr.rel (%p359) target = $region28
        $region27: #{tpu_custom_call.1} parent=11 // pred_region
          %s363 = ssub.s32 3072, 3072
          %364 = vsyncadd [#allocation13], %s363
          %s365 = sshll.u32 [#allocation14], 4
          %s366 = int_to_ptr.vmem [resolvable:$true] %s365
          %371 = dma.hbm_to_vmem [thread:$0]  %s6, 3072, %s366, [#allocation13], 64, 64, 4
        $region28: #{tpu_custom_call.1} parent=11 // pred_fallthru
          _
        // Predicated region
        $region29: #{tpu_custom_call.1} parent=11 // pred_check
          %p372 = pneg %p251
        $region30: #{tpu_custom_call.1} parent=11 // pred_check_branch
          %374 = sbr.rel (%p372) target = $region32
        $region31: #{tpu_custom_call.1} parent=11 // pred_region
          _
        $region32: #{tpu_custom_call.1} parent=11 // pred_fallthru
          _
      $region12: #{tpu_custom_call.1} parent=5 // pred_fallthru
        _
      %p375 = scmp.lt.s32.totalorder %s30, 10
      // Predicated region
      $region33: #{tpu_custom_call.1} parent=5 // pred_check
        %p376 = pneg %p375
      $region34: #{tpu_custom_call.1} parent=5 // pred_check_branch
        %378 = sbr.rel (%p376) target = $region36
      $region35: #{tpu_custom_call.1} parent=5 // pred_region
        // Predicated region
        $region37: #{tpu_custom_call.1} parent=35 // pred_check
          %p379 = pneg %p62
        $region38: #{tpu_custom_call.1} parent=35 // pred_check_branch
          %381 = sbr.rel (%p379) target = $region40
        $region39: #{tpu_custom_call.1} parent=35 // pred_region
          %s382 = sand.u32 %s52, 1
          %s383 = scalar_lea.sflag [#allocation4], %s382
          %s384 = sand.u32 %s52, 1
          %s385 = smul.addr %s384, 16
          %s386 = scalar_lea.vmem [#allocation3], %s385
          %s388 = ssub.s32 256, 256
          %389 = vsyncadd %s383, %s388
          %s390 = smul.addr %s37, 2
          %s391 = smul.addr %s390, 128
          %s392 = scalar_lea.hbm %s0, %s391
          %s394 = sshll.u32 %s386, 4
          %s395 = int_to_ptr.vmem [resolvable:$true] %s394
          %397 = dma.hbm_to_vmem [thread:$0]  %s392, 256, %s395, %s383
        $region40: #{tpu_custom_call.1} parent=35 // pred_fallthru
          _
        // Predicated region
        $region41: #{tpu_custom_call.1} parent=35 // pred_check
          %p398 = pneg %p88
        $region42: #{tpu_custom_call.1} parent=35 // pred_check_branch
          %400 = sbr.rel (%p398) target = $region44
        $region43: #{tpu_custom_call.1} parent=35 // pred_region
          %s401 = sand.u32 %s30, 1
          %s402 = scalar_lea.sflag [#allocation7], %s401
          %s403 = sand.u32 %s78, 1
          %s404 = smul.addr %s403, 16
          %s405 = scalar_lea.vmem [#allocation6], %s404
          %s407 = ssub.s32 256, 256
          %408 = vsyncadd %s402, %s407
          %s409 = smul.addr %s37, 2
          %s410 = smul.addr %s409, 128
          %s411 = scalar_lea.hbm %s1, %s410
          %s413 = sshll.u32 %s405, 4
          %s414 = int_to_ptr.vmem [resolvable:$true] %s413
          %416 = dma.hbm_to_vmem [thread:$0]  %s411, 256, %s414, %s402
        $region44: #{tpu_custom_call.1} parent=35 // pred_fallthru
          _
        // Predicated region
        $region45: #{tpu_custom_call.1} parent=35 // pred_check
          %p417 = pneg %p114
        $region46: #{tpu_custom_call.1} parent=35 // pred_check_branch
          %419 = sbr.rel (%p417) target = $region48
        $region47: #{tpu_custom_call.1} parent=35 // pred_region
          %s420 = sand.u32 %s30, 1
          %s421 = scalar_lea.sflag [#allocation7], %s420
          %s422 = sand.u32 %s104, 1
          %s423 = smul.addr %s422, 16
          %s424 = scalar_lea.vmem [#allocation8], %s423
          %s426 = ssub.s32 256, 256
          %427 = vsyncadd %s421, %s426
          %s428 = smul.addr %s37, 2
          %s429 = smul.addr %s428, 128
          %s430 = scalar_lea.hbm %s2, %s429
          %s432 = sshll.u32 %s424, 4
          %s433 = int_to_ptr.vmem [resolvable:$true] %s432
          %435 = dma.hbm_to_vmem [thread:$0]  %s430, 256, %s433, %s421
        $region48: #{tpu_custom_call.1} parent=35 // pred_fallthru
          _
        // Predicated region
        $region49: #{tpu_custom_call.1} parent=35 // pred_check
          %p436 = pneg %p224
        $region50: #{tpu_custom_call.1} parent=35 // pred_check_branch
          %438 = sbr.rel (%p436) target = $region52
        $region51: #{tpu_custom_call.1} parent=35 // pred_region
          %s439 = sand.u32 %s214, 1
          %s440 = scalar_lea.sflag [#allocation16], %s439
          %s441 = sand.u32 %s214, 1
          %s442 = smul.addr %s441, 64
          %s443 = scalar_lea.vmem [#allocation15], %s442
          %s445 = ssub.s32 1024, 1024
          %446 = vsyncadd %s440, %s445
          %s447 = smul.addr %s38, 64
          %s448 = scalar_lea.hbm %s7, %s447
          %s449 = sshll.u32 %s443, 4
          %s450 = int_to_ptr.vmem [resolvable:$true] %s449
          %455 = dma.hbm_to_vmem [thread:$0]  %s448, 1024, %s450, %s440, 320, 64, 4
        $region52: #{tpu_custom_call.1} parent=35 // pred_fallthru
          _
        // Predicated region
        $region53: #{tpu_custom_call.1} parent=35 // pred_check
          %p456 = pneg %p271
        $region54: #{tpu_custom_call.1} parent=35 // pred_check_branch
          %458 = sbr.rel (%p456) target = $region56
        $region55: #{tpu_custom_call.1} parent=35 // pred_region
          %p459 = scmp.lt.s32.totalorder %s38, 4
          %s460 = scalar_select %p459, %s38, 4
          %s461 = scalar_lea.vmem %s9, %s460
        $region56: #{tpu_custom_call.1} parent=35 // pred_fallthru
          _
      $region36: #{tpu_custom_call.1} parent=5 // pred_fallthru
        _
      %p462 = scmp.le.s32.totalorder 1, %s30
      %p463 = scmp.lt.s32.totalorder %s30, 11
      %p464 = pnand %p462, %p463
      %p465 = pneg %p464
      // Predicated region
      $region57: #{tpu_custom_call.1} parent=5 // pred_check
        _
      $region58: #{tpu_custom_call.1} parent=5 // pred_check_branch
        %467 = sbr.rel (%p464) target = $region60
      $region59: #{tpu_custom_call.1} parent=5 // pred_region
        %s468 = ssub.s32 %s30, 1
        %s469 = sand.u32 %s55, 1
        %s470 = scalar_lea.sflag [#allocation4], %s469
        %s471 = sand.u32 %s55, 1
        %s472 = smul.addr %s471, 16
        %s473 = scalar_lea.vmem [#allocation3], %s472
        // Predicated region
        $region61: #{tpu_custom_call.1} parent=59 // pred_check
          %p474 = pneg %p68
        $region62: #{tpu_custom_call.1} parent=59 // pred_check_branch
          %476 = sbr.rel (%p474) target = $region64
        $region63: #{tpu_custom_call.1} parent=59 // pred_region
          %477 = dma.done %s470, 256
        $region64: #{tpu_custom_call.1} parent=59 // pred_fallthru
          _
        %s478 = sand.u32 %s35, 1
        %s479 = scalar_lea.sflag [#allocation7], %s478
        %s480 = sand.u32 %s81, 1
        %s481 = smul.addr %s480, 16
        %s482 = scalar_lea.vmem [#allocation6], %s481
        // Predicated region
        $region65: #{tpu_custom_call.1} parent=59 // pred_check
          %p483 = pneg %p94
        $region66: #{tpu_custom_call.1} parent=59 // pred_check_branch
          %485 = sbr.rel (%p483) target = $region68
        $region67: #{tpu_custom_call.1} parent=59 // pred_region
          %486 = dma.done %s479, 256
        $region68: #{tpu_custom_call.1} parent=59 // pred_fallthru
          _
        %s487 = sand.u32 %s35, 1
        %s488 = scalar_lea.sflag [#allocation7], %s487
        %s489 = sand.u32 %s107, 1
        %s490 = smul.addr %s489, 16
        %s491 = scalar_lea.vmem [#allocation8], %s490
        // Predicated region
        $region69: #{tpu_custom_call.1} parent=59 // pred_check
          %p492 = pneg %p120
        $region70: #{tpu_custom_call.1} parent=59 // pred_check_branch
          %494 = sbr.rel (%p492) target = $region72
        $region71: #{tpu_custom_call.1} parent=59 // pred_region
          %495 = dma.done %s488, 256
        $region72: #{tpu_custom_call.1} parent=59 // pred_fallthru
          _
        // Predicated region
        $region73: #{tpu_custom_call.1} parent=59 // pred_check
          %p496 = pneg %p141
        $region74: #{tpu_custom_call.1} parent=59 // pred_check_branch
          %498 = sbr.rel (%p496) target = $region76
        $region75: #{tpu_custom_call.1} parent=59 // pred_region
          %499 = dma.done [#allocation10], 2048
        $region76: #{tpu_custom_call.1} parent=59 // pred_fallthru
          _
        // Predicated region
        $region77: #{tpu_custom_call.1} parent=59 // pred_check
          %p500 = pneg %p162
        $region78: #{tpu_custom_call.1} parent=59 // pred_check_branch
          %502 = sbr.rel (%p500) target = $region80
        $region79: #{tpu_custom_call.1} parent=59 // pred_region
          %503 = dma.done [#allocation10], 2048
        $region80: #{tpu_custom_call.1} parent=59 // pred_fallthru
          _
        // Predicated region
        $region81: #{tpu_custom_call.1} parent=59 // pred_check
          %p504 = pneg %p183
        $region82: #{tpu_custom_call.1} parent=59 // pred_check_branch
          %506 = sbr.rel (%p504) target = $region84
        $region83: #{tpu_custom_call.1} parent=59 // pred_region
          %507 = dma.done [#allocation13], 2048
        $region84: #{tpu_custom_call.1} parent=59 // pred_fallthru
          _
        // Predicated region
        $region85: #{tpu_custom_call.1} parent=59 // pred_check
          %p508 = pneg %p204
        $region86: #{tpu_custom_call.1} parent=59 // pred_check_branch
          %510 = sbr.rel (%p508) target = $region88
        $region87: #{tpu_custom_call.1} parent=59 // pred_region
          %511 = dma.done [#allocation13], 3072
        $region88: #{tpu_custom_call.1} parent=59 // pred_fallthru
          _
        %s512 = sand.u32 %s217, 1
        %s513 = scalar_lea.sflag [#allocation16], %s512
        %s514 = sand.u32 %s217, 1
        %s515 = smul.addr %s514, 64
        %s516 = scalar_lea.vmem [#allocation15], %s515
        // Predicated region
        $region89: #{tpu_custom_call.1} parent=59 // pred_check
          %p517 = pneg %p230
        $region90: #{tpu_custom_call.1} parent=59 // pred_check_branch
          %519 = sbr.rel (%p517) target = $region92
        $region91: #{tpu_custom_call.1} parent=59 // pred_region
          %520 = dma.done %s513, 1024
        $region92: #{tpu_custom_call.1} parent=59 // pred_fallthru
          _
        %s521 = sand.u32 %s55, 1
        %s522 = scalar_lea.sflag [#allocation4], %s521
        %s523 = sand.u32 %s55, 1
        %s524 = smul.addr %s523, 16
        %s525 = scalar_lea.vmem [#allocation3], %s524
        %p526 = pneg %p68
        %p527 = pneg %p65
        %s528 = sand.u32 %s35, 1
        %s529 = scalar_lea.sflag [#allocation7], %s528
        %s530 = sand.u32 %s81, 1
        %s531 = smul.addr %s530, 16
        %s532 = scalar_lea.vmem [#allocation6], %s531
        %p533 = pneg %p94
        %p534 = pneg %p91
        %s535 = sand.u32 %s35, 1
        %s536 = scalar_lea.sflag [#allocation7], %s535
        %s537 = sand.u32 %s107, 1
        %s538 = smul.addr %s537, 16
        %s539 = scalar_lea.vmem [#allocation8], %s538
        %p540 = pneg %p120
        %p541 = pneg %p117
        %p542 = pneg %p141
        %p543 = pneg %p138
        %p544 = pneg %p162
        %p545 = pneg %p159
        %p546 = pneg %p183
        %p547 = pneg %p180
        %p548 = pneg %p204
        %p549 = pneg %p201
        %s550 = sand.u32 %s217, 1
        %s551 = scalar_lea.sflag [#allocation16], %s550
        %s552 = sand.u32 %s217, 1
        %s553 = smul.addr %s552, 64
        %s554 = scalar_lea.vmem [#allocation15], %s553
        %p555 = pneg %p230
        %p556 = pneg %p227
        %p557 = pneg %p251
        %p558 = pneg %p248
        %p559 = scmp.lt.s32.totalorder %s40, 4
        %s560 = scalar_select %p559, %s40, 4
        %s561 = scalar_lea.vmem %s9, %s560
        %p562 = pneg %p277
        %p563 = pneg %p274
        %p564 = pneg %p305
        %p565 = pneg %p302
        %s566 = sand.u32 %s292, 1
        %s567 = scalar_lea.sflag [#allocation5], %s566
        %s568 = sand.u32 %s292, 1
        %s569 = smul.addr %s568, 8
        %s570 = scalar_lea.vmem [#allocation17], %s569
        %p571 = scmp.lt.s32.totalorder %s40, 4
        %s572 = scalar_select %p571, %s40, 4
        %s573 = scalar_lea.vmem %s9, %s572
        %p575 = scmp.eq.s32.totalorder %s40, 0
        // Predicated region
        $region93: #{tpu_custom_call.1} parent=59 // pred_check
          %p576 = pneg %p575
        $region94: #{tpu_custom_call.1} parent=59 // pred_check_branch
          %578 = sbr.rel (%p576) target = $region96
        $region95: #{tpu_custom_call.1} parent=59 // pred_region
          %v579 = vld [vmem:[%s473] sm:$0xff]
          %v580 = vld [vmem:[%s473 + $0x8] sm:$0xff]
          %v581 = vpack.c.bf16 %v579, %v579
          %v582 = vpack.c.bf16 %v580, %v580
          %v583 = vld [vmem:[#allocation9] sm:$0xf]
          %v584 = vld [vmem:[#allocation9 + $0x4] sm:$0xf]
          %v585 = vld [vmem:[#allocation9 + $0x8] sm:$0xf]
          %v586 = vld [vmem:[#allocation9 + $0xc] sm:$0xf]
          %v587 = vld [vmem:[#allocation9 + $0x10] sm:$0xf]
          %v588 = vld [vmem:[#allocation9 + $0x14] sm:$0xf]
          %v589 = vld [vmem:[#allocation9 + $0x18] sm:$0xf]
          %v590 = vld [vmem:[#allocation9 + $0x1c] sm:$0xf]
          %v591 = vld [vmem:[#allocation9 + $0x20] sm:$0xf]
          %v592 = vld [vmem:[#allocation9 + $0x24] sm:$0xf]
          %v593 = vld [vmem:[#allocation9 + $0x28] sm:$0xf]
          %v594 = vld [vmem:[#allocation9 + $0x2c] sm:$0xf]
          %v595 = vld [vmem:[#allocation9 + $0x30] sm:$0xf]
          %v596 = vld [vmem:[#allocation9 + $0x34] sm:$0xf]
          %v597 = vld [vmem:[#allocation9 + $0x38] sm:$0xf]
          %v598 = vld [vmem:[#allocation9 + $0x3c] sm:$0xf]
          %v599 = vld [vmem:[#allocation9 + $0x40] sm:$0xf]
          %v600 = vld [vmem:[#allocation9 + $0x44] sm:$0xf]
          %v601 = vld [vmem:[#allocation9 + $0x48] sm:$0xf]
          %v602 = vld [vmem:[#allocation9 + $0x4c] sm:$0xf]
          %v603 = vld [vmem:[#allocation9 + $0x50] sm:$0xf]
          %v604 = vld [vmem:[#allocation9 + $0x54] sm:$0xf]
          %v605 = vld [vmem:[#allocation9 + $0x58] sm:$0xf]
          %v606 = vld [vmem:[#allocation9 + $0x5c] sm:$0xf]
          %v607 = vld [vmem:[#allocation9 + $0x60] sm:$0xf]
          %v608 = vld [vmem:[#allocation9 + $0x64] sm:$0xf]
          %v609 = vld [vmem:[#allocation9 + $0x68] sm:$0xf]
          %v610 = vld [vmem:[#allocation9 + $0x6c] sm:$0xf]
          %v611 = vld [vmem:[#allocation9 + $0x70] sm:$0xf]
          %v612 = vld [vmem:[#allocation9 + $0x74] sm:$0xf]
          %v613 = vld [vmem:[#allocation9 + $0x78] sm:$0xf]
          %v614 = vld [vmem:[#allocation9 + $0x7c] sm:$0xf]
          %v615 = vld [vmem:[%s8] sm:$0x1]
          %v616 = vlaneseq
          %v617 = vshrl.u32 %v616, 7
          %v618 = vsub.s32 0, %v617
          %v619 = vrot.slane %v615, %v618
          %v652 = vunpack.c.l.b16 %v583
          %v653 = vunpack.c.l.b16 %v584
          %v654 = vunpack.c.l.b16 %v585
          %v655 = vunpack.c.l.b16 %v586
          %v656 = vunpack.c.l.b16 %v587
          %v657 = vunpack.c.l.b16 %v588
          %v658 = vunpack.c.l.b16 %v589
          %v659 = vunpack.c.l.b16 %v590
          %v660 = vunpack.c.l.b16 %v591
          %v661 = vunpack.c.l.b16 %v592
          %v662 = vunpack.c.l.b16 %v593
          %v663 = vunpack.c.l.b16 %v594
          %v664 = vunpack.c.l.b16 %v595
          %v665 = vunpack.c.l.b16 %v596
          %v666 = vunpack.c.l.b16 %v597
          %v667 = vunpack.c.l.b16 %v598
          %v668 = vunpack.c.l.b16 %v599
          %v669 = vunpack.c.l.b16 %v600
          %v670 = vunpack.c.l.b16 %v601
          %v671 = vunpack.c.l.b16 %v602
          %v672 = vunpack.c.l.b16 %v603
          %v673 = vunpack.c.l.b16 %v604
          %v674 = vunpack.c.l.b16 %v605
          %v675 = vunpack.c.l.b16 %v606
          %v676 = vunpack.c.l.b16 %v607
          %v677 = vunpack.c.l.b16 %v608
          %v678 = vunpack.c.l.b16 %v609
          %v679 = vunpack.c.l.b16 %v610
          %v680 = vunpack.c.l.b16 %v611
          %v681 = vunpack.c.l.b16 %v612
          %v682 = vunpack.c.l.b16 %v613
          %v683 = vunpack.c.l.b16 %v614
          %v684 = vpack.c.b16 %v653, %v652
          %v685 = vpack.c.b16 %v655, %v654
          %v686 = vpack.c.b16 %v657, %v656
          %v687 = vpack.c.b16 %v659, %v658
          %v688 = vpack.c.b16 %v661, %v660
          %v689 = vpack.c.b16 %v663, %v662
          %v690 = vpack.c.b16 %v665, %v664
          %v691 = vpack.c.b16 %v667, %v666
          %v692 = vpack.c.b16 %v669, %v668
          %v693 = vpack.c.b16 %v671, %v670
          %v694 = vpack.c.b16 %v673, %v672
          %v695 = vpack.c.b16 %v675, %v674
          %v696 = vpack.c.b16 %v677, %v676
          %v697 = vpack.c.b16 %v679, %v678
          %v698 = vpack.c.b16 %v681, %v680
          %v699 = vpack.c.b16 %v683, %v682
          %716 = vmatprep.subr.bf16.mxu0 0
          %717 = vmatpush1.bf16.msra.mxu0 %v691
          %718 = vmatprep.subr.bf16.mxu0 0
          %719 = vmatpush1.bf16.msra.mxu0 %v690
          %720 = vmatprep.subr.bf16.mxu0 0
          %721 = vmatpush1.bf16.msra.mxu0 %v689
          %722 = vmatprep.subr.bf16.mxu0 0
          %723 = vmatpush1.bf16.msra.mxu0 %v688
          %724 = vmatprep.subr.bf16.mxu0 0
          %725 = vmatpush1.bf16.msra.mxu0 %v687
          %726 = vmatprep.subr.bf16.mxu0 0
          %727 = vmatpush1.bf16.msra.mxu0 %v686
          %728 = vmatprep.subr.bf16.mxu0 0
          %729 = vmatpush1.bf16.msra.mxu0 %v685
          %730 = vmatprep.subr.bf16.mxu0 0
          %731 = vmatpush1.bf16.msra.mxu0 %v684
          %732 = vmatprep.subr.bf16.mxu0 0
          %733 = vmatpush2.bf16.msra.mxu0 %v699
          %734 = vmatprep.subr.bf16.mxu0 0
          %735 = vmatpush2.bf16.msra.mxu0 %v698
          %736 = vmatprep.subr.bf16.mxu0 0
          %737 = vmatpush2.bf16.msra.mxu0 %v697
          %738 = vmatprep.subr.bf16.mxu0 0
          %739 = vmatpush2.bf16.msra.mxu0 %v696
          %740 = vmatprep.subr.bf16.mxu0 0
          %741 = vmatpush2.bf16.msra.mxu0 %v695
          %742 = vmatprep.subr.bf16.mxu0 0
          %743 = vmatpush2.bf16.msra.mxu0 %v694
          %744 = vmatprep.subr.bf16.mxu0 0
          %745 = vmatpush2.bf16.msra.mxu0 %v693
          %746 = vmatprep.subr.bf16.mxu0 0
          %747 = vmatpush2.bf16.msra.mxu0 %v692
          %748 = vmatprep.mubr.bf16.mxu0 %v582
          %749 = vmatmul.mubr.bf16.gmra.mxu0 %v581
          %v750 = vpop.f32.mrf.mxu0
          %v751 = vadd.f32 %v619, %v750
          %v752 = vpop.f32.mrf.mxu0
          %v753 = vpop.f32.mrf.mxu0
          %v754 = vpop.f32.mrf.mxu0
          %755 = vdwg.mxu0
          %v756 = vmax.f32 %v751, 0.0
          %v757 = vpack.c.bf16 %v756, %v756
          %v758 = vld [vmem:[%s482] sm:$0xff]
          %v759 = vld [vmem:[%s482 + $0x8] sm:$0xff]
          %v760 = vpack.c.bf16 %v758, %v758
          %v761 = vpack.c.bf16 %v759, %v759
          %v762 = vld [vmem:[#allocation11] sm:$0xf]
          %v763 = vld [vmem:[#allocation11 + $0x4] sm:$0xf]
          %v764 = vld [vmem:[#allocation11 + $0x8] sm:$0xf]
          %v765 = vld [vmem:[#allocation11 + $0xc] sm:$0xf]
          %v766 = vld [vmem:[#allocation11 + $0x10] sm:$0xf]
          %v767 = vld [vmem:[#allocation11 + $0x14] sm:$0xf]
          %v768 = vld [vmem:[#allocation11 + $0x18] sm:$0xf]
          %v769 = vld [vmem:[#allocation11 + $0x1c] sm:$0xf]
          %v770 = vld [vmem:[#allocation11 + $0x20] sm:$0xf]
          %v771 = vld [vmem:[#allocation11 + $0x24] sm:$0xf]
          %v772 = vld [vmem:[#allocation11 + $0x28] sm:$0xf]
          %v773 = vld [vmem:[#allocation11 + $0x2c] sm:$0xf]
          %v774 = vld [vmem:[#allocation11 + $0x30] sm:$0xf]
          %v775 = vld [vmem:[#allocation11 + $0x34] sm:$0xf]
          %v776 = vld [vmem:[#allocation11 + $0x38] sm:$0xf]
          %v777 = vld [vmem:[#allocation11 + $0x3c] sm:$0xf]
          %v778 = vld [vmem:[#allocation11 + $0x40] sm:$0xf]
          %v779 = vld [vmem:[#allocation11 + $0x44] sm:$0xf]
          %v780 = vld [vmem:[#allocation11 + $0x48] sm:$0xf]
          %v781 = vld [vmem:[#allocation11 + $0x4c] sm:$0xf]
          %v782 = vld [vmem:[#allocation11 + $0x50] sm:$0xf]
          %v783 = vld [vmem:[#allocation11 + $0x54] sm:$0xf]
          %v784 = vld [vmem:[#allocation11 + $0x58] sm:$0xf]
          %v785 = vld [vmem:[#allocation11 + $0x5c] sm:$0xf]
          %v786 = vld [vmem:[#allocation11 + $0x60] sm:$0xf]
          %v787 = vld [vmem:[#allocation11 + $0x64] sm:$0xf]
          %v788 = vld [vmem:[#allocation11 + $0x68] sm:$0xf]
          %v789 = vld [vmem:[#allocation11 + $0x6c] sm:$0xf]
          %v790 = vld [vmem:[#allocation11 + $0x70] sm:$0xf]
          %v791 = vld [vmem:[#allocation11 + $0x74] sm:$0xf]
          %v792 = vld [vmem:[#allocation11 + $0x78] sm:$0xf]
          %v793 = vld [vmem:[#allocation11 + $0x7c] sm:$0xf]
          %v794 = vld [vmem:[%s8 + $0x1] sm:$0x1]
          %v795 = vlaneseq
          %v796 = vshrl.u32 %v795, 7
          %v797 = vsub.s32 0, %v796
          %v798 = vrot.slane %v794, %v797
          %v831 = vunpack.c.l.b16 %v762
          %v832 = vunpack.c.l.b16 %v763
          %v833 = vunpack.c.l.b16 %v764
          %v834 = vunpack.c.l.b16 %v765
          %v835 = vunpack.c.l.b16 %v766
          %v836 = vunpack.c.l.b16 %v767
          %v837 = vunpack.c.l.b16 %v768
          %v838 = vunpack.c.l.b16 %v769
          %v839 = vunpack.c.l.b16 %v770
          %v840 = vunpack.c.l.b16 %v771
          %v841 = vunpack.c.l.b16 %v772
          %v842 = vunpack.c.l.b16 %v773
          %v843 = vunpack.c.l.b16 %v774
          %v844 = vunpack.c.l.b16 %v775
          %v845 = vunpack.c.l.b16 %v776
          %v846 = vunpack.c.l.b16 %v777
          %v847 = vunpack.c.l.b16 %v778
          %v848 = vunpack.c.l.b16 %v779
          %v849 = vunpack.c.l.b16 %v780
          %v850 = vunpack.c.l.b16 %v781
          %v851 = vunpack.c.l.b16 %v782
          %v852 = vunpack.c.l.b16 %v783
          %v853 = vunpack.c.l.b16 %v784
          %v854 = vunpack.c.l.b16 %v785
          %v855 = vunpack.c.l.b16 %v786
          %v856 = vunpack.c.l.b16 %v787
          %v857 = vunpack.c.l.b16 %v788
          %v858 = vunpack.c.l.b16 %v789
          %v859 = vunpack.c.l.b16 %v790
          %v860 = vunpack.c.l.b16 %v791
          %v861 = vunpack.c.l.b16 %v792
          %v862 = vunpack.c.l.b16 %v793
          %v863 = vpack.c.b16 %v832, %v831
          %v864 = vpack.c.b16 %v834, %v833
          %v865 = vpack.c.b16 %v836, %v835
          %v866 = vpack.c.b16 %v838, %v837
          %v867 = vpack.c.b16 %v840, %v839
          %v868 = vpack.c.b16 %v842, %v841
          %v869 = vpack.c.b16 %v844, %v843
          %v870 = vpack.c.b16 %v846, %v845
          %v871 = vpack.c.b16 %v848, %v847
          %v872 = vpack.c.b16 %v850, %v849
          %v873 = vpack.c.b16 %v852, %v851
          %v874 = vpack.c.b16 %v854, %v853
          %v875 = vpack.c.b16 %v856, %v855
          %v876 = vpack.c.b16 %v858, %v857
          %v877 = vpack.c.b16 %v860, %v859
          %v878 = vpack.c.b16 %v862, %v861
          %895 = vmatprep.subr.bf16.mxu0 0
          %896 = vmatpush1.bf16.msra.mxu0 %v870
          %897 = vmatprep.subr.bf16.mxu0 0
          %898 = vmatpush1.bf16.msra.mxu0 %v869
          %899 = vmatprep.subr.bf16.mxu0 0
          %900 = vmatpush1.bf16.msra.mxu0 %v868
          %901 = vmatprep.subr.bf16.mxu0 0
          %902 = vmatpush1.bf16.msra.mxu0 %v867
          %903 = vmatprep.subr.bf16.mxu0 0
          %904 = vmatpush1.bf16.msra.mxu0 %v866
          %905 = vmatprep.subr.bf16.mxu0 0
          %906 = vmatpush1.bf16.msra.mxu0 %v865
          %907 = vmatprep.subr.bf16.mxu0 0
          %908 = vmatpush1.bf16.msra.mxu0 %v864
          %909 = vmatprep.subr.bf16.mxu0 0
          %910 = vmatpush1.bf16.msra.mxu0 %v863
          %911 = vmatprep.subr.bf16.mxu0 0
          %912 = vmatpush2.bf16.msra.mxu0 %v878
          %913 = vmatprep.subr.bf16.mxu0 0
          %914 = vmatpush2.bf16.msra.mxu0 %v877
          %915 = vmatprep.subr.bf16.mxu0 0
          %916 = vmatpush2.bf16.msra.mxu0 %v876
          %917 = vmatprep.subr.bf16.mxu0 0
          %918 = vmatpush2.bf16.msra.mxu0 %v875
          %919 = vmatprep.subr.bf16.mxu0 0
          %920 = vmatpush2.bf16.msra.mxu0 %v874
          %921 = vmatprep.subr.bf16.mxu0 0
          %922 = vmatpush2.bf16.msra.mxu0 %v873
          %923 = vmatprep.subr.bf16.mxu0 0
          %924 = vmatpush2.bf16.msra.mxu0 %v872
          %925 = vmatprep.subr.bf16.mxu0 0
          %926 = vmatpush2.bf16.msra.mxu0 %v871
          %927 = vmatprep.mubr.bf16.mxu0 %v761
          %928 = vmatmul.mubr.bf16.gmra.mxu0 %v760
          %v929 = vpop.f32.mrf.mxu0
          %v930 = vadd.f32 %v798, %v929
          %v931 = vpop.f32.mrf.mxu0
          %v932 = vpop.f32.mrf.mxu0
          %v933 = vpop.f32.mrf.mxu0
          %934 = vdwg.mxu0
          %v935 = vmax.f32 %v930, 0.0
          %v936 = vpack.c.bf16 %v935, %v935
          %v937 = vld [vmem:[%s491] sm:$0xff]
          %v938 = vld [vmem:[%s491 + $0x8] sm:$0xff]
          %v939 = vpack.c.bf16 %v937, %v937
          %v940 = vpack.c.bf16 %v938, %v938
          %v941 = vld [vmem:[#allocation12] sm:$0xf]
          %v942 = vld [vmem:[#allocation12 + $0x4] sm:$0xf]
          %v943 = vld [vmem:[#allocation12 + $0x8] sm:$0xf]
          %v944 = vld [vmem:[#allocation12 + $0xc] sm:$0xf]
          %v945 = vld [vmem:[#allocation12 + $0x10] sm:$0xf]
          %v946 = vld [vmem:[#allocation12 + $0x14] sm:$0xf]
          %v947 = vld [vmem:[#allocation12 + $0x18] sm:$0xf]
          %v948 = vld [vmem:[#allocation12 + $0x1c] sm:$0xf]
          %v949 = vld [vmem:[#allocation12 + $0x20] sm:$0xf]
          %v950 = vld [vmem:[#allocation12 + $0x24] sm:$0xf]
          %v951 = vld [vmem:[#allocation12 + $0x28] sm:$0xf]
          %v952 = vld [vmem:[#allocation12 + $0x2c] sm:$0xf]
          %v953 = vld [vmem:[#allocation12 + $0x30] sm:$0xf]
          %v954 = vld [vmem:[#allocation12 + $0x34] sm:$0xf]
          %v955 = vld [vmem:[#allocation12 + $0x38] sm:$0xf]
          %v956 = vld [vmem:[#allocation12 + $0x3c] sm:$0xf]
          %v957 = vld [vmem:[#allocation12 + $0x40] sm:$0xf]
          %v958 = vld [vmem:[#allocation12 + $0x44] sm:$0xf]
          %v959 = vld [vmem:[#allocation12 + $0x48] sm:$0xf]
          %v960 = vld [vmem:[#allocation12 + $0x4c] sm:$0xf]
          %v961 = vld [vmem:[#allocation12 + $0x50] sm:$0xf]
          %v962 = vld [vmem:[#allocation12 + $0x54] sm:$0xf]
          %v963 = vld [vmem:[#allocation12 + $0x58] sm:$0xf]
          %v964 = vld [vmem:[#allocation12 + $0x5c] sm:$0xf]
          %v965 = vld [vmem:[#allocation12 + $0x60] sm:$0xf]
          %v966 = vld [vmem:[#allocation12 + $0x64] sm:$0xf]
          %v967 = vld [vmem:[#allocation12 + $0x68] sm:$0xf]
          %v968 = vld [vmem:[#allocation12 + $0x6c] sm:$0xf]
          %v969 = vld [vmem:[#allocation12 + $0x70] sm:$0xf]
          %v970 = vld [vmem:[#allocation12 + $0x74] sm:$0xf]
          %v971 = vld [vmem:[#allocation12 + $0x78] sm:$0xf]
          %v972 = vld [vmem:[#allocation12 + $0x7c] sm:$0xf]
          %v973 = vld [vmem:[%s8 + $0x2] sm:$0x1]
          %v974 = vlaneseq
          %v975 = vshrl.u32 %v974, 7
          %v976 = vsub.s32 0, %v975
          %v977 = vrot.slane %v973, %v976
          %v1010 = vunpack.c.l.b16 %v941
          %v1011 = vunpack.c.l.b16 %v942
          %v1012 = vunpack.c.l.b16 %v943
          %v1013 = vunpack.c.l.b16 %v944
          %v1014 = vunpack.c.l.b16 %v945
          %v1015 = vunpack.c.l.b16 %v946
          %v1016 = vunpack.c.l.b16 %v947
          %v1017 = vunpack.c.l.b16 %v948
          %v1018 = vunpack.c.l.b16 %v949
          %v1019 = vunpack.c.l.b16 %v950
          %v1020 = vunpack.c.l.b16 %v951
          %v1021 = vunpack.c.l.b16 %v952
          %v1022 = vunpack.c.l.b16 %v953
          %v1023 = vunpack.c.l.b16 %v954
          %v1024 = vunpack.c.l.b16 %v955
          %v1025 = vunpack.c.l.b16 %v956
          %v1026 = vunpack.c.l.b16 %v957
          %v1027 = vunpack.c.l.b16 %v958
          %v1028 = vunpack.c.l.b16 %v959
          %v1029 = vunpack.c.l.b16 %v960
          %v1030 = vunpack.c.l.b16 %v961
          %v1031 = vunpack.c.l.b16 %v962
          %v1032 = vunpack.c.l.b16 %v963
          %v1033 = vunpack.c.l.b16 %v964
          %v1034 = vunpack.c.l.b16 %v965
          %v1035 = vunpack.c.l.b16 %v966
          %v1036 = vunpack.c.l.b16 %v967
          %v1037 = vunpack.c.l.b16 %v968
          %v1038 = vunpack.c.l.b16 %v969
          %v1039 = vunpack.c.l.b16 %v970
          %v1040 = vunpack.c.l.b16 %v971
          %v1041 = vunpack.c.l.b16 %v972
          %v1042 = vpack.c.b16 %v1011, %v1010
          %v1043 = vpack.c.b16 %v1013, %v1012
          %v1044 = vpack.c.b16 %v1015, %v1014
          %v1045 = vpack.c.b16 %v1017, %v1016
          %v1046 = vpack.c.b16 %v1019, %v1018
          %v1047 = vpack.c.b16 %v1021, %v1020
          %v1048 = vpack.c.b16 %v1023, %v1022
          %v1049 = vpack.c.b16 %v1025, %v1024
          %v1050 = vpack.c.b16 %v1027, %v1026
          %v1051 = vpack.c.b16 %v1029, %v1028
          %v1052 = vpack.c.b16 %v1031, %v1030
          %v1053 = vpack.c.b16 %v1033, %v1032
          %v1054 = vpack.c.b16 %v1035, %v1034
          %v1055 = vpack.c.b16 %v1037, %v1036
          %v1056 = vpack.c.b16 %v1039, %v1038
          %v1057 = vpack.c.b16 %v1041, %v1040
          %1074 = vmatprep.subr.bf16.mxu0 0
          %1075 = vmatpush1.bf16.msra.mxu0 %v1049
          %1076 = vmatprep.subr.bf16.mxu0 0
          %1077 = vmatpush1.bf16.msra.mxu0 %v1048
          %1078 = vmatprep.subr.bf16.mxu0 0
          %1079 = vmatpush1.bf16.msra.mxu0 %v1047
          %1080 = vmatprep.subr.bf16.mxu0 0
          %1081 = vmatpush1.bf16.msra.mxu0 %v1046
          %1082 = vmatprep.subr.bf16.mxu0 0
          %1083 = vmatpush1.bf16.msra.mxu0 %v1045
          %1084 = vmatprep.subr.bf16.mxu0 0
          %1085 = vmatpush1.bf16.msra.mxu0 %v1044
          %1086 = vmatprep.subr.bf16.mxu0 0
          %1087 = vmatpush1.bf16.msra.mxu0 %v1043
          %1088 = vmatprep.subr.bf16.mxu0 0
          %1089 = vmatpush1.bf16.msra.mxu0 %v1042
          %1090 = vmatprep.subr.bf16.mxu0 0
          %1091 = vmatpush2.bf16.msra.mxu0 %v1057
          %1092 = vmatprep.subr.bf16.mxu0 0
          %1093 = vmatpush2.bf16.msra.mxu0 %v1056
          %1094 = vmatprep.subr.bf16.mxu0 0
          %1095 = vmatpush2.bf16.msra.mxu0 %v1055
          %1096 = vmatprep.subr.bf16.mxu0 0
          %1097 = vmatpush2.bf16.msra.mxu0 %v1054
          %1098 = vmatprep.subr.bf16.mxu0 0
          %1099 = vmatpush2.bf16.msra.mxu0 %v1053
          %1100 = vmatprep.subr.bf16.mxu0 0
          %1101 = vmatpush2.bf16.msra.mxu0 %v1052
          %1102 = vmatprep.subr.bf16.mxu0 0
          %1103 = vmatpush2.bf16.msra.mxu0 %v1051
          %1104 = vmatprep.subr.bf16.mxu0 0
          %1105 = vmatpush2.bf16.msra.mxu0 %v1050
          %1106 = vmatprep.mubr.bf16.mxu0 %v940
          %1107 = vmatmul.mubr.bf16.gmra.mxu0 %v939
          %v1108 = vpop.f32.mrf.mxu0
          %v1109 = vadd.f32 %v977, %v1108
          %v1110 = vpop.f32.mrf.mxu0
          %v1111 = vpop.f32.mrf.mxu0
          %v1112 = vpop.f32.mrf.mxu0
          %1113 = vdwg.mxu0
          %v1114 = vmax.f32 %v1109, 0.0
          %v1115 = vpack.c.bf16 %v1114, %v1114
          %v1116 = vld [vmem:[#allocation14] sm:$0xf]
          %v1117 = vld [vmem:[#allocation14 + $0x4] sm:$0xf]
          %v1118 = vld [vmem:[#allocation14 + $0x8] sm:$0xf]
          %v1119 = vld [vmem:[#allocation14 + $0xc] sm:$0xf]
          %v1120 = vld [vmem:[#allocation14 + $0x10] sm:$0xf]
          %v1121 = vld [vmem:[#allocation14 + $0x14] sm:$0xf]
          %v1122 = vld [vmem:[#allocation14 + $0x18] sm:$0xf]
          %v1123 = vld [vmem:[#allocation14 + $0x1c] sm:$0xf]
          %v1124 = vld [vmem:[#allocation14 + $0x20] sm:$0xf]
          %v1125 = vld [vmem:[#allocation14 + $0x24] sm:$0xf]
          %v1126 = vld [vmem:[#allocation14 + $0x28] sm:$0xf]
          %v1127 = vld [vmem:[#allocation14 + $0x2c] sm:$0xf]
          %v1128 = vld [vmem:[#allocation14 + $0x30] sm:$0xf]
          %v1129 = vld [vmem:[#allocation14 + $0x34] sm:$0xf]
          %v1130 = vld [vmem:[#allocation14 + $0x38] sm:$0xf]
          %v1131 = vld [vmem:[#allocation14 + $0x3c] sm:$0xf]
          %s1132 = scalar_lea.vmem [#allocation14], 64
          %v1133 = vld [vmem:[%s1132] sm:$0xf]
          %v1134 = vld [vmem:[%s1132 + $0x4] sm:$0xf]
          %v1135 = vld [vmem:[%s1132 + $0x8] sm:$0xf]
          %v1136 = vld [vmem:[%s1132 + $0xc] sm:$0xf]
          %v1137 = vld [vmem:[%s1132 + $0x10] sm:$0xf]
          %v1138 = vld [vmem:[%s1132 + $0x14] sm:$0xf]
          %v1139 = vld [vmem:[%s1132 + $0x18] sm:$0xf]
          %v1140 = vld [vmem:[%s1132 + $0x1c] sm:$0xf]
          %v1141 = vld [vmem:[%s1132 + $0x20] sm:$0xf]
          %v1142 = vld [vmem:[%s1132 + $0x24] sm:$0xf]
          %v1143 = vld [vmem:[%s1132 + $0x28] sm:$0xf]
          %v1144 = vld [vmem:[%s1132 + $0x2c] sm:$0xf]
          %v1145 = vld [vmem:[%s1132 + $0x30] sm:$0xf]
          %v1146 = vld [vmem:[%s1132 + $0x34] sm:$0xf]
          %v1147 = vld [vmem:[%s1132 + $0x38] sm:$0xf]
          %v1148 = vld [vmem:[%s1132 + $0x3c] sm:$0xf]
          %v1165 = vunpack.c.l.b16 %v1133
          %v1166 = vunpack.c.l.b16 %v1134
          %v1167 = vunpack.c.l.b16 %v1135
          %v1168 = vunpack.c.l.b16 %v1136
          %v1169 = vunpack.c.l.b16 %v1137
          %v1170 = vunpack.c.l.b16 %v1138
          %v1171 = vunpack.c.l.b16 %v1139
          %v1172 = vunpack.c.l.b16 %v1140
          %v1173 = vunpack.c.l.b16 %v1141
          %v1174 = vunpack.c.l.b16 %v1142
          %v1175 = vunpack.c.l.b16 %v1143
          %v1176 = vunpack.c.l.b16 %v1144
          %v1177 = vunpack.c.l.b16 %v1145
          %v1178 = vunpack.c.l.b16 %v1146
          %v1179 = vunpack.c.l.b16 %v1147
          %v1180 = vunpack.c.l.b16 %v1148
          %v1181 = vpack.c.b16 %v1166, %v1165
          %v1182 = vpack.c.b16 %v1168, %v1167
          %v1183 = vpack.c.b16 %v1170, %v1169
          %v1184 = vpack.c.b16 %v1172, %v1171
          %v1185 = vpack.c.b16 %v1174, %v1173
          %v1186 = vpack.c.b16 %v1176, %v1175
          %v1187 = vpack.c.b16 %v1178, %v1177
          %v1188 = vpack.c.b16 %v1180, %v1179
          %1197 = vmatprep.subr.bf16.mxu0 0
          %1198 = vmatpush1.bf16.msra.mxu0 %v1188
          %1199 = vmatprep.subr.bf16.mxu0 0
          %1200 = vmatpush1.bf16.msra.mxu0 %v1187
          %1201 = vmatprep.subr.bf16.mxu0 0
          %1202 = vmatpush1.bf16.msra.mxu0 %v1186
          %1203 = vmatprep.subr.bf16.mxu0 0
          %1204 = vmatpush1.bf16.msra.mxu0 %v1185
          %1205 = vmatprep.subr.bf16.mxu0 0
          %1206 = vmatpush1.bf16.msra.mxu0 %v1184
          %1207 = vmatprep.subr.bf16.mxu0 0
          %1208 = vmatpush1.bf16.msra.mxu0 %v1183
          %1209 = vmatprep.subr.bf16.mxu0 0
          %1210 = vmatpush1.bf16.msra.mxu0 %v1182
          %1211 = vmatprep.subr.bf16.mxu0 0
          %1212 = vmatpush1.bf16.msra.mxu0 %v1181
          %1213 = vmatprep.subr.bf16.mxu0 0
          %1214 = vmatpush2.bf16.msra.mxu0 0
          %1215 = vmatprep.subr.bf16.mxu0 0
          %1216 = vmatpush2.bf16.msra.mxu0 0
          %1217 = vmatprep.subr.bf16.mxu0 0
          %1218 = vmatpush2.bf16.msra.mxu0 0
          %1219 = vmatprep.subr.bf16.mxu0 0
          %1220 = vmatpush2.bf16.msra.mxu0 0
          %1221 = vmatprep.subr.bf16.mxu0 0
          %1222 = vmatpush2.bf16.msra.mxu0 0
          %1223 = vmatprep.subr.bf16.mxu0 0
          %1224 = vmatpush2.bf16.msra.mxu0 0
          %1225 = vmatprep.subr.bf16.mxu0 0
          %1226 = vmatpush2.bf16.msra.mxu0 0
          %1227 = vmatprep.subr.bf16.mxu0 0
          %1228 = vmatpush2.bf16.msra.mxu0 0
          %1229 = vmatprep.mubr.bf16.mxu0 0
          %1230 = vmatmul.mubr.bf16.gmra.mxu0 %v936
          %v1231 = vpop.f32.mrf.mxu0
          %v1232 = vadd.f32 0.0, %v1231
          %v1233 = vpop.f32.mrf.mxu0
          %v1234 = vpop.f32.mrf.mxu0
          %v1235 = vpop.f32.mrf.mxu0
          %1236 = vdwg.mxu0
          %v1253 = vunpack.c.l.b16 %v1116
          %v1254 = vunpack.c.l.b16 %v1117
          %v1255 = vunpack.c.l.b16 %v1118
          %v1256 = vunpack.c.l.b16 %v1119
          %v1257 = vunpack.c.l.b16 %v1120
          %v1258 = vunpack.c.l.b16 %v1121
          %v1259 = vunpack.c.l.b16 %v1122
          %v1260 = vunpack.c.l.b16 %v1123
          %v1261 = vunpack.c.l.b16 %v1124
          %v1262 = vunpack.c.l.b16 %v1125
          %v1263 = vunpack.c.l.b16 %v1126
          %v1264 = vunpack.c.l.b16 %v1127
          %v1265 = vunpack.c.l.b16 %v1128
          %v1266 = vunpack.c.l.b16 %v1129
          %v1267 = vunpack.c.l.b16 %v1130
          %v1268 = vunpack.c.l.b16 %v1131
          %v1269 = vpack.c.b16 %v1254, %v1253
          %v1270 = vpack.c.b16 %v1256, %v1255
          %v1271 = vpack.c.b16 %v1258, %v1257
          %v1272 = vpack.c.b16 %v1260, %v1259
          %v1273 = vpack.c.b16 %v1262, %v1261
          %v1274 = vpack.c.b16 %v1264, %v1263
          %v1275 = vpack.c.b16 %v1266, %v1265
          %v1276 = vpack.c.b16 %v1268, %v1267
          %1285 = vmatprep.subr.bf16.mxu0 0
          %1286 = vmatpush1.bf16.msra.mxu0 %v1276
          %1287 = vmatprep.subr.bf16.mxu0 0
          %1288 = vmatpush1.bf16.msra.mxu0 %v1275
          %1289 = vmatprep.subr.bf16.mxu0 0
          %1290 = vmatpush1.bf16.msra.mxu0 %v1274
          %1291 = vmatprep.subr.bf16.mxu0 0
          %1292 = vmatpush1.bf16.msra.mxu0 %v1273
          %1293 = vmatprep.subr.bf16.mxu0 0
          %1294 = vmatpush1.bf16.msra.mxu0 %v1272
          %1295 = vmatprep.subr.bf16.mxu0 0
          %1296 = vmatpush1.bf16.msra.mxu0 %v1271
          %1297 = vmatprep.subr.bf16.mxu0 0
          %1298 = vmatpush1.bf16.msra.mxu0 %v1270
          %1299 = vmatprep.subr.bf16.mxu0 0
          %1300 = vmatpush1.bf16.msra.mxu0 %v1269
          %1301 = vmatprep.subr.bf16.mxu0 0
          %1302 = vmatpush2.bf16.msra.mxu0 0
          %1303 = vmatprep.subr.bf16.mxu0 0
          %1304 = vmatpush2.bf16.msra.mxu0 0
          %1305 = vmatprep.subr.bf16.mxu0 0
          %1306 = vmatpush2.bf16.msra.mxu0 0
          %1307 = vmatprep.subr.bf16.mxu0 0
          %1308 = vmatpush2.bf16.msra.mxu0 0
          %1309 = vmatprep.subr.bf16.mxu0 0
          %1310 = vmatpush2.bf16.msra.mxu0 0
          %1311 = vmatprep.subr.bf16.mxu0 0
          %1312 = vmatpush2.bf16.msra.mxu0 0
          %1313 = vmatprep.subr.bf16.mxu0 0
          %1314 = vmatpush2.bf16.msra.mxu0 0
          %1315 = vmatprep.subr.bf16.mxu0 0
          %1316 = vmatpush2.bf16.msra.mxu0 0
          %1317 = vmatprep.mubr.bf16.mxu0 0
          %1318 = vmatmul.mubr.bf16.gmra.mxu0 %v757
          %v1319 = vpop.f32.mrf.mxu0
          %v1320 = vadd.f32 %v1232, %v1319
          %v1321 = vpop.f32.mrf.mxu0
          %v1322 = vpop.f32.mrf.mxu0
          %v1323 = vpop.f32.mrf.mxu0
          %1324 = vdwg.mxu0
          %s1325 = scalar_lea.vmem [#allocation14], 128
          %v1326 = vld [vmem:[%s1325] sm:$0xf]
          %v1327 = vld [vmem:[%s1325 + $0x4] sm:$0xf]
          %v1328 = vld [vmem:[%s1325 + $0x8] sm:$0xf]
          %v1329 = vld [vmem:[%s1325 + $0xc] sm:$0xf]
          %v1330 = vld [vmem:[%s1325 + $0x10] sm:$0xf]
          %v1331 = vld [vmem:[%s1325 + $0x14] sm:$0xf]
          %v1332 = vld [vmem:[%s1325 + $0x18] sm:$0xf]
          %v1333 = vld [vmem:[%s1325 + $0x1c] sm:$0xf]
          %v1334 = vld [vmem:[%s1325 + $0x20] sm:$0xf]
          %v1335 = vld [vmem:[%s1325 + $0x24] sm:$0xf]
          %v1336 = vld [vmem:[%s1325 + $0x28] sm:$0xf]
          %v1337 = vld [vmem:[%s1325 + $0x2c] sm:$0xf]
          %v1338 = vld [vmem:[%s1325 + $0x30] sm:$0xf]
          %v1339 = vld [vmem:[%s1325 + $0x34] sm:$0xf]
          %v1340 = vld [vmem:[%s1325 + $0x38] sm:$0xf]
          %v1341 = vld [vmem:[%s1325 + $0x3c] sm:$0xf]
          %v1358 = vunpack.c.l.b16 %v1326
          %v1359 = vunpack.c.l.b16 %v1327
          %v1360 = vunpack.c.l.b16 %v1328
          %v1361 = vunpack.c.l.b16 %v1329
          %v1362 = vunpack.c.l.b16 %v1330
          %v1363 = vunpack.c.l.b16 %v1331
          %v1364 = vunpack.c.l.b16 %v1332
          %v1365 = vunpack.c.l.b16 %v1333
          %v1366 = vunpack.c.l.b16 %v1334
          %v1367 = vunpack.c.l.b16 %v1335
          %v1368 = vunpack.c.l.b16 %v1336
          %v1369 = vunpack.c.l.b16 %v1337
          %v1370 = vunpack.c.l.b16 %v1338
          %v1371 = vunpack.c.l.b16 %v1339
          %v1372 = vunpack.c.l.b16 %v1340
          %v1373 = vunpack.c.l.b16 %v1341
          %v1374 = vpack.c.b16 %v1359, %v1358
          %v1375 = vpack.c.b16 %v1361, %v1360
          %v1376 = vpack.c.b16 %v1363, %v1362
          %v1377 = vpack.c.b16 %v1365, %v1364
          %v1378 = vpack.c.b16 %v1367, %v1366
          %v1379 = vpack.c.b16 %v1369, %v1368
          %v1380 = vpack.c.b16 %v1371, %v1370
          %v1381 = vpack.c.b16 %v1373, %v1372
          %1390 = vmatprep.subr.bf16.mxu0 0
          %1391 = vmatpush1.bf16.msra.mxu0 %v1381
          %1392 = vmatprep.subr.bf16.mxu0 0
          %1393 = vmatpush1.bf16.msra.mxu0 %v1380
          %1394 = vmatprep.subr.bf16.mxu0 0
          %1395 = vmatpush1.bf16.msra.mxu0 %v1379
          %1396 = vmatprep.subr.bf16.mxu0 0
          %1397 = vmatpush1.bf16.msra.mxu0 %v1378
          %1398 = vmatprep.subr.bf16.mxu0 0
          %1399 = vmatpush1.bf16.msra.mxu0 %v1377
          %1400 = vmatprep.subr.bf16.mxu0 0
          %1401 = vmatpush1.bf16.msra.mxu0 %v1376
          %1402 = vmatprep.subr.bf16.mxu0 0
          %1403 = vmatpush1.bf16.msra.mxu0 %v1375
          %1404 = vmatprep.subr.bf16.mxu0 0
          %1405 = vmatpush1.bf16.msra.mxu0 %v1374
          %1406 = vmatprep.subr.bf16.mxu0 0
          %1407 = vmatpush2.bf16.msra.mxu0 0
          %1408 = vmatprep.subr.bf16.mxu0 0
          %1409 = vmatpush2.bf16.msra.mxu0 0
          %1410 = vmatprep.subr.bf16.mxu0 0
          %1411 = vmatpush2.bf16.msra.mxu0 0
          %1412 = vmatprep.subr.bf16.mxu0 0
          %1413 = vmatpush2.bf16.msra.mxu0 0
          %1414 = vmatprep.subr.bf16.mxu0 0
          %1415 = vmatpush2.bf16.msra.mxu0 0
          %1416 = vmatprep.subr.bf16.mxu0 0
          %1417 = vmatpush2.bf16.msra.mxu0 0
          %1418 = vmatprep.subr.bf16.mxu0 0
          %1419 = vmatpush2.bf16.msra.mxu0 0
          %1420 = vmatprep.subr.bf16.mxu0 0
          %1421 = vmatpush2.bf16.msra.mxu0 0
          %1422 = vmatprep.mubr.bf16.mxu0 0
          %1423 = vmatmul.mubr.bf16.gmra.mxu0 %v1115
          %v1424 = vpop.f32.mrf.mxu0
          %v1425 = vadd.f32 0.0, %v1424
          %v1426 = vpop.f32.mrf.mxu0
          %v1427 = vpop.f32.mrf.mxu0
          %v1428 = vpop.f32.mrf.mxu0
          %1429 = vdwg.mxu0
          %v1430 = vadd.f32 %v1320, %v1425
          %v1431 = vld [vmem:[%s8 + $0x3] sm:$0x1]
          %v1432 = vlaneseq
          %v1433 = vshrl.u32 %v1432, 7
          %v1434 = vsub.s32 0, %v1433
          %v1435 = vrot.slane %v1431, %v1434
          %v1436 = vadd.f32 %v1430, %v1435
          %1437 = vst [vmem:[#allocation2] sm:$0xff] %v1436
        $region96: #{tpu_custom_call.1} parent=59 // pred_fallthru
          _
        %v1438 = vld [vmem:[#allocation2] sm:$0xff]
        %v1439 = vpack.c.bf16 %v1438, %v1438
        %v1440 = vld [vmem:[%s516] sm:$0xf]
        %v1441 = vld [vmem:[%s516 + $0x4] sm:$0xf]
        %v1442 = vld [vmem:[%s516 + $0x8] sm:$0xf]
        %v1443 = vld [vmem:[%s516 + $0xc] sm:$0xf]
        %v1444 = vld [vmem:[%s516 + $0x10] sm:$0xf]
        %v1445 = vld [vmem:[%s516 + $0x14] sm:$0xf]
        %v1446 = vld [vmem:[%s516 + $0x18] sm:$0xf]
        %v1447 = vld [vmem:[%s516 + $0x1c] sm:$0xf]
        %v1448 = vld [vmem:[%s516 + $0x20] sm:$0xf]
        %v1449 = vld [vmem:[%s516 + $0x24] sm:$0xf]
        %v1450 = vld [vmem:[%s516 + $0x28] sm:$0xf]
        %v1451 = vld [vmem:[%s516 + $0x2c] sm:$0xf]
        %v1452 = vld [vmem:[%s516 + $0x30] sm:$0xf]
        %v1453 = vld [vmem:[%s516 + $0x34] sm:$0xf]
        %v1454 = vld [vmem:[%s516 + $0x38] sm:$0xf]
        %v1455 = vld [vmem:[%s516 + $0x3c] sm:$0xf]
        %v1456 = vld [vmem:[%s573] sm:$0x1]
        %v1458 = vlaneseq
        %v1459 = vshrl.u32 %v1458, 7
        %v1460 = vsub.s32 0, %v1459
        %v1461 = vrot.slane %v1456, %v1460
        %v1479 = vunpack.c.l.b16 %v1440
        %v1480 = vunpack.c.l.b16 %v1441
        %v1481 = vunpack.c.l.b16 %v1442
        %v1482 = vunpack.c.l.b16 %v1443
        %v1483 = vunpack.c.l.b16 %v1444
        %v1484 = vunpack.c.l.b16 %v1445
        %v1485 = vunpack.c.l.b16 %v1446
        %v1486 = vunpack.c.l.b16 %v1447
        %v1487 = vunpack.c.l.b16 %v1448
        %v1488 = vunpack.c.l.b16 %v1449
        %v1489 = vunpack.c.l.b16 %v1450
        %v1490 = vunpack.c.l.b16 %v1451
        %v1491 = vunpack.c.l.b16 %v1452
        %v1492 = vunpack.c.l.b16 %v1453
        %v1493 = vunpack.c.l.b16 %v1454
        %v1494 = vunpack.c.l.b16 %v1455
        %v1495 = vpack.c.b16 %v1480, %v1479
        %v1496 = vpack.c.b16 %v1482, %v1481
        %v1497 = vpack.c.b16 %v1484, %v1483
        %v1498 = vpack.c.b16 %v1486, %v1485
        %v1499 = vpack.c.b16 %v1488, %v1487
        %v1500 = vpack.c.b16 %v1490, %v1489
        %v1501 = vpack.c.b16 %v1492, %v1491
        %v1502 = vpack.c.b16 %v1494, %v1493
        %1511 = vmatprep.subr.bf16.mxu0 0
        %1512 = vmatpush1.bf16.msra.mxu0 %v1502
        %1513 = vmatprep.subr.bf16.mxu0 0
        %1514 = vmatpush1.bf16.msra.mxu0 %v1501
        %1515 = vmatprep.subr.bf16.mxu0 0
        %1516 = vmatpush1.bf16.msra.mxu0 %v1500
        %1517 = vmatprep.subr.bf16.mxu0 0
        %1518 = vmatpush1.bf16.msra.mxu0 %v1499
        %1519 = vmatprep.subr.bf16.mxu0 0
        %1520 = vmatpush1.bf16.msra.mxu0 %v1498
        %1521 = vmatprep.subr.bf16.mxu0 0
        %1522 = vmatpush1.bf16.msra.mxu0 %v1497
        %1523 = vmatprep.subr.bf16.mxu0 0
        %1524 = vmatpush1.bf16.msra.mxu0 %v1496
        %1525 = vmatprep.subr.bf16.mxu0 0
        %1526 = vmatpush1.bf16.msra.mxu0 %v1495
        %1527 = vmatprep.subr.bf16.mxu0 0
        %1528 = vmatpush2.bf16.msra.mxu0 0
        %1529 = vmatprep.subr.bf16.mxu0 0
        %1530 = vmatpush2.bf16.msra.mxu0 0
        %1531 = vmatprep.subr.bf16.mxu0 0
        %1532 = vmatpush2.bf16.msra.mxu0 0
        %1533 = vmatprep.subr.bf16.mxu0 0
        %1534 = vmatpush2.bf16.msra.mxu0 0
        %1535 = vmatprep.subr.bf16.mxu0 0
        %1536 = vmatpush2.bf16.msra.mxu0 0
        %1537 = vmatprep.subr.bf16.mxu0 0
        %1538 = vmatpush2.bf16.msra.mxu0 0
        %1539 = vmatprep.subr.bf16.mxu0 0
        %1540 = vmatpush2.bf16.msra.mxu0 0
        %1541 = vmatprep.subr.bf16.mxu0 0
        %1542 = vmatpush2.bf16.msra.mxu0 0
        %1543 = vmatprep.mubr.bf16.mxu0 0
        %1544 = vmatmul.mubr.bf16.gmra.mxu0 %v1439
        %v1545 = vpop.f32.mrf.mxu0
        %v1546 = vadd.f32 %v1461, %v1545
        %v1547 = vpop.f32.mrf.mxu0
        %v1548 = vpop.f32.mrf.mxu0
        %v1549 = vpop.f32.mrf.mxu0
        %1550 = vdwg.mxu0
        %v1551 = vxor.u32 %v1546, 2147483648
        %v1552 = vmul.f32 %v1551, 1.442695
        %v1553 = vpow.pop %v1552
        %v1554 = vadd.f32 %v1553, 1.0
        %v1555 = vrcp.pop %v1554
        %v1556 = vmul.f32 1.0, %v1555
        %1557 = vst [vmem:[%s570] sm:$0xff] %v1556
        %s1558 = sand.u32 %s292, 1
        %s1559 = scalar_lea.sflag [#allocation5], %s1558
        %s1560 = sand.u32 %s292, 1
        %s1561 = smul.addr %s1560, 8
        %s1562 = scalar_lea.vmem [#allocation17], %s1561
        // Predicated region
        $region97: #{tpu_custom_call.1} parent=59 // pred_check
          %p1563 = pneg %p302
        $region98: #{tpu_custom_call.1} parent=59 // pred_check_branch
          %1565 = sbr.rel (%p1563) target = $region100
        $region99: #{tpu_custom_call.1} parent=59 // pred_region
          %s1567 = ssub.s32 128, 128
          %1568 = vsyncadd %s1559, %s1567
          %s1569 = smul.addr %s39, 5
          %s1570 = sadd.s32 %s40, %s1569
          %s1571 = smul.addr %s1570, 128
          %s1572 = scalar_lea.hbm %s10, %s1571
          %s1574 = sshll.u32 %s1562, 4
          %s1575 = int_to_ptr.vmem [resolvable:$true] %s1574
          %1577 = dma.vmem_to_hbm [thread:$0]  %s1575, 128, %s1572, %s1559
        $region100: #{tpu_custom_call.1} parent=59 // pred_fallthru
          _
      $region60: #{tpu_custom_call.1} parent=5 // pred_fallthru
        _
      %p1578 = scmp.le.s32.totalorder 2, %s30
      // Predicated region
      $region101: #{tpu_custom_call.1} parent=5 // pred_check
        %p1579 = pneg %p1578
      $region102: #{tpu_custom_call.1} parent=5 // pred_check_branch
        %1581 = sbr.rel (%p1579) target = $region104
      $region103: #{tpu_custom_call.1} parent=5 // pred_region
        %s1582 = ssub.s32 %s30, 2
        // Predicated region
        $region105: #{tpu_custom_call.1} parent=103 // pred_check
          %p1583 = pneg %p308
        $region106: #{tpu_custom_call.1} parent=103 // pred_check_branch
          %1585 = sbr.rel (%p1583) target = $region108
        $region107: #{tpu_custom_call.1} parent=103 // pred_region
          %s1586 = sand.u32 %s293, 1
          %s1587 = scalar_lea.sflag [#allocation5], %s1586
          %s1588 = sand.u32 %s293, 1
          %s1589 = smul.addr %s1588, 8
          %s1590 = scalar_lea.vmem [#allocation17], %s1589
          %1591 = dma.done %s1587, 128
        $region108: #{tpu_custom_call.1} parent=103 // pred_fallthru
          _
      $region104: #{tpu_custom_call.1} parent=5 // pred_fallthru
        _
    $region6: #{tpu_custom_call.1} parent=1 // loop_footer
      %s34 = sadd.s32 1, %s30
    $region7: #{tpu_custom_call.1} parent=1 // loop_footer_branch
      %29 = sbr.rel target = $region3
    $region8: #{tpu_custom_call.1} parent=1 // loop_exit
      _
    %1592 = vsyncpa [#allocation4], 1
    %s1593 = scalar_lea.sflag [#allocation4], 1
    %1594 = vsyncpa %s1593, 1
    %1595 = vsyncpa [#allocation7], 1
    %s1596 = scalar_lea.sflag [#allocation7], 1
    %1597 = vsyncpa %s1596, 1
    %1598 = vsyncpa [#allocation10], 1
    %1599 = vsyncpa [#allocation13], 1
    %1600 = vsyncpa [#allocation16], 1
    %s1601 = scalar_lea.sflag [#allocation16], 1
    %1602 = vsyncpa %s1601, 1
    %1603 = vsyncpa [#allocation5], 1
    %s1604 = scalar_lea.sflag [#allocation5], 1
    %1605 = vsyncpa %s1604, 1

</llo_original>
